<compile_context>
chip_gen: v5e
topology: v5e:2x2
jax: 0.10.0
libtpu: 0.0.40
codegen_flags: <defaults>
</compile_context>

<pallas_src>
import math
import functools

import jax
import jax.numpy as jnp
from jax.experimental import pallas as pl
from jax.experimental.pallas import tpu as pltpu


# ----------------------------- tiling helpers ------------------------------

_LANE_TILES = (512, 256, 128)            # last-dim (lane) tile candidates
_ROW_TILES = (256, 128, 64, 32, 16, 8)   # second-to-last (sublane) tile candidates


def _pick(dim, candidates):
    """Largest candidate that divides `dim`; fall back to the full dim."""
    for c in candidates:
        if c <= dim and dim % c == 0:
            return c
    return dim


def _cparams(*semantics):
    # 48 MiB scoped VMEM: above the 32 MiB default, safely under v7x's 64 MiB.
    return pltpu.CompilerParams(
        dimension_semantics=tuple(semantics),
        vmem_limit_bytes=48 * 1024 * 1024,
    )


# --------------------- fused LayerNorm -> matmul (QKV) ----------------------

def _ln_matmul_kernel(x_ref, g_ref, b_ref, w_ref, o_ref):
    x = x_ref[...].astype(jnp.float32)
    mu = jnp.mean(x, axis=-1, keepdims=True)
    var = jnp.mean((x - mu) ** 2, axis=-1, keepdims=True)      # biased, as torch
    xn = (x - mu) * jax.lax.rsqrt(var + 1e-5)
    xn = xn * g_ref[...].astype(jnp.float32) + b_ref[...].astype(jnp.float32)
    o_ref[...] = jnp.dot(xn.astype(w_ref.dtype), w_ref[...],
                         preferred_element_type=jnp.float32).astype(o_ref.dtype)


def pallas_ln_matmul(x, gamma, beta, w):
    """out = LayerNorm(x) @ w, LN fused into the matmul prologue."""
    M, K = x.shape
    K2, N = w.shape
    assert K == K2
    tm = _pick(M, _ROW_TILES)
    tn = _pick(N, _LANE_TILES)
    return pl.pallas_call(
        _ln_matmul_kernel,
        out_shape=jax.ShapeDtypeStruct((M, N), w.dtype),
        grid=(M // tm, N // tn),
        in_specs=[pl.BlockSpec((tm, K), lambda i, j: (i, 0)),
                  pl.BlockSpec((1, K), lambda i, j: (0, 0)),
                  pl.BlockSpec((1, K), lambda i, j: (0, 0)),
                  pl.BlockSpec((K, tn), lambda i, j: (0, j))],
        out_specs=pl.BlockSpec((tm, tn), lambda i, j: (i, j)),
        compiler_params=_cparams("parallel", "parallel"),
    )(x, gamma.reshape(1, K), beta.reshape(1, K), w)


# ------------- K-tiled matmul with fused residual add (projection) ----------

def _matmul_res_kernel(a_ref, b_ref, r_ref, o_ref, acc_ref):
    k = pl.program_id(2)

    @pl.when(k == 0)
    def _():
        acc_ref[...] = jnp.zeros_like(acc_ref)

    acc_ref[...] += jnp.dot(a_ref[...], b_ref[...],
                            preferred_element_type=jnp.float32)

    @pl.when(k == pl.num_programs(2) - 1)
    def _():
        o_ref[...] = (acc_ref[...] + r_ref[...].astype(jnp.float32)
                      ).astype(o_ref.dtype)


def pallas_matmul_res(a, b, res):
    """out = a @ b + res   (residual add fused into the matmul epilogue)."""
    M, K = a.shape
    K2, N = b.shape
    assert K == K2 and res.shape == (M, N)
    tm = _pick(M, _ROW_TILES)
    tn = _pick(N, _LANE_TILES)
    tk = _pick(K, _LANE_TILES)
    return pl.pallas_call(
        _matmul_res_kernel,
        out_shape=jax.ShapeDtypeStruct((M, N), a.dtype),
        grid=(M // tm, N // tn, K // tk),
        in_specs=[pl.BlockSpec((tm, tk), lambda i, j, k: (i, k)),
                  pl.BlockSpec((tk, tn), lambda i, j, k: (k, j)),
                  pl.BlockSpec((tm, tn), lambda i, j, k: (i, j))],
        out_specs=pl.BlockSpec((tm, tn), lambda i, j, k: (i, j)),
        scratch_shapes=[pltpu.VMEM((tm, tn), jnp.float32)],
        compiler_params=_cparams("parallel", "parallel", "arbitrary"),
    )(a, b, res)


# -------------------------- flash-style attention ---------------------------

def _flash_attn_kernel(q_ref, k_ref, v_ref, o_ref, m_sc, l_sc, acc_sc,
                       *, scale, tq, tkv):
    kv = pl.program_id(2)

    @pl.when(kv == 0)
    def _():
        m_sc[...] = jnp.full_like(m_sc, -1e30)
        l_sc[...] = jnp.zeros_like(l_sc)
        acc_sc[...] = jnp.zeros_like(acc_sc)

    # scores for a block of heads at once: (hb, tq, tkv), f32 accumulation
    s = jnp.einsum("hqd,hkd->hqk", q_ref[...], k_ref[...],
                   preferred_element_type=jnp.float32) * scale

    # causal mask generated in-kernel (additive; no (S,S) mask DMA per head)
    q_pos = pl.program_id(1) * tq + jax.lax.broadcasted_iota(jnp.int32, s.shape, 1)
    k_pos = kv * tkv + jax.lax.broadcasted_iota(jnp.int32, s.shape, 2)
    s = s + jnp.where(q_pos >= k_pos, jnp.float32(0.0), jnp.float32(-1e30))

    # online softmax
    m_new = jnp.maximum(m_sc[...], jnp.max(s, axis=-1, keepdims=True))
    alpha = jnp.exp(m_sc[...] - m_new)
    p = jnp.exp(s - m_new)
    l_sc[...] = alpha * l_sc[...] + jnp.sum(p, axis=-1, keepdims=True)
    acc_sc[...] = alpha * acc_sc[...] + jnp.einsum(
        "hqk,hkd->hqd", p.astype(v_ref.dtype), v_ref[...],
        preferred_element_type=jnp.float32)
    m_sc[...] = m_new

    @pl.when(kv == pl.num_programs(2) - 1)
    def _():
        o_ref[...] = (acc_sc[...] * pl.reciprocal(l_sc[...], approx=True)
                      ).astype(o_ref.dtype)


def pallas_flash_attention(q, k, v, scale):
    BN, S, Hd = q.shape                    # BN = batch * nheads
    hb = _pick(BN, (8, 4, 2, 1))           # heads batched per grid step
    tq = _pick(S, (256, 128))
    tkv = _pick(S, (512, 256, 128))
    kern = functools.partial(_flash_attn_kernel, scale=scale, tq=tq, tkv=tkv)
    return pl.pallas_call(
        kern,
        out_shape=jax.ShapeDtypeStruct((BN, S, Hd), q.dtype),
        grid=(BN // hb, S // tq, S // tkv),
        in_specs=[pl.BlockSpec((hb, tq, Hd), lambda h, qi, ki: (h, qi, 0)),
                  pl.BlockSpec((hb, tkv, Hd), lambda h, qi, ki: (h, ki, 0)),
                  pl.BlockSpec((hb, tkv, Hd), lambda h, qi, ki: (h, ki, 0))],
        out_specs=pl.BlockSpec((hb, tq, Hd), lambda h, qi, ki: (h, qi, 0)),
        scratch_shapes=[pltpu.VMEM((hb, tq, 1), jnp.float32),
                        pltpu.VMEM((hb, tq, 1), jnp.float32),
                        pltpu.VMEM((hb, tq, Hd), jnp.float32)],
        compiler_params=_cparams("parallel", "parallel", "arbitrary"),
    )(q, k, v)


# ----------------- fused LayerNorm2 -> FFN (w1, NewGELU, w2) -----------------

def _ln_ffn_kernel(x_ref, g_ref, b_ref, w1_ref, w2_ref, o_ref, xln_sc, acc_sc):
    f = pl.program_id(1)

    @pl.when(f == 0)
    def _():
        x = x_ref[...].astype(jnp.float32)
        mu = jnp.mean(x, axis=-1, keepdims=True)
        var = jnp.mean((x - mu) ** 2, axis=-1, keepdims=True)
        xn = (x - mu) * jax.lax.rsqrt(var + 1e-5)
        xn = xn * g_ref[...].astype(jnp.float32) + b_ref[...].astype(jnp.float32)
        xln_sc[...] = xn.astype(xln_sc.dtype)
        acc_sc[...] = jnp.zeros_like(acc_sc)

    h = jnp.dot(xln_sc[...], w1_ref[...], preferred_element_type=jnp.float32)
    # NewGELU (GPT-2 tanh approximation), evaluated in f32 on the accumulator;
    # only the MXU input of the down-projection is recast to bf16.
    c = math.sqrt(2.0 / math.pi)
    h = 0.5 * h * (1.0 + jnp.tanh(c * (h + 0.044715 * h * h * h)))
    acc_sc[...] += jnp.dot(h.astype(w2_ref.dtype), w2_ref[...],
                           preferred_element_type=jnp.float32)

    @pl.when(f == pl.num_programs(1) - 1)
    def _():
        o_ref[...] = acc_sc[...].astype(o_ref.dtype)


def pallas_ln_ffn(x, gamma, beta, w1, w2):
    M, H = x.shape
    H2, F = w1.shape
    F2, H3 = w2.shape
    assert H == H2 and F == F2 and H == H3
    tm = _pick(M, _ROW_TILES)
    tf = _pick(F, _LANE_TILES)
    return pl.pallas_call(
        _ln_ffn_kernel,
        out_shape=jax.ShapeDtypeStruct((M, H), x.dtype),
        grid=(M // tm, F // tf),
        in_specs=[pl.BlockSpec((tm, H), lambda i, f: (i, 0)),
                  pl.BlockSpec((1, H), lambda i, f: (0, 0)),
                  pl.BlockSpec((1, H), lambda i, f: (0, 0)),
                  pl.BlockSpec((H, tf), lambda i, f: (0, f)),
                  pl.BlockSpec((tf, H), lambda i, f: (f, 0))],
        out_specs=pl.BlockSpec((tm, H), lambda i, f: (i, 0)),
        scratch_shapes=[pltpu.VMEM((tm, H), x.dtype),
                        pltpu.VMEM((tm, H), jnp.float32)],
        compiler_params=_cparams("parallel", "arbitrary"),
    )(x, gamma.reshape(1, H), beta.reshape(1, H), w1, w2)


# --------- fused final LN + lm_head matmul + cross-entropy + argmax ----------

def _ln_head_ce_kernel(x_ref, g_ref, b_ref, w_ref, t_ref,
                       loss_ref, pred_ref,
                       xln_sc, m_sc, l_sc, tl_sc, bv_sc, bi_sc, *, tv):
    v = pl.program_id(1)

    @pl.when(v == 0)
    def _():
        x = x_ref[...].astype(jnp.float32)
        mu = jnp.mean(x, axis=-1, keepdims=True)
        var = jnp.mean((x - mu) ** 2, axis=-1, keepdims=True)
        xn = (x - mu) * jax.lax.rsqrt(var + 1e-5)
        xn = xn * g_ref[...].astype(jnp.float32) + b_ref[...].astype(jnp.float32)
        xln_sc[...] = xn.astype(xln_sc.dtype)
        m_sc[...] = jnp.full_like(m_sc, -1e30)
        l_sc[...] = jnp.zeros_like(l_sc)
        tl_sc[...] = jnp.zeros_like(tl_sc)
        bv_sc[...] = jnp.full_like(bv_sc, -1e30)
        bi_sc[...] = jnp.zeros_like(bi_sc)

    logits = jnp.dot(xln_sc[...], w_ref[...],
                     preferred_element_type=jnp.float32)            # (tm, tv)
    col = v * tv + jax.lax.broadcasted_iota(jnp.int32, logits.shape, 1)

    # online logsumexp over vocab tiles
    m_new = jnp.maximum(m_sc[...], jnp.max(logits, axis=-1, keepdims=True))
    l_sc[...] = (l_sc[...] * jnp.exp(m_sc[...] - m_new)
                 + jnp.sum(jnp.exp(logits - m_new), axis=-1, keepdims=True))
    m_sc[...] = m_new

    # target logit (exactly one vocab tile matches each row's target id)
    tl_sc[...] += jnp.sum(jnp.where(col == t_ref[...], logits, 0.0),
                          axis=-1, keepdims=True)

    # running argmax (first-index tie-break, like torch.argmax)
    tile_max = jnp.max(logits, axis=-1, keepdims=True)
    tile_arg = jnp.min(jnp.where(logits == tile_max, col, jnp.int32(2 ** 30)),
                       axis=-1, keepdims=True)
    better = tile_max > bv_sc[...]
    bv_sc[...] = jnp.where(better, tile_max, bv_sc[...])
    bi_sc[...] = jnp.where(better, tile_arg, bi_sc[...])

    @pl.when(v == pl.num_programs(1) - 1)
    def _():
        loss_ref[...] = m_sc[...] + jnp.log(l_sc[...]) - tl_sc[...]   # per-row NLL
        pred_ref[...] = bi_sc[...]


def pallas_ln_head_ce(x, gamma, beta, w, targets):
    """Per-row NLL and argmax of LayerNorm(x) @ w; logits never hit HBM."""
    M, H = x.shape
    H2, V = w.shape
    assert H == H2 and targets.shape == (M,)
    tm = _pick(M, _ROW_TILES)
    tv = _pick(V, _LANE_TILES)
    kern = functools.partial(_ln_head_ce_kernel, tv=tv)
    loss, preds = pl.pallas_call(
        kern,
        out_shape=(jax.ShapeDtypeStruct((M, 1), jnp.float32),
                   jax.ShapeDtypeStruct((M, 1), jnp.int32)),
        grid=(M // tm, V // tv),
        in_specs=[pl.BlockSpec((tm, H), lambda i, v: (i, 0)),
                  pl.BlockSpec((1, H), lambda i, v: (0, 0)),
                  pl.BlockSpec((1, H), lambda i, v: (0, 0)),
                  pl.BlockSpec((H, tv), lambda i, v: (0, v)),
                  pl.BlockSpec((tm, 1), lambda i, v: (i, 0))],
        out_specs=[pl.BlockSpec((tm, 1), lambda i, v: (i, 0)),
                   pl.BlockSpec((tm, 1), lambda i, v: (i, 0))],
        scratch_shapes=[pltpu.VMEM((tm, H), x.dtype),
                        pltpu.VMEM((tm, 1), jnp.float32),
                        pltpu.VMEM((tm, 1), jnp.float32),
                        pltpu.VMEM((tm, 1), jnp.float32),
                        pltpu.VMEM((tm, 1), jnp.float32),
                        pltpu.VMEM((tm, 1), jnp.int32)],
        compiler_params=_cparams("parallel", "arbitrary"),
    )(x, gamma.reshape(1, H), beta.reshape(1, H), w,
      targets.reshape(M, 1).astype(jnp.int32))
    return loss, preds


# ------------------------------ Model (glue) -------------------------------

def att_block(x, p, cfg):
    B, S, H = x.shape
    nh, hd = cfg["nheads"], cfg["hdim"]
    M = B * S
    x2 = x.reshape(M, H)

    # LayerNorm1 fused into the QKV projection.
    qkv = pallas_ln_matmul(x2, p["ln1_g"], p["ln1_b"], p["qkv"])     # (M, 3*nh*H)
    qkv = qkv.reshape(B, S, 3 * nh * hd)
    Q = qkv[..., 0 * nh * hd:1 * nh * hd]
    K = qkv[..., 1 * nh * hd:2 * nh * hd]
    V = qkv[..., 2 * nh * hd:3 * nh * hd]
    # PyTorch: (B, S, nh*H).view(B, nh, S, H)  ==  row-major reinterpretation.
    q = Q.reshape(B * nh, S, hd)
    k = K.reshape(B * nh, S, hd)
    v = V.reshape(B * nh, S, hd)

    att = pallas_flash_attention(q, k, v, 1.0 / math.sqrt(hd))       # (B*nh, S, hd)
    # PyTorch: (B, nh, S, H).view(B, S, nh*H)  ==  row-major reinterpretation.
    att2 = att.reshape(M, nh * hd)

    # Output projection with the residual add fused into the epilogue.
    y = pallas_matmul_res(att2, p["proj"], x2)                       # x + att_out

    # NB: reference block returns mlp(ln2(x + att)) with NO second residual.
    out = pallas_ln_ffn(y, p["ln2_g"], p["ln2_b"], p["w1"], p["w2"])
    return out.reshape(B, S, H)


def my_model_forward(tokens, params, cfg):
    B, Tp1 = tokens.shape
    T = Tp1 - 1
    inp = tokens[:, :-1]
    tgt = tokens[:, 1:]
    # TODO(synk): Dropout layers (emb/att/res) are identity (eval mode).
    outs = jnp.take(params["emb"], inp, axis=0)            # (B, T, H) gather (XLA)
    for lp in params["blocks"]:
        outs = att_block(outs, lp, cfg)
    x2 = outs.reshape(B * T, cfg["hdim"])
    # Final LN + lm_head + cross-entropy + argmax fused; logits never hit HBM.
    nll, preds = pallas_ln_head_ce(x2, params["lnf_g"], params["lnf_b"],
                                   params["llm_head"], tgt.reshape(-1))
    loss = jnp.mean(nll)
    return loss, preds.reshape(B, T)


# ------------------------------ Parameters ---------------------------------

def init_params(key, cfg):
    H, nh, V, F = cfg["hdim"], cfg["nheads"], cfg["vocab"], 4 * cfg["hdim"]
    keys = iter(jax.random.split(key, 4 + 6 * cfg["layers"]))

    def unif(k, shape, scale, shift=0.0):
        w = jax.random.uniform(k, shape, dtype=jnp.float32) * scale - shift
        return w.astype(jnp.bfloat16)                      # bf16 MXU inputs

    params = {
        "emb": jax.random.normal(next(keys), (V, H), jnp.float32).astype(jnp.bfloat16),
        "lnf_g": jnp.ones((H,), jnp.float32),
        "lnf_b": jnp.zeros((H,), jnp.float32),
        "llm_head": unif(next(keys), (H, V), 1.0 / math.sqrt(V)),
        "blocks": [],
    }
    for _ in range(cfg["layers"]):
        params["blocks"].append({
            "ln1_g": jnp.ones((H,), jnp.float32),
            "ln1_b": jnp.zeros((H,), jnp.float32),
            "ln2_g": jnp.ones((H,), jnp.float32),
            "ln2_b": jnp.zeros((H,), jnp.float32),
            "qkv": unif(next(keys), (H, 3 * nh * H), 1.0 / math.sqrt(H)),
            "proj": unif(next(keys), (nh * H, H), 1.0 / math.sqrt(H)),
            # nn.Linear(H,4H,bias=False)/(4H,H,bias=False), pre-transposed for x @ W.
            "w1": unif(next(keys), (H, F), 1.0 / math.sqrt(H), 0.5 / math.sqrt(H)),
            "w2": unif(next(keys), (F, H), 1.0 / math.sqrt(F), 0.5 / math.sqrt(F)),
        })
    return params


# --------------------------------- Main -------------------------------------

if __name__ == "__main__":
    cfg = dict(vocab=64, hdim=32, nheads=4, seq_len=8, layers=3)
    key = jax.random.PRNGKey(0)
    kp, kx = jax.random.split(key)
    params = init_params(kp, cfg)

    # tokens: (B, seq_len + 1); model consumes x[:, :-1] and predicts x[:, 1:]
    tokens = jax.random.randint(kx, (2, cfg["seq_len"] + 1), 0, cfg["vocab"],
                                dtype=jnp.int32)

    fwd = jax.jit(functools.partial(my_model_forward, cfg=cfg))
    loss, preds = fwd(tokens, params)
    jax.block_until_ready((loss, preds))
    assert preds.shape == (2, cfg["seq_len"])
    assert bool(jnp.isfinite(loss))
    print("KERNEL_OK")
</pallas_src>

<mosaic_0001>
module attributes {stable_mosaic.version = 11 : i64} {
  func.func @_matmul_res_kernel(%arg0: i32, %arg1: i32, %arg2: i32, %arg3: memref<16x128xbf16, #tpu.memory_space<vmem>>, %arg4: memref<128x32xbf16, #tpu.memory_space<vmem>>, %arg5: memref<16x32xbf16, #tpu.memory_space<vmem>>, %arg6: memref<16x32xbf16, #tpu.memory_space<vmem>>, %arg7: memref<16x32xf32, #tpu.memory_space<vmem>>) attributes {dimension_semantics = [#tpu.dimension_semantics<parallel>, #tpu.dimension_semantics<parallel>, #tpu.dimension_semantics<arbitrary>], iteration_bounds = array<i64: 1, 1, 1>, scalar_prefetch = 0 : i64, scratch_operands = 1 : i64, tpu.core_type = #tpu.core_type<tc>, window_params = [{transform_indices = @transform_0, window_bounds = array<i64: 16, 128>}, {transform_indices = @transform_1, window_bounds = array<i64: 128, 32>}, {transform_indices = @transform_2, window_bounds = array<i64: 16, 32>}, {transform_indices = @transform_3, window_bounds = array<i64: 16, 32>}]} {
    %c0_i32 = arith.constant 0 : i32
    %0 = arith.cmpi eq, %arg2, %c0_i32 : i32
    %1 = arith.extui %0 : i1 to i32
    %c0_i32_0 = arith.constant 0 : i32
    %2 = arith.cmpi ne, %1, %c0_i32_0 : i32
    scf.if %2 {
      %cst_10 = arith.constant 0.000000e+00 : f32
      %12 = vector.broadcast %cst_10 : f32 to vector<16x32xf32>
      %c0_11 = arith.constant 0 : index
      %c0_12 = arith.constant 0 : index
      %13 = vector.load %arg7[%c0_11, %c0_12] : memref<16x32xf32, #tpu.memory_space<vmem>>, vector<16x32xf32>
      tpu.vector_store %arg7[%c0_11, %c0_12], %12 {strides = array<i32>} : memref<16x32xf32, #tpu.memory_space<vmem>>, vector<16x32xf32>,
    } else {
    }
    %c0 = arith.constant 0 : index
    %c0_1 = arith.constant 0 : index
    %3 = vector.load %arg7[%c0, %c0_1] : memref<16x32xf32, #tpu.memory_space<vmem>>, vector<16x32xf32>
    %c0_2 = arith.constant 0 : index
    %c0_3 = arith.constant 0 : index
    %4 = vector.load %arg3[%c0_2, %c0_3] : memref<16x128xbf16, #tpu.memory_space<vmem>>, vector<16x128xbf16>
    %c0_4 = arith.constant 0 : index
    %c0_5 = arith.constant 0 : index
    %5 = vector.load %arg4[%c0_4, %c0_5] : memref<128x32xbf16, #tpu.memory_space<vmem>>, vector<128x32xbf16>
    %cst = arith.constant dense<0.000000e+00> : vector<16x32xf32>
    %6 = tpu.matmul %4, %5, %cst {dimension_numbers = #tpu.dot_dimension_numbers<[1], [0], [0], [1], [0, 0, 1, 1], [], []>} : vector<16x128xbf16>, vector<128x32xbf16>, vector<16x32xf32> -> vector<16x32xf32>
    %7 = arith.addf %3, %6 : vector<16x32xf32>
    %c0_6 = arith.constant 0 : index
    %c0_7 = arith.constant 0 : index
    %8 = vector.load %arg7[%c0_6, %c0_7] : memref<16x32xf32, #tpu.memory_space<vmem>>, vector<16x32xf32>
    tpu.vector_store %arg7[%c0_6, %c0_7], %7 {strides = array<i32>} : memref<16x32xf32, #tpu.memory_space<vmem>>, vector<16x32xf32>,
    %c0_i32_8 = arith.constant 0 : i32
    %9 = arith.cmpi eq, %arg2, %c0_i32_8 : i32
    %10 = arith.extui %9 : i1 to i32
    %c0_i32_9 = arith.constant 0 : i32
    %11 = arith.cmpi ne, %10, %c0_i32_9 : i32
    scf.if %11 {
      %c0_10 = arith.constant 0 : index
      %c0_11 = arith.constant 0 : index
      %12 = vector.load %arg7[%c0_10, %c0_11] : memref<16x32xf32, #tpu.memory_space<vmem>>, vector<16x32xf32>
      %c0_12 = arith.constant 0 : index
      %c0_13 = arith.constant 0 : index
      %13 = vector.load %arg5[%c0_12, %c0_13] : memref<16x32xbf16, #tpu.memory_space<vmem>>, vector<16x32xbf16>
      %14 = arith.extf %13 : vector<16x32xbf16> to vector<16x32xf32>
      %15 = arith.addf %12, %14 : vector<16x32xf32>
      %16 = arith.truncf %15 : vector<16x32xf32> to vector<16x32xbf16>
      %c0_14 = arith.constant 0 : index
      %c0_15 = arith.constant 0 : index
      %17 = vector.load %arg6[%c0_14, %c0_15] : memref<16x32xbf16, #tpu.memory_space<vmem>>, vector<16x32xbf16>
      tpu.vector_store %arg6[%c0_14, %c0_15], %16 {strides = array<i32>} : memref<16x32xbf16, #tpu.memory_space<vmem>>, vector<16x32xbf16>,
    } else {
    }
    return
  }
  func.func @transform_0(%arg0: i32, %arg1: i32, %arg2: i32) -> (i32, i32) {
    %c0_i32 = arith.constant 0 : i32
    return %arg0, %arg2 : i32, i32
  }
  func.func @transform_1(%arg0: i32, %arg1: i32, %arg2: i32) -> (i32, i32) {
    %c0_i32 = arith.constant 0 : i32
    return %arg2, %arg1 : i32, i32
  }
  func.func @transform_2(%arg0: i32, %arg1: i32, %arg2: i32) -> (i32, i32) {
    %c0_i32 = arith.constant 0 : i32
    return %arg0, %arg1 : i32, i32
  }
  func.func @transform_3(%arg0: i32, %arg1: i32, %arg2: i32) -> (i32, i32) {
    %c0_i32 = arith.constant 0 : i32
    return %arg0, %arg1 : i32, i32
  }
}

module attributes {stable_mosaic.version = 11 : i64} {
  func.func @_ln_matmul_kernel(%arg0: i32, %arg1: i32, %arg2: memref<16x32xbf16, #tpu.memory_space<vmem>>, %arg3: memref<1x32xf32, #tpu.memory_space<vmem>>, %arg4: memref<1x32xf32, #tpu.memory_space<vmem>>, %arg5: memref<32x128xbf16, #tpu.memory_space<vmem>>, %arg6: memref<16x128xbf16, #tpu.memory_space<vmem>>) attributes {dimension_semantics = [#tpu.dimension_semantics<parallel>, #tpu.dimension_semantics<parallel>], iteration_bounds = array<i64: 1, 3>, scalar_prefetch = 0 : i64, scratch_operands = 0 : i64, tpu.core_type = #tpu.core_type<tc>, window_params = [{transform_indices = @transform_0, window_bounds = array<i64: 16, 32>}, {pipeline_mode = #tpu.pipeline_mode<synchronous>, transform_indices = @transform_1, window_bounds = array<i64: 1, 32>}, {pipeline_mode = #tpu.pipeline_mode<synchronous>, transform_indices = @transform_2, window_bounds = array<i64: 1, 32>}, {transform_indices = @transform_3, window_bounds = array<i64: 32, 128>}, {transform_indices = @transform_4, window_bounds = array<i64: 16, 128>}]} {
    %c0 = arith.constant 0 : index
    %c0_0 = arith.constant 0 : index
    %0 = vector.load %arg2[%c0, %c0_0] : memref<16x32xbf16, #tpu.memory_space<vmem>>, vector<16x32xbf16>
    %1 = arith.extf %0 : vector<16x32xbf16> to vector<16x32xf32>
    %cst = arith.constant dense<0.000000e+00> : vector<16xf32>
    %2 = vector.multi_reduction <add>, %1, %cst [1] : vector<16x32xf32> to vector<16xf32>
    %3 = vector.shape_cast %2 : vector<16xf32> to vector<16x1xf32>
    %cst_1 = arith.constant 3.200000e+01 : f32
    %4 = vector.broadcast %cst_1 : f32 to vector<16x1xf32>
    %5 = arith.divf %3, %4 : vector<16x1xf32>
    %6 = vector.broadcast %5 : vector<16x1xf32> to vector<16x32xf32>
    %7 = arith.subf %1, %6 : vector<16x32xf32>
    %8 = arith.mulf %7, %7 : vector<16x32xf32>
    %cst_2 = arith.constant dense<0.000000e+00> : vector<16xf32>
    %9 = vector.multi_reduction <add>, %8, %cst_2 [1] : vector<16x32xf32> to vector<16xf32>
    %10 = vector.shape_cast %9 : vector<16xf32> to vector<16x1xf32>
    %cst_3 = arith.constant 3.200000e+01 : f32
    %11 = vector.broadcast %cst_3 : f32 to vector<16x1xf32>
    %12 = arith.divf %10, %11 : vector<16x1xf32>
    %13 = vector.broadcast %5 : vector<16x1xf32> to vector<16x32xf32>
    %14 = arith.subf %1, %13 : vector<16x32xf32>
    %cst_4 = arith.constant 9.99999974E-6 : f32
    %15 = vector.broadcast %cst_4 : f32 to vector<16x1xf32>
    %16 = arith.addf %12, %15 : vector<16x1xf32>
    %17 = math.rsqrt %16 : vector<16x1xf32>
    %18 = vector.broadcast %17 : vector<16x1xf32> to vector<16x32xf32>
    %19 = arith.mulf %14, %18 : vector<16x32xf32>
    %c0_5 = arith.constant 0 : index
    %c0_6 = arith.constant 0 : index
    %20 = vector.load %arg3[%c0_5, %c0_6] : memref<1x32xf32, #tpu.memory_space<vmem>>, vector<1x32xf32>
    %21 = vector.broadcast %20 : vector<1x32xf32> to vector<16x32xf32>
    %22 = arith.mulf %19, %21 : vector<16x32xf32>
    %c0_7 = arith.constant 0 : index
    %c0_8 = arith.constant 0 : index
    %23 = vector.load %arg4[%c0_7, %c0_8] : memref<1x32xf32, #tpu.memory_space<vmem>>, vector<1x32xf32>
    %24 = vector.broadcast %23 : vector<1x32xf32> to vector<16x32xf32>
    %25 = arith.addf %22, %24 : vector<16x32xf32>
    %26 = arith.truncf %25 : vector<16x32xf32> to vector<16x32xbf16>
    %c0_9 = arith.constant 0 : index
    %c0_10 = arith.constant 0 : index
    %27 = vector.load %arg5[%c0_9, %c0_10] : memref<32x128xbf16, #tpu.memory_space<vmem>>, vector<32x128xbf16>
    %cst_11 = arith.constant dense<0.000000e+00> : vector<16x128xf32>
    %28 = tpu.matmul %26, %27, %cst_11 {dimension_numbers = #tpu.dot_dimension_numbers<[1], [0], [0], [1], [0, 0, 1, 1], [], []>} : vector<16x32xbf16>, vector<32x128xbf16>, vector<16x128xf32> -> vector<16x128xf32>
    %29 = arith.truncf %28 : vector<16x128xf32> to vector<16x128xbf16>
    %c0_12 = arith.constant 0 : index
    %c0_13 = arith.constant 0 : index
    %30 = vector.load %arg6[%c0_12, %c0_13] : memref<16x128xbf16, #tpu.memory_space<vmem>>, vector<16x128xbf16>
    tpu.vector_store %arg6[%c0_12, %c0_13], %29 {strides = array<i32>} : memref<16x128xbf16, #tpu.memory_space<vmem>>, vector<16x128xbf16>,
    return
  }
  func.func @transform_0(%arg0: i32, %arg1: i32) -> (i32, i32) {
    %c0_i32 = arith.constant 0 : i32
    %c0_i32_0 = arith.constant 0 : i32
    return %arg0, %c0_i32 : i32, i32
  }
  func.func @transform_1(%arg0: i32, %arg1: i32) -> (i32, i32) {
    %c0_i32 = arith.constant 0 : i32
    %c0_i32_0 = arith.constant 0 : i32
    %c0_i32_1 = arith.constant 0 : i32
    return %c0_i32, %c0_i32_0 : i32, i32
  }
  func.func @transform_2(%arg0: i32, %arg1: i32) -> (i32, i32) {
    %c0_i32 = arith.constant 0 : i32
    %c0_i32_0 = arith.constant 0 : i32
    %c0_i32_1 = arith.constant 0 : i32
    return %c0_i32, %c0_i32_0 : i32, i32
  }
  func.func @transform_3(%arg0: i32, %arg1: i32) -> (i32, i32) {
    %c0_i32 = arith.constant 0 : i32
    %c0_i32_0 = arith.constant 0 : i32
    return %c0_i32, %arg1 : i32, i32
  }
  func.func @transform_4(%arg0: i32, %arg1: i32) -> (i32, i32) {
    %c0_i32 = arith.constant 0 : i32
    return %arg0, %arg1 : i32, i32
  }
}

module attributes {stable_mosaic.version = 11 : i64} {
  func.func @_flash_attn_kernel(%arg0: i32, %arg1: i32, %arg2: i32, %arg3: memref<8x8x32xbf16, #tpu.memory_space<vmem>>, %arg4: memref<8x8x32xbf16, #tpu.memory_space<vmem>>, %arg5: memref<8x8x32xbf16, #tpu.memory_space<vmem>>, %arg6: memref<8x8x32xbf16, #tpu.memory_space<vmem>>, %arg7: memref<8x8x1xf32, #tpu.memory_space<vmem>>, %arg8: memref<8x8x1xf32, #tpu.memory_space<vmem>>, %arg9: memref<8x8x32xf32, #tpu.memory_space<vmem>>) attributes {dimension_semantics = [#tpu.dimension_semantics<parallel>, #tpu.dimension_semantics<parallel>, #tpu.dimension_semantics<arbitrary>], iteration_bounds = array<i64: 1, 1, 1>, scalar_prefetch = 0 : i64, scratch_operands = 3 : i64, tpu.core_type = #tpu.core_type<tc>, window_params = [{transform_indices = @transform_0, window_bounds = array<i64: 8, 8, 32>}, {transform_indices = @transform_1, window_bounds = array<i64: 8, 8, 32>}, {transform_indices = @transform_2, window_bounds = array<i64: 8, 8, 32>}, {transform_indices = @transform_3, window_bounds = array<i64: 8, 8, 32>}]} {
    %c0_i32 = arith.constant 0 : i32
    %0 = arith.cmpi eq, %arg2, %c0_i32 : i32
    %1 = arith.extui %0 : i1 to i32
    %c0_i32_0 = arith.constant 0 : i32
    %2 = arith.cmpi ne, %1, %c0_i32_0 : i32
    scf.if %2 {
      %cst_39 = arith.constant -1.000000e+30 : f32
      %49 = vector.broadcast %cst_39 : f32 to vector<8x8x1xf32>
      %c0_40 = arith.constant 0 : index
      %c0_41 = arith.constant 0 : index
      %c0_42 = arith.constant 0 : index
      %50 = vector.load %arg7[%c0_40, %c0_41, %c0_42] : memref<8x8x1xf32, #tpu.memory_space<vmem>>, vector<8x8x1xf32>
      tpu.vector_store %arg7[%c0_40, %c0_41, %c0_42], %49 {strides = array<i32>} : memref<8x8x1xf32, #tpu.memory_space<vmem>>, vector<8x8x1xf32>,
      %cst_43 = arith.constant 0.000000e+00 : f32
      %51 = vector.broadcast %cst_43 : f32 to vector<8x8x1xf32>
      %c0_44 = arith.constant 0 : index
      %c0_45 = arith.constant 0 : index
      %c0_46 = arith.constant 0 : index
      %52 = vector.load %arg8[%c0_44, %c0_45, %c0_46] : memref<8x8x1xf32, #tpu.memory_space<vmem>>, vector<8x8x1xf32>
      tpu.vector_store %arg8[%c0_44, %c0_45, %c0_46], %51 {strides = array<i32>} : memref<8x8x1xf32, #tpu.memory_space<vmem>>, vector<8x8x1xf32>,
      %cst_47 = arith.constant 0.000000e+00 : f32
      %53 = vector.broadcast %cst_47 : f32 to vector<8x8x32xf32>
      %c0_48 = arith.constant 0 : index
      %c0_49 = arith.constant 0 : index
      %c0_50 = arith.constant 0 : index
      %54 = vector.load %arg9[%c0_48, %c0_49, %c0_50] : memref<8x8x32xf32, #tpu.memory_space<vmem>>, vector<8x8x32xf32>
      tpu.vector_store %arg9[%c0_48, %c0_49, %c0_50], %53 {strides = array<i32>} : memref<8x8x32xf32, #tpu.memory_space<vmem>>, vector<8x8x32xf32>,
    } else {
    }
    %c0 = arith.constant 0 : index
    %c0_1 = arith.constant 0 : index
    %c0_2 = arith.constant 0 : index
    %3 = vector.load %arg3[%c0, %c0_1, %c0_2] : memref<8x8x32xbf16, #tpu.memory_space<vmem>>, vector<8x8x32xbf16>
    %c0_3 = arith.constant 0 : index
    %c0_4 = arith.constant 0 : index
    %c0_5 = arith.constant 0 : index
    %4 = vector.load %arg4[%c0_3, %c0_4, %c0_5] : memref<8x8x32xbf16, #tpu.memory_space<vmem>>, vector<8x8x32xbf16>
    "tpu.trace_start"() <{level = 10 : i32, message = "hqd,hkd->hqk"}> : () -> ()
    %cst = arith.constant dense<0.000000e+00> : vector<8x8x8xf32>
    %5 = tpu.matmul %3, %4, %cst {dimension_numbers = #tpu.dot_dimension_numbers<[2], [2], [1], [1], [0, 0, 0, 1, 1, 1], [0], [0]>} : vector<8x8x32xbf16>, vector<8x8x32xbf16>, vector<8x8x8xf32> -> vector<8x8x8xf32>
    "tpu.trace_stop"() : () -> ()
    %cst_6 = arith.constant 0.176776692 : f32
    %6 = vector.broadcast %cst_6 : f32 to vector<8x8x8xf32>
    %7 = arith.mulf %5, %6 : vector<8x8x8xf32>
    %c8_i32 = arith.constant 8 : i32
    %8 = arith.muli %arg1, %c8_i32 : i32
    %9 = tpu.iota {dimensions = array<i32: 1>} : vector<8x8x8xi32>
    %10 = vector.broadcast %8 : i32 to vector<8x8x8xi32>
    %11 = arith.addi %10, %9 : vector<8x8x8xi32>
    %c8_i32_7 = arith.constant 8 : i32
    %12 = arith.muli %arg2, %c8_i32_7 : i32
    %13 = tpu.iota {dimensions = array<i32: 2>} : vector<8x8x8xi32>
    %14 = vector.broadcast %12 : i32 to vector<8x8x8xi32>
    %15 = arith.addi %14, %13 : vector<8x8x8xi32>
    %16 = arith.cmpi sge, %11, %15 : vector<8x8x8xi32>
    %cst_8 = arith.constant 0.000000e+00 : f32
    %cst_9 = arith.constant -1.000000e+30 : f32
    %17 = vector.broadcast %cst_8 : f32 to vector<8x8x8xf32>
    %18 = vector.broadcast %cst_9 : f32 to vector<8x8x8xf32>
    %19 = arith.select %16, %17, %18 : vector<8x8x8xi1>, vector<8x8x8xf32>
    %20 = arith.addf %7, %19 : vector<8x8x8xf32>
    %c0_10 = arith.constant 0 : index
    %c0_11 = arith.constant 0 : index
    %c0_12 = arith.constant 0 : index
    %21 = vector.load %arg7[%c0_10, %c0_11, %c0_12] : memref<8x8x1xf32, #tpu.memory_space<vmem>>, vector<8x8x1xf32>
    %cst_13 = arith.constant dense<0xFF800000> : vector<8x8xf32>
    %22 = vector.multi_reduction <maximumf>, %20, %cst_13 [2] : vector<8x8x8xf32> to vector<8x8xf32>
    %23 = vector.shape_cast %22 : vector<8x8xf32> to vector<8x8x1xf32>
    %24 = arith.maximumf %21, %23 : vector<8x8x1xf32>
    %c0_14 = arith.constant 0 : index
    %c0_15 = arith.constant 0 : index
    %c0_16 = arith.constant 0 : index
    %25 = vector.load %arg7[%c0_14, %c0_15, %c0_16] : memref<8x8x1xf32, #tpu.memory_space<vmem>>, vector<8x8x1xf32>
    %26 = arith.subf %25, %24 : vector<8x8x1xf32>
    %27 = math.exp %26 : vector<8x8x1xf32>
    %28 = vector.broadcast %24 : vector<8x8x1xf32> to vector<8x8x8xf32>
    %29 = arith.subf %20, %28 : vector<8x8x8xf32>
    %30 = math.exp %29 : vector<8x8x8xf32>
    %c0_17 = arith.constant 0 : index
    %c0_18 = arith.constant 0 : index
    %c0_19 = arith.constant 0 : index
    %31 = vector.load %arg8[%c0_17, %c0_18, %c0_19] : memref<8x8x1xf32, #tpu.memory_space<vmem>>, vector<8x8x1xf32>
    %32 = arith.mulf %27, %31 : vector<8x8x1xf32>
    %cst_20 = arith.constant dense<0.000000e+00> : vector<8x8xf32>
    %33 = vector.multi_reduction <add>, %30, %cst_20 [2] : vector<8x8x8xf32> to vector<8x8xf32>
    %34 = vector.shape_cast %33 : vector<8x8xf32> to vector<8x8x1xf32>
    %35 = arith.addf %32, %34 : vector<8x8x1xf32>
    %c0_21 = arith.constant 0 : index
    %c0_22 = arith.constant 0 : index
    %c0_23 = arith.constant 0 : index
    %36 = vector.load %arg8[%c0_21, %c0_22, %c0_23] : memref<8x8x1xf32, #tpu.memory_space<vmem>>, vector<8x8x1xf32>
    tpu.vector_store %arg8[%c0_21, %c0_22, %c0_23], %35 {strides = array<i32>} : memref<8x8x1xf32, #tpu.memory_space<vmem>>, vector<8x8x1xf32>,
    %c0_24 = arith.constant 0 : index
    %c0_25 = arith.constant 0 : index
    %c0_26 = arith.constant 0 : index
    %37 = vector.load %arg9[%c0_24, %c0_25, %c0_26] : memref<8x8x32xf32, #tpu.memory_space<vmem>>, vector<8x8x32xf32>
    %38 = vector.broadcast %27 : vector<8x8x1xf32> to vector<8x8x32xf32>
    %39 = arith.mulf %38, %37 : vector<8x8x32xf32>
    %40 = arith.truncf %30 : vector<8x8x8xf32> to vector<8x8x8xbf16>
    %c0_27 = arith.constant 0 : index
    %c0_28 = arith.constant 0 : index
    %c0_29 = arith.constant 0 : index
    %41 = vector.load %arg5[%c0_27, %c0_28, %c0_29] : memref<8x8x32xbf16, #tpu.memory_space<vmem>>, vector<8x8x32xbf16>
    "tpu.trace_start"() <{level = 10 : i32, message = "hqk,hkd->hqd"}> : () -> ()
    %cst_30 = arith.constant dense<0.000000e+00> : vector<8x8x32xf32>
    %42 = tpu.matmul %40, %41, %cst_30 {dimension_numbers = #tpu.dot_dimension_numbers<[2], [1], [1], [2], [0, 0, 0, 1, 1, 2], [0], [0]>} : vector<8x8x8xbf16>, vector<8x8x32xbf16>, vector<8x8x32xf32> -> vector<8x8x32xf32>
    "tpu.trace_stop"() : () -> ()
    %43 = arith.addf %39, %42 : vector<8x8x32xf32>
    %c0_31 = arith.constant 0 : index
    %c0_32 = arith.constant 0 : index
    %c0_33 = arith.constant 0 : index
    %44 = vector.load %arg9[%c0_31, %c0_32, %c0_33] : memref<8x8x32xf32, #tpu.memory_space<vmem>>, vector<8x8x32xf32>
    tpu.vector_store %arg9[%c0_31, %c0_32, %c0_33], %43 {strides = array<i32>} : memref<8x8x32xf32, #tpu.memory_space<vmem>>, vector<8x8x32xf32>,
    %c0_34 = arith.constant 0 : index
    %c0_35 = arith.constant 0 : index
    %c0_36 = arith.constant 0 : index
    %45 = vector.load %arg7[%c0_34, %c0_35, %c0_36] : memref<8x8x1xf32, #tpu.memory_space<vmem>>, vector<8x8x1xf32>
    tpu.vector_store %arg7[%c0_34, %c0_35, %c0_36], %24 {strides = array<i32>} : memref<8x8x1xf32, #tpu.memory_space<vmem>>, vector<8x8x1xf32>,
    %c0_i32_37 = arith.constant 0 : i32
    %46 = arith.cmpi eq, %arg2, %c0_i32_37 : i32
    %47 = arith.extui %46 : i1 to i32
    %c0_i32_38 = arith.constant 0 : i32
    %48 = arith.cmpi ne, %47, %c0_i32_38 : i32
    scf.if %48 {
      %c0_39 = arith.constant 0 : index
      %c0_40 = arith.constant 0 : index
      %c0_41 = arith.constant 0 : index
      %49 = vector.load %arg9[%c0_39, %c0_40, %c0_41] : memref<8x8x32xf32, #tpu.memory_space<vmem>>, vector<8x8x32xf32>
      %c0_42 = arith.constant 0 : index
      %c0_43 = arith.constant 0 : index
      %c0_44 = arith.constant 0 : index
      %50 = vector.load %arg8[%c0_42, %c0_43, %c0_44] : memref<8x8x1xf32, #tpu.memory_space<vmem>>, vector<8x8x1xf32>
      %51 = tpu.reciprocal %50 {approx = true} : vector<8x8x1xf32> -> vector<8x8x1xf32>
      %52 = vector.broadcast %51 : vector<8x8x1xf32> to vector<8x8x32xf32>
      %53 = arith.mulf %49, %52 : vector<8x8x32xf32>
      %54 = arith.truncf %53 : vector<8x8x32xf32> to vector<8x8x32xbf16>
      %c0_45 = arith.constant 0 : index
      %c0_46 = arith.constant 0 : index
      %c0_47 = arith.constant 0 : index
      %55 = vector.load %arg6[%c0_45, %c0_46, %c0_47] : memref<8x8x32xbf16, #tpu.memory_space<vmem>>, vector<8x8x32xbf16>
      tpu.vector_store %arg6[%c0_45, %c0_46, %c0_47], %54 {strides = array<i32>} : memref<8x8x32xbf16, #tpu.memory_space<vmem>>, vector<8x8x32xbf16>,
    } else {
    }
    return
  }
  func.func @transform_0(%arg0: i32, %arg1: i32, %arg2: i32) -> (i32, i32, i32) {
    %c0_i32 = arith.constant 0 : i32
    %c0_i32_0 = arith.constant 0 : i32
    return %arg0, %arg1, %c0_i32 : i32, i32, i32
  }
  func.func @transform_1(%arg0: i32, %arg1: i32, %arg2: i32) -> (i32, i32, i32) {
    %c0_i32 = arith.constant 0 : i32
    %c0_i32_0 = arith.constant 0 : i32
    return %arg0, %arg2, %c0_i32 : i32, i32, i32
  }
  func.func @transform_2(%arg0: i32, %arg1: i32, %arg2: i32) -> (i32, i32, i32) {
    %c0_i32 = arith.constant 0 : i32
    %c0_i32_0 = arith.constant 0 : i32
    return %arg0, %arg2, %c0_i32 : i32, i32, i32
  }
  func.func @transform_3(%arg0: i32, %arg1: i32, %arg2: i32) -> (i32, i32, i32) {
    %c0_i32 = arith.constant 0 : i32
    %c0_i32_0 = arith.constant 0 : i32
    return %arg0, %arg1, %c0_i32 : i32, i32, i32
  }
}

module attributes {stable_mosaic.version = 11 : i64} {
  func.func @_ln_ffn_kernel(%arg0: i32, %arg1: i32, %arg2: memref<16x32xbf16, #tpu.memory_space<vmem>>, %arg3: memref<1x32xf32, #tpu.memory_space<vmem>>, %arg4: memref<1x32xf32, #tpu.memory_space<vmem>>, %arg5: memref<32x128xbf16, #tpu.memory_space<vmem>>, %arg6: memref<128x32xbf16, #tpu.memory_space<vmem>>, %arg7: memref<16x32xbf16, #tpu.memory_space<vmem>>, %arg8: memref<16x32xbf16, #tpu.memory_space<vmem>>, %arg9: memref<16x32xf32, #tpu.memory_space<vmem>>) attributes {dimension_semantics = [#tpu.dimension_semantics<parallel>, #tpu.dimension_semantics<arbitrary>], iteration_bounds = array<i64: 1, 1>, scalar_prefetch = 0 : i64, scratch_operands = 2 : i64, tpu.core_type = #tpu.core_type<tc>, window_params = [{transform_indices = @transform_0, window_bounds = array<i64: 16, 32>}, {pipeline_mode = #tpu.pipeline_mode<synchronous>, transform_indices = @transform_1, window_bounds = array<i64: 1, 32>}, {pipeline_mode = #tpu.pipeline_mode<synchronous>, transform_indices = @transform_2, window_bounds = array<i64: 1, 32>}, {transform_indices = @transform_3, window_bounds = array<i64: 32, 128>}, {transform_indices = @transform_4, window_bounds = array<i64: 128, 32>}, {transform_indices = @transform_5, window_bounds = array<i64: 16, 32>}]} {
    %c0_i32 = arith.constant 0 : i32
    %0 = arith.cmpi eq, %arg1, %c0_i32 : i32
    %1 = arith.extui %0 : i1 to i32
    %c0_i32_0 = arith.constant 0 : i32
    %2 = arith.cmpi ne, %1, %c0_i32_0 : i32
    scf.if %2 {
      %c0_17 = arith.constant 0 : index
      %c0_18 = arith.constant 0 : index
      %28 = vector.load %arg2[%c0_17, %c0_18] : memref<16x32xbf16, #tpu.memory_space<vmem>>, vector<16x32xbf16>
      %29 = arith.extf %28 : vector<16x32xbf16> to vector<16x32xf32>
      %cst_19 = arith.constant dense<0.000000e+00> : vector<16xf32>
      %30 = vector.multi_reduction <add>, %29, %cst_19 [1] : vector<16x32xf32> to vector<16xf32>
      %31 = vector.shape_cast %30 : vector<16xf32> to vector<16x1xf32>
      %cst_20 = arith.constant 3.200000e+01 : f32
      %32 = vector.broadcast %cst_20 : f32 to vector<16x1xf32>
      %33 = arith.divf %31, %32 : vector<16x1xf32>
      %34 = vector.broadcast %33 : vector<16x1xf32> to vector<16x32xf32>
      %35 = arith.subf %29, %34 : vector<16x32xf32>
      %36 = arith.mulf %35, %35 : vector<16x32xf32>
      %cst_21 = arith.constant dense<0.000000e+00> : vector<16xf32>
      %37 = vector.multi_reduction <add>, %36, %cst_21 [1] : vector<16x32xf32> to vector<16xf32>
      %38 = vector.shape_cast %37 : vector<16xf32> to vector<16x1xf32>
      %cst_22 = arith.constant 3.200000e+01 : f32
      %39 = vector.broadcast %cst_22 : f32 to vector<16x1xf32>
      %40 = arith.divf %38, %39 : vector<16x1xf32>
      %41 = vector.broadcast %33 : vector<16x1xf32> to vector<16x32xf32>
      %42 = arith.subf %29, %41 : vector<16x32xf32>
      %cst_23 = arith.constant 9.99999974E-6 : f32
      %43 = vector.broadcast %cst_23 : f32 to vector<16x1xf32>
      %44 = arith.addf %40, %43 : vector<16x1xf32>
      %45 = math.rsqrt %44 : vector<16x1xf32>
      %46 = vector.broadcast %45 : vector<16x1xf32> to vector<16x32xf32>
      %47 = arith.mulf %42, %46 : vector<16x32xf32>
      %c0_24 = arith.constant 0 : index
      %c0_25 = arith.constant 0 : index
      %48 = vector.load %arg3[%c0_24, %c0_25] : memref<1x32xf32, #tpu.memory_space<vmem>>, vector<1x32xf32>
      %49 = vector.broadcast %48 : vector<1x32xf32> to vector<16x32xf32>
      %50 = arith.mulf %47, %49 : vector<16x32xf32>
      %c0_26 = arith.constant 0 : index
      %c0_27 = arith.constant 0 : index
      %51 = vector.load %arg4[%c0_26, %c0_27] : memref<1x32xf32, #tpu.memory_space<vmem>>, vector<1x32xf32>
      %52 = vector.broadcast %51 : vector<1x32xf32> to vector<16x32xf32>
      %53 = arith.addf %50, %52 : vector<16x32xf32>
      %54 = arith.truncf %53 : vector<16x32xf32> to vector<16x32xbf16>
      %c0_28 = arith.constant 0 : index
      %c0_29 = arith.constant 0 : index
      %55 = vector.load %arg8[%c0_28, %c0_29] : memref<16x32xbf16, #tpu.memory_space<vmem>>, vector<16x32xbf16>
      tpu.vector_store %arg8[%c0_28, %c0_29], %54 {strides = array<i32>} : memref<16x32xbf16, #tpu.memory_space<vmem>>, vector<16x32xbf16>,
      %cst_30 = arith.constant 0.000000e+00 : f32
      %56 = vector.broadcast %cst_30 : f32 to vector<16x32xf32>
      %c0_31 = arith.constant 0 : index
      %c0_32 = arith.constant 0 : index
      %57 = vector.load %arg9[%c0_31, %c0_32] : memref<16x32xf32, #tpu.memory_space<vmem>>, vector<16x32xf32>
      tpu.vector_store %arg9[%c0_31, %c0_32], %56 {strides = array<i32>} : memref<16x32xf32, #tpu.memory_space<vmem>>, vector<16x32xf32>,
    } else {
    }
    %c0 = arith.constant 0 : index
    %c0_1 = arith.constant 0 : index
    %3 = vector.load %arg8[%c0, %c0_1] : memref<16x32xbf16, #tpu.memory_space<vmem>>, vector<16x32xbf16>
    %c0_2 = arith.constant 0 : index
    %c0_3 = arith.constant 0 : index
    %4 = vector.load %arg5[%c0_2, %c0_3] : memref<32x128xbf16, #tpu.memory_space<vmem>>, vector<32x128xbf16>
    %cst = arith.constant dense<0.000000e+00> : vector<16x128xf32>
    %5 = tpu.matmul %3, %4, %cst {dimension_numbers = #tpu.dot_dimension_numbers<[1], [0], [0], [1], [0, 0, 1, 1], [], []>} : vector<16x32xbf16>, vector<32x128xbf16>, vector<16x128xf32> -> vector<16x128xf32>
    %cst_4 = arith.constant 5.000000e-01 : f32
    %6 = vector.broadcast %cst_4 : f32 to vector<16x128xf32>
    %7 = arith.mulf %6, %5 : vector<16x128xf32>
    %cst_5 = arith.constant 4.471500e-02 : f32
    %8 = vector.broadcast %cst_5 : f32 to vector<16x128xf32>
    %9 = arith.mulf %8, %5 : vector<16x128xf32>
    %10 = arith.mulf %9, %5 : vector<16x128xf32>
    %11 = arith.mulf %10, %5 : vector<16x128xf32>
    %12 = arith.addf %5, %11 : vector<16x128xf32>
    %cst_6 = arith.constant 0.797884583 : f32
    %13 = vector.broadcast %cst_6 : f32 to vector<16x128xf32>
    %14 = arith.mulf %13, %12 : vector<16x128xf32>
    %15 = math.tanh %14 : vector<16x128xf32>
    %cst_7 = arith.constant 1.000000e+00 : f32
    %16 = vector.broadcast %cst_7 : f32 to vector<16x128xf32>
    %17 = arith.addf %16, %15 : vector<16x128xf32>
    %18 = arith.mulf %7, %17 : vector<16x128xf32>
    %c0_8 = arith.constant 0 : index
    %c0_9 = arith.constant 0 : index
    %19 = vector.load %arg9[%c0_8, %c0_9] : memref<16x32xf32, #tpu.memory_space<vmem>>, vector<16x32xf32>
    %20 = arith.truncf %18 : vector<16x128xf32> to vector<16x128xbf16>
    %c0_10 = arith.constant 0 : index
    %c0_11 = arith.constant 0 : index
    %21 = vector.load %arg6[%c0_10, %c0_11] : memref<128x32xbf16, #tpu.memory_space<vmem>>, vector<128x32xbf16>
    %cst_12 = arith.constant dense<0.000000e+00> : vector<16x32xf32>
    %22 = tpu.matmul %20, %21, %cst_12 {dimension_numbers = #tpu.dot_dimension_numbers<[1], [0], [0], [1], [0, 0, 1, 1], [], []>} : vector<16x128xbf16>, vector<128x32xbf16>, vector<16x32xf32> -> vector<16x32xf32>
    %23 = arith.addf %19, %22 : vector<16x32xf32>
    %c0_13 = arith.constant 0 : index
    %c0_14 = arith.constant 0 : index
    %24 = vector.load %arg9[%c0_13, %c0_14] : memref<16x32xf32, #tpu.memory_space<vmem>>, vector<16x32xf32>
    tpu.vector_store %arg9[%c0_13, %c0_14], %23 {strides = array<i32>} : memref<16x32xf32, #tpu.memory_space<vmem>>, vector<16x32xf32>,
    %c0_i32_15 = arith.constant 0 : i32
    %25 = arith.cmpi eq, %arg1, %c0_i32_15 : i32
    %26 = arith.extui %25 : i1 to i32
    %c0_i32_16 = arith.constant 0 : i32
    %27 = arith.cmpi ne, %26, %c0_i32_16 : i32
    scf.if %27 {
      %c0_17 = arith.constant 0 : index
      %c0_18 = arith.constant 0 : index
      %28 = vector.load %arg9[%c0_17, %c0_18] : memref<16x32xf32, #tpu.memory_space<vmem>>, vector<16x32xf32>
      %29 = arith.truncf %28 : vector<16x32xf32> to vector<16x32xbf16>
      %c0_19 = arith.constant 0 : index
      %c0_20 = arith.constant 0 : index
      %30 = vector.load %arg7[%c0_19, %c0_20] : memref<16x32xbf16, #tpu.memory_space<vmem>>, vector<16x32xbf16>
      tpu.vector_store %arg7[%c0_19, %c0_20], %29 {strides = array<i32>} : memref<16x32xbf16, #tpu.memory_space<vmem>>, vector<16x32xbf16>,
    } else {
    }
    return
  }
  func.func @transform_0(%arg0: i32, %arg1: i32) -> (i32, i32) {
    %c0_i32 = arith.constant 0 : i32
    %c0_i32_0 = arith.constant 0 : i32
    return %arg0, %c0_i32 : i32, i32
  }
  func.func @transform_1(%arg0: i32, %arg1: i32) -> (i32, i32) {
    %c0_i32 = arith.constant 0 : i32
    %c0_i32_0 = arith.constant 0 : i32
    %c0_i32_1 = arith.constant 0 : i32
    return %c0_i32, %c0_i32_0 : i32, i32
  }
  func.func @transform_2(%arg0: i32, %arg1: i32) -> (i32, i32) {
    %c0_i32 = arith.constant 0 : i32
    %c0_i32_0 = arith.constant 0 : i32
    %c0_i32_1 = arith.constant 0 : i32
    return %c0_i32, %c0_i32_0 : i32, i32
  }
  func.func @transform_3(%arg0: i32, %arg1: i32) -> (i32, i32) {
    %c0_i32 = arith.constant 0 : i32
    %c0_i32_0 = arith.constant 0 : i32
    return %c0_i32, %arg1 : i32, i32
  }
  func.func @transform_4(%arg0: i32, %arg1: i32) -> (i32, i32) {
    %c0_i32 = arith.constant 0 : i32
    %c0_i32_0 = arith.constant 0 : i32
    return %arg1, %c0_i32 : i32, i32
  }
  func.func @transform_5(%arg0: i32, %arg1: i32) -> (i32, i32) {
    %c0_i32 = arith.constant 0 : i32
    %c0_i32_0 = arith.constant 0 : i32
    return %arg0, %c0_i32 : i32, i32
  }
}

module attributes {stable_mosaic.version = 11 : i64} {
  func.func @_ln_head_ce_kernel(%arg0: i32, %arg1: i32, %arg2: memref<16x32xbf16, #tpu.memory_space<vmem>>, %arg3: memref<1x32xf32, #tpu.memory_space<vmem>>, %arg4: memref<1x32xf32, #tpu.memory_space<vmem>>, %arg5: memref<32x64xbf16, #tpu.memory_space<vmem>>, %arg6: memref<16x1xi32, #tpu.memory_space<vmem>>, %arg7: memref<16x1xf32, #tpu.memory_space<vmem>>, %arg8: memref<16x1xi32, #tpu.memory_space<vmem>>, %arg9: memref<16x32xbf16, #tpu.memory_space<vmem>>, %arg10: memref<16x1xf32, #tpu.memory_space<vmem>>, %arg11: memref<16x1xf32, #tpu.memory_space<vmem>>, %arg12: memref<16x1xf32, #tpu.memory_space<vmem>>, %arg13: memref<16x1xf32, #tpu.memory_space<vmem>>, %arg14: memref<16x1xi32, #tpu.memory_space<vmem>>) attributes {dimension_semantics = [#tpu.dimension_semantics<parallel>, #tpu.dimension_semantics<arbitrary>], iteration_bounds = array<i64: 1, 1>, scalar_prefetch = 0 : i64, scratch_operands = 6 : i64, tpu.core_type = #tpu.core_type<tc>, window_params = [{transform_indices = @transform_0, window_bounds = array<i64: 16, 32>}, {pipeline_mode = #tpu.pipeline_mode<synchronous>, transform_indices = @transform_1, window_bounds = array<i64: 1, 32>}, {pipeline_mode = #tpu.pipeline_mode<synchronous>, transform_indices = @transform_2, window_bounds = array<i64: 1, 32>}, {transform_indices = @transform_3, window_bounds = array<i64: 32, 64>}, {transform_indices = @transform_4, window_bounds = array<i64: 16, 1>}, {transform_indices = @transform_5, window_bounds = array<i64: 16, 1>}, {transform_indices = @transform_6, window_bounds = array<i64: 16, 1>}]} {
    %c0_i32 = arith.constant 0 : i32
    %0 = arith.cmpi eq, %arg1, %c0_i32 : i32
    %1 = arith.extui %0 : i1 to i32
    %c0_i32_0 = arith.constant 0 : i32
    %2 = arith.cmpi ne, %1, %c0_i32_0 : i32
    scf.if %2 {
      %c0_38 = arith.constant 0 : index
      %c0_39 = arith.constant 0 : index
      %56 = vector.load %arg2[%c0_38, %c0_39] : memref<16x32xbf16, #tpu.memory_space<vmem>>, vector<16x32xbf16>
      %57 = arith.extf %56 : vector<16x32xbf16> to vector<16x32xf32>
      %cst_40 = arith.constant dense<0.000000e+00> : vector<16xf32>
      %58 = vector.multi_reduction <add>, %57, %cst_40 [1] : vector<16x32xf32> to vector<16xf32>
      %59 = vector.shape_cast %58 : vector<16xf32> to vector<16x1xf32>
      %cst_41 = arith.constant 3.200000e+01 : f32
      %60 = vector.broadcast %cst_41 : f32 to vector<16x1xf32>
      %61 = arith.divf %59, %60 : vector<16x1xf32>
      %62 = vector.broadcast %61 : vector<16x1xf32> to vector<16x32xf32>
      %63 = arith.subf %57, %62 : vector<16x32xf32>
      %64 = arith.mulf %63, %63 : vector<16x32xf32>
      %cst_42 = arith.constant dense<0.000000e+00> : vector<16xf32>
      %65 = vector.multi_reduction <add>, %64, %cst_42 [1] : vector<16x32xf32> to vector<16xf32>
      %66 = vector.shape_cast %65 : vector<16xf32> to vector<16x1xf32>
      %cst_43 = arith.constant 3.200000e+01 : f32
      %67 = vector.broadcast %cst_43 : f32 to vector<16x1xf32>
      %68 = arith.divf %66, %67 : vector<16x1xf32>
      %69 = vector.broadcast %61 : vector<16x1xf32> to vector<16x32xf32>
      %70 = arith.subf %57, %69 : vector<16x32xf32>
      %cst_44 = arith.constant 9.99999974E-6 : f32
      %71 = vector.broadcast %cst_44 : f32 to vector<16x1xf32>
      %72 = arith.addf %68, %71 : vector<16x1xf32>
      %73 = math.rsqrt %72 : vector<16x1xf32>
      %74 = vector.broadcast %73 : vector<16x1xf32> to vector<16x32xf32>
      %75 = arith.mulf %70, %74 : vector<16x32xf32>
      %c0_45 = arith.constant 0 : index
      %c0_46 = arith.constant 0 : index
      %76 = vector.load %arg3[%c0_45, %c0_46] : memref<1x32xf32, #tpu.memory_space<vmem>>, vector<1x32xf32>
      %77 = vector.broadcast %76 : vector<1x32xf32> to vector<16x32xf32>
      %78 = arith.mulf %75, %77 : vector<16x32xf32>
      %c0_47 = arith.constant 0 : index
      %c0_48 = arith.constant 0 : index
      %79 = vector.load %arg4[%c0_47, %c0_48] : memref<1x32xf32, #tpu.memory_space<vmem>>, vector<1x32xf32>
      %80 = vector.broadcast %79 : vector<1x32xf32> to vector<16x32xf32>
      %81 = arith.addf %78, %80 : vector<16x32xf32>
      %82 = arith.truncf %81 : vector<16x32xf32> to vector<16x32xbf16>
      %c0_49 = arith.constant 0 : index
      %c0_50 = arith.constant 0 : index
      %83 = vector.load %arg9[%c0_49, %c0_50] : memref<16x32xbf16, #tpu.memory_space<vmem>>, vector<16x32xbf16>
      tpu.vector_store %arg9[%c0_49, %c0_50], %82 {strides = array<i32>} : memref<16x32xbf16, #tpu.memory_space<vmem>>, vector<16x32xbf16>,
      %cst_51 = arith.constant -1.000000e+30 : f32
      %84 = vector.broadcast %cst_51 : f32 to vector<16x1xf32>
      %c0_52 = arith.constant 0 : index
      %c0_53 = arith.constant 0 : index
      %85 = vector.load %arg10[%c0_52, %c0_53] : memref<16x1xf32, #tpu.memory_space<vmem>>, vector<16x1xf32>
      tpu.vector_store %arg10[%c0_52, %c0_53], %84 {strides = array<i32>} : memref<16x1xf32, #tpu.memory_space<vmem>>, vector<16x1xf32>,
      %cst_54 = arith.constant 0.000000e+00 : f32
      %86 = vector.broadcast %cst_54 : f32 to vector<16x1xf32>
      %c0_55 = arith.constant 0 : index
      %c0_56 = arith.constant 0 : index
      %87 = vector.load %arg11[%c0_55, %c0_56] : memref<16x1xf32, #tpu.memory_space<vmem>>, vector<16x1xf32>
      tpu.vector_store %arg11[%c0_55, %c0_56], %86 {strides = array<i32>} : memref<16x1xf32, #tpu.memory_space<vmem>>, vector<16x1xf32>,
      %cst_57 = arith.constant 0.000000e+00 : f32
      %88 = vector.broadcast %cst_57 : f32 to vector<16x1xf32>
      %c0_58 = arith.constant 0 : index
      %c0_59 = arith.constant 0 : index
      %89 = vector.load %arg12[%c0_58, %c0_59] : memref<16x1xf32, #tpu.memory_space<vmem>>, vector<16x1xf32>
      tpu.vector_store %arg12[%c0_58, %c0_59], %88 {strides = array<i32>} : memref<16x1xf32, #tpu.memory_space<vmem>>, vector<16x1xf32>,
      %cst_60 = arith.constant -1.000000e+30 : f32
      %90 = vector.broadcast %cst_60 : f32 to vector<16x1xf32>
      %c0_61 = arith.constant 0 : index
      %c0_62 = arith.constant 0 : index
      %91 = vector.load %arg13[%c0_61, %c0_62] : memref<16x1xf32, #tpu.memory_space<vmem>>, vector<16x1xf32>
      tpu.vector_store %arg13[%c0_61, %c0_62], %90 {strides = array<i32>} : memref<16x1xf32, #tpu.memory_space<vmem>>, vector<16x1xf32>,
      %c0_i32_63 = arith.constant 0 : i32
      %92 = vector.broadcast %c0_i32_63 : i32 to vector<16x1xi32>
      %c0_64 = arith.constant 0 : index
      %c0_65 = arith.constant 0 : index
      %93 = vector.load %arg14[%c0_64, %c0_65] : memref<16x1xi32, #tpu.memory_space<vmem>>, vector<16x1xi32>
      tpu.vector_store %arg14[%c0_64, %c0_65], %92 {strides = array<i32>} : memref<16x1xi32, #tpu.memory_space<vmem>>, vector<16x1xi32>,
    } else {
    }
    %c0 = arith.constant 0 : index
    %c0_1 = arith.constant 0 : index
    %3 = vector.load %arg9[%c0, %c0_1] : memref<16x32xbf16, #tpu.memory_space<vmem>>, vector<16x32xbf16>
    %c0_2 = arith.constant 0 : index
    %c0_3 = arith.constant 0 : index
    %4 = vector.load %arg5[%c0_2, %c0_3] : memref<32x64xbf16, #tpu.memory_space<vmem>>, vector<32x64xbf16>
    %cst = arith.constant dense<0.000000e+00> : vector<16x64xf32>
    %5 = tpu.matmul %3, %4, %cst {dimension_numbers = #tpu.dot_dimension_numbers<[1], [0], [0], [1], [0, 0, 1, 1], [], []>} : vector<16x32xbf16>, vector<32x64xbf16>, vector<16x64xf32> -> vector<16x64xf32>
    %c64_i32 = arith.constant 64 : i32
    %6 = arith.muli %arg1, %c64_i32 : i32
    %7 = tpu.iota {dimensions = array<i32: 1>} : vector<16x64xi32>
    %8 = vector.broadcast %6 : i32 to vector<16x64xi32>
    %9 = arith.addi %8, %7 : vector<16x64xi32>
    %c0_4 = arith.constant 0 : index
    %c0_5 = arith.constant 0 : index
    %10 = vector.load %arg10[%c0_4, %c0_5] : memref<16x1xf32, #tpu.memory_space<vmem>>, vector<16x1xf32>
    %cst_6 = arith.constant dense<0xFF800000> : vector<16xf32>
    %11 = vector.multi_reduction <maximumf>, %5, %cst_6 [1] : vector<16x64xf32> to vector<16xf32>
    %12 = vector.shape_cast %11 : vector<16xf32> to vector<16x1xf32>
    %13 = arith.maximumf %10, %12 : vector<16x1xf32>
    %c0_7 = arith.constant 0 : index
    %c0_8 = arith.constant 0 : index
    %14 = vector.load %arg11[%c0_7, %c0_8] : memref<16x1xf32, #tpu.memory_space<vmem>>, vector<16x1xf32>
    %c0_9 = arith.constant 0 : index
    %c0_10 = arith.constant 0 : index
    %15 = vector.load %arg10[%c0_9, %c0_10] : memref<16x1xf32, #tpu.memory_space<vmem>>, vector<16x1xf32>
    %16 = arith.subf %15, %13 : vector<16x1xf32>
    %17 = math.exp %16 : vector<16x1xf32>
    %18 = arith.mulf %14, %17 : vector<16x1xf32>
    %19 = vector.broadcast %13 : vector<16x1xf32> to vector<16x64xf32>
    %20 = arith.subf %5, %19 : vector<16x64xf32>
    %21 = math.exp %20 : vector<16x64xf32>
    %cst_11 = arith.constant dense<0.000000e+00> : vector<16xf32>
    %22 = vector.multi_reduction <add>, %21, %cst_11 [1] : vector<16x64xf32> to vector<16xf32>
    %23 = vector.shape_cast %22 : vector<16xf32> to vector<16x1xf32>
    %24 = arith.addf %18, %23 : vector<16x1xf32>
    %c0_12 = arith.constant 0 : index
    %c0_13 = arith.constant 0 : index
    %25 = vector.load %arg11[%c0_12, %c0_13] : memref<16x1xf32, #tpu.memory_space<vmem>>, vector<16x1xf32>
    tpu.vector_store %arg11[%c0_12, %c0_13], %24 {strides = array<i32>} : memref<16x1xf32, #tpu.memory_space<vmem>>, vector<16x1xf32>,
    %c0_14 = arith.constant 0 : index
    %c0_15 = arith.constant 0 : index
    %26 = vector.load %arg10[%c0_14, %c0_15] : memref<16x1xf32, #tpu.memory_space<vmem>>, vector<16x1xf32>
    tpu.vector_store %arg10[%c0_14, %c0_15], %13 {strides = array<i32>} : memref<16x1xf32, #tpu.memory_space<vmem>>, vector<16x1xf32>,
    %c0_16 = arith.constant 0 : index
    %c0_17 = arith.constant 0 : index
    %27 = vector.load %arg12[%c0_16, %c0_17] : memref<16x1xf32, #tpu.memory_space<vmem>>, vector<16x1xf32>
    %c0_18 = arith.constant 0 : index
    %c0_19 = arith.constant 0 : index
    %28 = vector.load %arg6[%c0_18, %c0_19] : memref<16x1xi32, #tpu.memory_space<vmem>>, vector<16x1xi32>
    %29 = vector.broadcast %28 : vector<16x1xi32> to vector<16x64xi32>
    %30 = arith.cmpi eq, %9, %29 : vector<16x64xi32>
    %cst_20 = arith.constant 0.000000e+00 : f32
    %31 = vector.broadcast %cst_20 : f32 to vector<16x64xf32>
    %32 = arith.select %30, %5, %31 : vector<16x64xi1>, vector<16x64xf32>
    %cst_21 = arith.constant dense<0.000000e+00> : vector<16xf32>
    %33 = vector.multi_reduction <add>, %32, %cst_21 [1] : vector<16x64xf32> to vector<16xf32>
    %34 = vector.shape_cast %33 : vector<16xf32> to vector<16x1xf32>
    %35 = arith.addf %27, %34 : vector<16x1xf32>
    %c0_22 = arith.constant 0 : index
    %c0_23 = arith.constant 0 : index
    %36 = vector.load %arg12[%c0_22, %c0_23] : memref<16x1xf32, #tpu.memory_space<vmem>>, vector<16x1xf32>
    tpu.vector_store %arg12[%c0_22, %c0_23], %35 {strides = array<i32>} : memref<16x1xf32, #tpu.memory_space<vmem>>, vector<16x1xf32>,
    %cst_24 = arith.constant dense<0xFF800000> : vector<16xf32>
    %37 = vector.multi_reduction <maximumf>, %5, %cst_24 [1] : vector<16x64xf32> to vector<16xf32>
    %38 = vector.shape_cast %37 : vector<16xf32> to vector<16x1xf32>
    %39 = vector.broadcast %38 : vector<16x1xf32> to vector<16x64xf32>
    %40 = arith.cmpf oeq, %5, %39 : vector<16x64xf32>
    %c1073741824_i32 = arith.constant 1073741824 : i32
    %41 = vector.broadcast %c1073741824_i32 : i32 to vector<16x64xi32>
    %42 = arith.select %40, %9, %41 : vector<16x64xi1>, vector<16x64xi32>
    %cst_25 = arith.constant dense<2147483647> : vector<16xi32>
    %43 = vector.multi_reduction <minsi>, %42, %cst_25 [1] : vector<16x64xi32> to vector<16xi32>
    %44 = vector.shape_cast %43 : vector<16xi32> to vector<16x1xi32>
    %c0_26 = arith.constant 0 : index
    %c0_27 = arith.constant 0 : index
    %45 = vector.load %arg13[%c0_26, %c0_27] : memref<16x1xf32, #tpu.memory_space<vmem>>, vector<16x1xf32>
    %46 = arith.cmpf ogt, %38, %45 : vector<16x1xf32>
    %c0_28 = arith.constant 0 : index
    %c0_29 = arith.constant 0 : index
    %47 = vector.load %arg13[%c0_28, %c0_29] : memref<16x1xf32, #tpu.memory_space<vmem>>, vector<16x1xf32>
    %48 = arith.select %46, %38, %47 : vector<16x1xi1>, vector<16x1xf32>
    %c0_30 = arith.constant 0 : index
    %c0_31 = arith.constant 0 : index
    %49 = vector.load %arg13[%c0_30, %c0_31] : memref<16x1xf32, #tpu.memory_space<vmem>>, vector<16x1xf32>
    tpu.vector_store %arg13[%c0_30, %c0_31], %48 {strides = array<i32>} : memref<16x1xf32, #tpu.memory_space<vmem>>, vector<16x1xf32>,
    %c0_32 = arith.constant 0 : index
    %c0_33 = arith.constant 0 : index
    %50 = vector.load %arg14[%c0_32, %c0_33] : memref<16x1xi32, #tpu.memory_space<vmem>>, vector<16x1xi32>
    %51 = arith.select %46, %44, %50 : vector<16x1xi1>, vector<16x1xi32>
    %c0_34 = arith.constant 0 : index
    %c0_35 = arith.constant 0 : index
    %52 = vector.load %arg14[%c0_34, %c0_35] : memref<16x1xi32, #tpu.memory_space<vmem>>, vector<16x1xi32>
    tpu.vector_store %arg14[%c0_34, %c0_35], %51 {strides = array<i32>} : memref<16x1xi32, #tpu.memory_space<vmem>>, vector<16x1xi32>,
    %c0_i32_36 = arith.constant 0 : i32
    %53 = arith.cmpi eq, %arg1, %c0_i32_36 : i32
    %54 = arith.extui %53 : i1 to i32
    %c0_i32_37 = arith.constant 0 : i32
    %55 = arith.cmpi ne, %54, %c0_i32_37 : i32
    scf.if %55 {
      %c0_38 = arith.constant 0 : index
      %c0_39 = arith.constant 0 : index
      %56 = vector.load %arg10[%c0_38, %c0_39] : memref<16x1xf32, #tpu.memory_space<vmem>>, vector<16x1xf32>
      %c0_40 = arith.constant 0 : index
      %c0_41 = arith.constant 0 : index
      %57 = vector.load %arg11[%c0_40, %c0_41] : memref<16x1xf32, #tpu.memory_space<vmem>>, vector<16x1xf32>
      %58 = math.log %57 : vector<16x1xf32>
      %59 = arith.addf %56, %58 : vector<16x1xf32>
      %c0_42 = arith.constant 0 : index
      %c0_43 = arith.constant 0 : index
      %60 = vector.load %arg12[%c0_42, %c0_43] : memref<16x1xf32, #tpu.memory_space<vmem>>, vector<16x1xf32>
      %61 = arith.subf %59, %60 : vector<16x1xf32>
      %c0_44 = arith.constant 0 : index
      %c0_45 = arith.constant 0 : index
      %62 = vector.load %arg7[%c0_44, %c0_45] : memref<16x1xf32, #tpu.memory_space<vmem>>, vector<16x1xf32>
      tpu.vector_store %arg7[%c0_44, %c0_45], %61 {strides = array<i32>} : memref<16x1xf32, #tpu.memory_space<vmem>>, vector<16x1xf32>,
      %c0_46 = arith.constant 0 : index
      %c0_47 = arith.constant 0 : index
      %63 = vector.load %arg14[%c0_46, %c0_47] : memref<16x1xi32, #tpu.memory_space<vmem>>, vector<16x1xi32>
      %c0_48 = arith.constant 0 : index
      %c0_49 = arith.constant 0 : index
      %64 = vector.load %arg8[%c0_48, %c0_49] : memref<16x1xi32, #tpu.memory_space<vmem>>, vector<16x1xi32>
      tpu.vector_store %arg8[%c0_48, %c0_49], %63 {strides = array<i32>} : memref<16x1xi32, #tpu.memory_space<vmem>>, vector<16x1xi32>,
    } else {
    }
    return
  }
  func.func @transform_0(%arg0: i32, %arg1: i32) -> (i32, i32) {
    %c0_i32 = arith.constant 0 : i32
    %c0_i32_0 = arith.constant 0 : i32
    return %arg0, %c0_i32 : i32, i32
  }
  func.func @transform_1(%arg0: i32, %arg1: i32) -> (i32, i32) {
    %c0_i32 = arith.constant 0 : i32
    %c0_i32_0 = arith.constant 0 : i32
    %c0_i32_1 = arith.constant 0 : i32
    return %c0_i32, %c0_i32_0 : i32, i32
  }
  func.func @transform_2(%arg0: i32, %arg1: i32) -> (i32, i32) {
    %c0_i32 = arith.constant 0 : i32
    %c0_i32_0 = arith.constant 0 : i32
    %c0_i32_1 = arith.constant 0 : i32
    return %c0_i32, %c0_i32_0 : i32, i32
  }
  func.func @transform_3(%arg0: i32, %arg1: i32) -> (i32, i32) {
    %c0_i32 = arith.constant 0 : i32
    %c0_i32_0 = arith.constant 0 : i32
    return %c0_i32, %arg1 : i32, i32
  }
  func.func @transform_4(%arg0: i32, %arg1: i32) -> (i32, i32) {
    %c0_i32 = arith.constant 0 : i32
    %c0_i32_0 = arith.constant 0 : i32
    return %arg0, %c0_i32 : i32, i32
  }
  func.func @transform_5(%arg0: i32, %arg1: i32) -> (i32, i32) {
    %c0_i32 = arith.constant 0 : i32
    %c0_i32_0 = arith.constant 0 : i32
    return %arg0, %c0_i32 : i32, i32
  }
  func.func @transform_6(%arg0: i32, %arg1: i32) -> (i32, i32) {
    %c0_i32 = arith.constant 0 : i32
    %c0_i32_0 = arith.constant 0 : i32
    return %arg0, %c0_i32 : i32, i32
  }
}

</mosaic_0001>

<llo_original>
// kernel: my_model_forward.15
$region0: #{my_model_forward.15}
  #allocation0 [shape = 'u32[]', space=smem, size = 0x4, offset = 0x4, fixed_abs, tag = 'smem constant byte address 0x4 - core index']
  #allocation1 [shape = 'u32[72,128]{1,0:T(1,128)}', space=vmem, size = 0x9000, scoped, tag = 'internal scratch']
  #allocation2 [shape = 'f32[16,32]{1,0:T(8,128)}', space=vmem, size = 0x2000, scoped, tag = 'scratch operand']
  %s0 = inlined_call_operand.vmem [shape: bf16[16,128], index: 0, kind: input, shape index: {}]
  %s1 = inlined_call_operand.vmem [shape: bf16[128,32], index: 1, kind: input, shape index: {}]
  %s2 = inlined_call_operand.vmem [shape: bf16[16,32], index: 2, kind: input, shape index: {}]
  %s3 = inlined_call_operand.vmem [shape: bf16[16,32], index: 3, kind: output, shape index: {}]
  %s4 = sld [smem:[#allocation0]]
  $region30: #{my_model_forward.15} parent=0
    _
  %s6 = ssub.s32 1, %s4
  %s7 = scalar_select 0, %s6, %s4
  // Predicated region
  $region2: #{my_model_forward.15} parent=0 // pred_check
    _
  $region3: #{my_model_forward.15} parent=0 // pred_check_branch
    %9 = sbr.rel (0) target = $region5
  $region4: #{my_model_forward.15} parent=0 // pred_region
    _
  $region5: #{my_model_forward.15} parent=0 // pred_fallthru
    _
  // Predicated region
  $region6: #{my_model_forward.15} parent=0 // pred_check
    _
  $region7: #{my_model_forward.15} parent=0 // pred_check_branch
    %11 = sbr.rel (0) target = $region9
  $region8: #{my_model_forward.15} parent=0 // pred_region
    _
  $region9: #{my_model_forward.15} parent=0 // pred_fallthru
    _
  // Predicated region
  $region10: #{my_model_forward.15} parent=0 // pred_check
    _
  $region11: #{my_model_forward.15} parent=0 // pred_check_branch
    %13 = sbr.rel (0) target = $region13
  $region12: #{my_model_forward.15} parent=0 // pred_region
    _
  $region13: #{my_model_forward.15} parent=0 // pred_fallthru
    _
  %p14 = scmp.eq.s32.totalorder 0, 0
  // Predicated region
  $region14: #{my_model_forward.15} parent=0 // pred_check
    %p15 = pneg %p14
  $region15: #{my_model_forward.15} parent=0 // pred_check_branch
    %17 = sbr.rel (%p15) target = $region17
  $region16: #{my_model_forward.15} parent=0 // pred_region
    %vm18 = vcmask 261120
    %19 = vst.msk [vmem:[#allocation2] sm:$0xff] %vm18, 0.0
    %20 = vst.msk [vmem:[#allocation2 + $0x8] sm:$0xff] %vm18, 0.0
  $region17: #{my_model_forward.15} parent=0 // pred_fallthru
    _
  %v21 = vld [vmem:[#allocation2] sm:$0xff]
  %v22 = vld [vmem:[#allocation2 + $0x8] sm:$0xff]
  %v23 = vld [vmem:[%s0] sm:$0xf]
  %v24 = vld [vmem:[%s0 + $0x4] sm:$0xf]
  %v25 = vld [vmem:[%s1] sm:$0xf]
  %v26 = vld [vmem:[%s1 + $0x4] sm:$0xf]
  %v27 = vld [vmem:[%s1 + $0x8] sm:$0xf]
  %v28 = vld [vmem:[%s1 + $0xc] sm:$0xf]
  %v29 = vld [vmem:[%s1 + $0x10] sm:$0xf]
  %v30 = vld [vmem:[%s1 + $0x14] sm:$0xf]
  %v31 = vld [vmem:[%s1 + $0x18] sm:$0xf]
  %v32 = vld [vmem:[%s1 + $0x1c] sm:$0xf]
  %v33 = vld [vmem:[%s1 + $0x20] sm:$0xf]
  %v34 = vld [vmem:[%s1 + $0x24] sm:$0xf]
  %v35 = vld [vmem:[%s1 + $0x28] sm:$0xf]
  %v36 = vld [vmem:[%s1 + $0x2c] sm:$0xf]
  %v37 = vld [vmem:[%s1 + $0x30] sm:$0xf]
  %v38 = vld [vmem:[%s1 + $0x34] sm:$0xf]
  %v39 = vld [vmem:[%s1 + $0x38] sm:$0xf]
  %v40 = vld [vmem:[%s1 + $0x3c] sm:$0xf]
  %v43 = vunpack.c.l.b16 %v23
  %v44 = vunpack.c.l.b16 %v24
  %v45 = vpack.c.b16 %v44, %v43
  %v63 = vunpack.c.l.b16 %v25
  %v64 = vunpack.c.l.b16 %v26
  %v65 = vunpack.c.l.b16 %v27
  %v66 = vunpack.c.l.b16 %v28
  %v67 = vunpack.c.l.b16 %v29
  %v68 = vunpack.c.l.b16 %v30
  %v69 = vunpack.c.l.b16 %v31
  %v70 = vunpack.c.l.b16 %v32
  %v71 = vunpack.c.l.b16 %v33
  %v72 = vunpack.c.l.b16 %v34
  %v73 = vunpack.c.l.b16 %v35
  %v74 = vunpack.c.l.b16 %v36
  %v75 = vunpack.c.l.b16 %v37
  %v76 = vunpack.c.l.b16 %v38
  %v77 = vunpack.c.l.b16 %v39
  %v78 = vunpack.c.l.b16 %v40
  %v79 = vpack.c.b16 %v64, %v63
  %v80 = vpack.c.b16 %v66, %v65
  %v81 = vpack.c.b16 %v68, %v67
  %v82 = vpack.c.b16 %v70, %v69
  %v83 = vpack.c.b16 %v72, %v71
  %v84 = vpack.c.b16 %v74, %v73
  %v85 = vpack.c.b16 %v76, %v75
  %v86 = vpack.c.b16 %v78, %v77
  %95 = vmatpush.bf16.msra.mxu0 %v86
  %96 = vmatpush.bf16.msra.mxu0 %v85
  %97 = vmatpush.bf16.msra.mxu0 %v84
  %98 = vmatpush.bf16.msra.mxu0 %v83
  %99 = vmatpush.bf16.msra.mxu0 %v82
  %100 = vmatpush.bf16.msra.mxu0 %v81
  %101 = vmatpush.bf16.msra.mxu0 %v80
  %102 = vmatpush.bf16.msra.mxu0 %v79
  %103 = vmatmul.bf16.gmra.mxu0 %v45
  %v104 = vpop.f32.mrf.mxu0
  %v105 = vadd.f32 0.0, %v104
  %v106 = vpop.f32.mrf.mxu0
  %v107 = vadd.f32 0.0, %v106
  %108 = vdwg.mxu0
  %v109 = vadd.f32 %v21, %v105
  %v110 = vadd.f32 %v22, %v107
  %vm111 = vcmask 261120
  %112 = vst.msk [vmem:[#allocation2] sm:$0xff] %vm111, %v109
  %113 = vst.msk [vmem:[#allocation2 + $0x8] sm:$0xff] %vm111, %v110
  // Predicated region
  $region18: #{my_model_forward.15} parent=0 // pred_check
    %p114 = pneg %p14
  $region19: #{my_model_forward.15} parent=0 // pred_check_branch
    %116 = sbr.rel (%p114) target = $region21
  $region20: #{my_model_forward.15} parent=0 // pred_region
    %v117 = vld [vmem:[#allocation2] sm:$0xff]
    %v118 = vld [vmem:[#allocation2 + $0x8] sm:$0xff]
    %v119 = vld [vmem:[%s2] sm:$0xf]
    %v120 = vld [vmem:[%s2 + $0x4] sm:$0xf]
    %v121 = vunpack.c.l.bf16 %v119
    %v122 = vunpack.c.l.bf16 %v120
    %v123 = vadd.f32 %v117, %v121
    %v124 = vadd.f32 %v118, %v122
    %v125 = vpack.c.bf16 %v123, %v123
    %v126 = vpack.c.bf16 %v124, %v124
    %vm127 = vcmask 257024
    %128 = vst.msk [vmem:[%s3] sm:$0xf] %vm127, %v125
    %129 = vst.msk [vmem:[%s3 + $0x4] sm:$0xf] %vm127, %v126
  $region21: #{my_model_forward.15} parent=0 // pred_fallthru
    _
  // Predicated region
  $region22: #{my_model_forward.15} parent=0 // pred_check
    _
  $region23: #{my_model_forward.15} parent=0 // pred_check_branch
    %131 = sbr.rel (0) target = $region25
  $region24: #{my_model_forward.15} parent=0 // pred_region
    _
  $region25: #{my_model_forward.15} parent=0 // pred_fallthru
    _
  // Predicated region
  $region26: #{my_model_forward.15} parent=0 // pred_check
    _
  $region27: #{my_model_forward.15} parent=0 // pred_check_branch
    %133 = sbr.rel (0) target = $region29
  $region28: #{my_model_forward.15} parent=0 // pred_region
    _
  $region29: #{my_model_forward.15} parent=0 // pred_fallthru
    _

// kernel: my_model_forward.13
$region0: #{my_model_forward.13}
  #allocation0 [shape = 'u32[]', space=smem, size = 0x4, offset = 0x4, fixed_abs, tag = 'smem constant byte address 0x4 - core index']
  #allocation1 [shape = 'u32[72,128]{1,0:T(1,128)}', space=vmem, size = 0x9000, scoped, tag = 'internal scratch']
  %s0 = inlined_call_operand.vmem [shape: bf16[16,32], index: 0, kind: input, shape index: {}]
  %s1 = inlined_call_operand.vmem [shape: f32[1,32], index: 1, kind: input, shape index: {}]
  %s2 = inlined_call_operand.vmem [shape: f32[1,32], index: 2, kind: input, shape index: {}]
  %s3 = inlined_call_operand.vmem [shape: bf16[32,384], index: 3, kind: input, shape index: {}]
  %s4 = inlined_call_operand.vmem [shape: bf16[16,384], index: 4, kind: output, shape index: {}]
  %s5 = sld [smem:[#allocation0]]
  $region127: #{my_model_forward.13} parent=0
    _
  %s7 = ssub.s32 1, %s5
  %s8 = scalar_select 0, %s7, %s5
  $region1: #{my_model_forward.13} parent=0
    #allocation2 [shape = 'u8[16384]{0}', space=vmem, size = 0x4000, scoped, tag = 'input window, operand 3']
    #allocation3 [shape = 'u8[8192]{0}', space=vmem, size = 0x2000, scoped, tag = 'output window, operand 0']
    loop: start=0, step=1, limit=5
    $region2: #{my_model_forward.13} parent=1 // loop_pre_header
      _
    $region3: #{my_model_forward.13} parent=1 // loop_header
      %s10 = sphi 0, %s14
      %p11 = scmp.ge.s32.totalorder %s10, 5
      %s17 = sphi 0, %s29
      %s18 = sphi 0, %s25
      %s19 = sphi 0, %s17
      %s20 = sphi 0, %s18
      %s21 = sphi 0, %s19
      %s22 = sphi 0, %s20
      %s32 = sphi 0, %s34
      %s35 = sphi 0, %s32
      %s36 = sphi 0, %s35
      %s52 = sphi 0, %s36
      %s56 = sphi 0, %s56
      %s58 = sphi 0, %s56
      %s59 = sphi 0, %s58
      %s73 = sphi 0, %s59
      %s77 = sphi 0, %s77
      %s79 = sphi 0, %s77
      %s80 = sphi 0, %s79
      %s94 = sphi 0, %s80
      %s100 = sphi 0, %s102
      %s103 = sphi 0, %s100
      %s104 = sphi 0, %s103
      %s120 = sphi 0, %s104
      %s128 = sphi 0, %s130
      %s131 = sphi 0, %s128
      %s132 = sphi 0, %s131
      %s148 = sphi 0, %s132
    $region4: #{my_model_forward.13} parent=1 // loop_header_branch
      %13 = sbr.rel (%p11) target = $region8
    $region5: #{my_model_forward.13} parent=1 // loop_body
      %s15 = ssub.s32 %s10, 1
      %s16 = ssub.s32 %s10, 2
      %s23 = sadd.s32 1, %s18
      %p24 = scmp.ge.s32.totalorder %s23, 3
      %s25 = scalar_select %p24, 0, %s23
      %s26 = sadd.s32 1, %s17
      %s27 = scalar_select %p24, %s26, %s17
      %p28 = scmp.ge.s32.totalorder %s27, 1
      %s29 = scalar_select %p28, 0, %s27
      %s30 = ssub.s32 %s17, %s29
      %p31 = scmp.eq.s32.totalorder %s30, 0
      %s33 = sadd.s32 %s32, 1
      %s34 = scalar_select %p31, %s32, %s33
      %p37 = pneg %p31
      %p38 = scmp.eq.s32.totalorder %s10, 2
      %p39 = por %p37, %p38
      %p40 = scmp.ne.s32.totalorder %s32, %s35
      %p41 = scmp.eq.s32.totalorder %s10, 0
      %p42 = por %p40, %p41
      %p43 = scmp.ne.s32.totalorder %s32, %s35
      %p44 = scmp.eq.s32.totalorder %s15, 2
      %p45 = por %p43, %p44
      %p46 = scmp.ne.s32.totalorder %s35, %s36
      %p47 = scmp.eq.s32.totalorder %s15, 0
      %p48 = por %p46, %p47
      %p49 = scmp.ne.s32.totalorder %s35, %s36
      %p50 = scmp.eq.s32.totalorder %s16, 2
      %p51 = por %p49, %p50
      %p53 = scmp.ne.s32.totalorder %s36, %s52
      %p54 = scmp.eq.s32.totalorder %s16, 0
      %p55 = por %p53, %p54
      %s57 = sadd.s32 %s56, 1
      %p60 = scmp.eq.s32.totalorder %s10, 2
      %p61 = scmp.ne.s32.totalorder %s56, %s58
      %p62 = scmp.eq.s32.totalorder %s10, 0
      %p63 = por %p61, %p62
      %p64 = scmp.ne.s32.totalorder %s56, %s58
      %p65 = scmp.eq.s32.totalorder %s15, 2
      %p66 = por %p64, %p65
      %p67 = scmp.ne.s32.totalorder %s58, %s59
      %p68 = scmp.eq.s32.totalorder %s15, 0
      %p69 = por %p67, %p68
      %p70 = scmp.ne.s32.totalorder %s58, %s59
      %p71 = scmp.eq.s32.totalorder %s16, 2
      %p72 = por %p70, %p71
      %p74 = scmp.ne.s32.totalorder %s59, %s73
      %p75 = scmp.eq.s32.totalorder %s16, 0
      %p76 = por %p74, %p75
      %s78 = sadd.s32 %s77, 1
      %p81 = scmp.eq.s32.totalorder %s10, 2
      %p82 = scmp.ne.s32.totalorder %s77, %s79
      %p83 = scmp.eq.s32.totalorder %s10, 0
      %p84 = por %p82, %p83
      %p85 = scmp.ne.s32.totalorder %s77, %s79
      %p86 = scmp.eq.s32.totalorder %s15, 2
      %p87 = por %p85, %p86
      %p88 = scmp.ne.s32.totalorder %s79, %s80
      %p89 = scmp.eq.s32.totalorder %s15, 0
      %p90 = por %p88, %p89
      %p91 = scmp.ne.s32.totalorder %s79, %s80
      %p92 = scmp.eq.s32.totalorder %s16, 2
      %p93 = por %p91, %p92
      %p95 = scmp.ne.s32.totalorder %s80, %s94
      %p96 = scmp.eq.s32.totalorder %s16, 0
      %p97 = por %p95, %p96
      %s98 = ssub.s32 %s18, %s25
      %p99 = scmp.eq.s32.totalorder %s98, 0
      %s101 = sadd.s32 %s100, 1
      %s102 = scalar_select %p99, %s100, %s101
      %p105 = pneg %p99
      %p106 = scmp.eq.s32.totalorder %s10, 2
      %p107 = por %p105, %p106
      %p108 = scmp.ne.s32.totalorder %s100, %s103
      %p109 = scmp.eq.s32.totalorder %s10, 0
      %p110 = por %p108, %p109
      %p111 = scmp.ne.s32.totalorder %s100, %s103
      %p112 = scmp.eq.s32.totalorder %s15, 2
      %p113 = por %p111, %p112
      %p114 = scmp.ne.s32.totalorder %s103, %s104
      %p115 = scmp.eq.s32.totalorder %s15, 0
      %p116 = por %p114, %p115
      %p117 = scmp.ne.s32.totalorder %s103, %s104
      %p118 = scmp.eq.s32.totalorder %s16, 2
      %p119 = por %p117, %p118
      %p121 = scmp.ne.s32.totalorder %s104, %s120
      %p122 = scmp.eq.s32.totalorder %s16, 0
      %p123 = por %p121, %p122
      %s124 = ssub.s32 %s17, %s29
      %s125 = ssub.s32 %s18, %s25
      %s126 = sor.u32 %s124, %s125
      %p127 = scmp.eq.s32.totalorder %s126, 0
      %s129 = sadd.s32 %s128, 1
      %s130 = scalar_select %p127, %s128, %s129
      %p133 = pneg %p127
      %p134 = scmp.eq.s32.totalorder %s10, 2
      %p135 = por %p133, %p134
      %p136 = scmp.ne.s32.totalorder %s128, %s131
      %p137 = scmp.eq.s32.totalorder %s10, 0
      %p138 = por %p136, %p137
      %p139 = scmp.ne.s32.totalorder %s128, %s131
      %p140 = scmp.eq.s32.totalorder %s15, 2
      %p141 = por %p139, %p140
      %p142 = scmp.ne.s32.totalorder %s131, %s132
      %p143 = scmp.eq.s32.totalorder %s15, 0
      %p144 = por %p142, %p143
      %p145 = scmp.ne.s32.totalorder %s131, %s132
      %p146 = scmp.eq.s32.totalorder %s16, 2
      %p147 = por %p145, %p146
      %p149 = scmp.ne.s32.totalorder %s132, %s148
      %p150 = scmp.eq.s32.totalorder %s16, 0
      %p151 = por %p149, %p150
      %p152 = scmp.le.s32.totalorder 1, %s10
      %p153 = scmp.lt.s32.totalorder %s10, 4
      %p154 = pnand %p152, %p153
      %p155 = pneg %p154
      // Predicated region
      $region9: #{my_model_forward.13} parent=5 // pred_check
        _
      $region10: #{my_model_forward.13} parent=5 // pred_check_branch
        %157 = sbr.rel (%p154) target = $region12
      $region11: #{my_model_forward.13} parent=5 // pred_region
        %s158 = ssub.s32 %s10, 1
        // Predicated region
        $region13: #{my_model_forward.13} parent=11 // pred_check
          %p159 = pneg %p48
        $region14: #{my_model_forward.13} parent=11 // pred_check_branch
          %161 = sbr.rel (%p159) target = $region16
        $region15: #{my_model_forward.13} parent=11 // pred_region
          %s162 = smul.u32 2, %s19
          %p163 = scmp.lt.s32.totalorder %s162, 1
          %s164 = scalar_select %p163, %s162, 1
          %s165 = smul.addr %s164, 4
          %s166 = scalar_lea.vmem %s0, %s165
          %s167 = smul.u32 2, %s19
        $region16: #{my_model_forward.13} parent=11 // pred_fallthru
          _
        // Predicated region
        $region17: #{my_model_forward.13} parent=11 // pred_check
          %p168 = pneg %p69
        $region18: #{my_model_forward.13} parent=11 // pred_check_branch
          %170 = sbr.rel (%p168) target = $region20
        $region19: #{my_model_forward.13} parent=11 // pred_region
          _
        $region20: #{my_model_forward.13} parent=11 // pred_fallthru
          _
        // Predicated region
        $region21: #{my_model_forward.13} parent=11 // pred_check
          %p171 = pneg %p90
        $region22: #{my_model_forward.13} parent=11 // pred_check_branch
          %173 = sbr.rel (%p171) target = $region24
        $region23: #{my_model_forward.13} parent=11 // pred_region
          _
        $region24: #{my_model_forward.13} parent=11 // pred_fallthru
          _
      $region12: #{my_model_forward.13} parent=5 // pred_fallthru
        _
      %p174 = scmp.lt.s32.totalorder %s10, 3
      // Predicated region
      $region25: #{my_model_forward.13} parent=5 // pred_check
        %p175 = pneg %p174
      $region26: #{my_model_forward.13} parent=5 // pred_check_branch
        %177 = sbr.rel (%p175) target = $region28
      $region27: #{my_model_forward.13} parent=5 // pred_region
        // Predicated region
        $region29: #{my_model_forward.13} parent=27 // pred_check
          %p178 = pneg %p110
        $region30: #{my_model_forward.13} parent=27 // pred_check_branch
          %180 = sbr.rel (%p178) target = $region32
        $region31: #{my_model_forward.13} parent=27 // pred_region
          %s181 = sand.u32 %s100, 1
          %s182 = sand.u32 %s100, 1
          %s183 = smul.addr %s182, 16
          %s184 = scalar_lea.vmem [#allocation2], %s183
          %s185 = smul.addr %s18, 4
          %s186 = scalar_lea.vmem %s3, %s185
          // Predicated region
          $region33: #{my_model_forward.13} parent=31 // pred_check
            _
          $region34: #{my_model_forward.13} parent=31 // pred_check_branch
            %188 = sbr.rel (0) target = $region36
          $region35: #{my_model_forward.13} parent=31 // pred_region
            // Predicated region
            $region37: #{my_model_forward.13} parent=35 // pred_check
              _
            $region38: #{my_model_forward.13} parent=35 // pred_check_branch
              %190 = sbr.rel target = $region40
            $region39: #{my_model_forward.13} parent=35 // pred_region
              // Predicated region
              $region52: #{my_model_forward.13} parent=39 // pred_check
                _
              $region53: #{my_model_forward.13} parent=39 // pred_check_branch
                %212 = sbr.rel (0) target = $region55
              $region54: #{my_model_forward.13} parent=39 // pred_region
                loop: start=0, step=1, limit=1
                $region56: #{my_model_forward.13} parent=54 // loop_pre_header
                  _
                $region57: #{my_model_forward.13} parent=54 // loop_header
                  %s214 = sphi 0, %s218
                  %p215 = scmp.ge.s32.totalorder %s214, 1
                  %s219 = sphi %s186, %s186
                  %s220 = sphi %s184, %s184
                $region58: #{my_model_forward.13} parent=54 // loop_header_branch
                  %217 = sbr.rel (%p215) target = $region62
                $region59: #{my_model_forward.13} parent=54 // loop_body
                  _
                $region60: #{my_model_forward.13} parent=54 // loop_footer
                  %s218 = sadd.s32 1, %s214
                $region61: #{my_model_forward.13} parent=54 // loop_footer_branch
                  %213 = sbr.rel target = $region57
                $region62: #{my_model_forward.13} parent=54 // loop_exit
                  _
                %s222 = ssub.s32 16, 1
                loop: start=0, step=1, limit=1
                $region63: #{my_model_forward.13} parent=54 // loop_pre_header
                  _
                $region64: #{my_model_forward.13} parent=54 // loop_header
                  %s224 = sphi 0, %s228
                  %p225 = scmp.ge.s32.totalorder %s224, 1
                  %s229 = sphi %s186, %s186
                  %s230 = sphi %s184, %s184
                $region65: #{my_model_forward.13} parent=54 // loop_header_branch
                  %227 = sbr.rel (%p225) target = $region69
                $region66: #{my_model_forward.13} parent=54 // loop_body
                  %v231 = vld [vmem:[%s229] sm:%s222]
                  %232 = vst [vmem:[%s230] sm:%s222] %v231
                  %v233 = vld [vmem:[%s229 + $0xc] sm:%s222]
                  %234 = vst [vmem:[%s230 + $0x4] sm:%s222] %v233
                  %v235 = vld [vmem:[%s229 + $0x18] sm:%s222]
                  %236 = vst [vmem:[%s230 + $0x8] sm:%s222] %v235
                  %v237 = vld [vmem:[%s229 + $0x24] sm:%s222]
                  %238 = vst [vmem:[%s230 + $0xc] sm:%s222] %v237
                $region67: #{my_model_forward.13} parent=54 // loop_footer
                  %s228 = sadd.s32 1, %s224
                $region68: #{my_model_forward.13} parent=54 // loop_footer_branch
                  %223 = sbr.rel target = $region64
                $region69: #{my_model_forward.13} parent=54 // loop_exit
                  _
              $region55: #{my_model_forward.13} parent=39 // pred_fallthru
                _
            $region40: #{my_model_forward.13} parent=35 // pred_fallthru
              _
            // Predicated region
            $region41: #{my_model_forward.13} parent=35 // pred_check
              _
            $region42: #{my_model_forward.13} parent=35 // pred_check_branch
              %192 = sbr.rel (0) target = $region44
            $region43: #{my_model_forward.13} parent=35 // pred_region
              %s194 = ssub.s32 16, 1
              loop: start=0, step=1, limit=1
              $region45: #{my_model_forward.13} parent=43 // loop_pre_header
                _
              $region46: #{my_model_forward.13} parent=43 // loop_header
                %s196 = sphi 0, %s200
                %p197 = scmp.ge.s32.totalorder %s196, 1
                %s201 = sphi %s186, %s186
                %s202 = sphi %s184, %s184
              $region47: #{my_model_forward.13} parent=43 // loop_header_branch
                %199 = sbr.rel (%p197) target = $region51
              $region48: #{my_model_forward.13} parent=43 // loop_body
                %v203 = vld [vmem:[%s201] sm:%s194]
                %204 = vst [vmem:[%s202] sm:%s194] %v203
                %v205 = vld [vmem:[%s201 + $0xc] sm:%s194]
                %206 = vst [vmem:[%s202 + $0x4] sm:%s194] %v205
                %v207 = vld [vmem:[%s201 + $0x18] sm:%s194]
                %208 = vst [vmem:[%s202 + $0x8] sm:%s194] %v207
                %v209 = vld [vmem:[%s201 + $0x24] sm:%s194]
                %210 = vst [vmem:[%s202 + $0xc] sm:%s194] %v209
              $region49: #{my_model_forward.13} parent=43 // loop_footer
                %s200 = sadd.s32 1, %s196
              $region50: #{my_model_forward.13} parent=43 // loop_footer_branch
                %195 = sbr.rel target = $region46
              $region51: #{my_model_forward.13} parent=43 // loop_exit
                _
            $region44: #{my_model_forward.13} parent=35 // pred_fallthru
              _
          $region36: #{my_model_forward.13} parent=31 // pred_fallthru
            _
          %239 = vnop
        $region32: #{my_model_forward.13} parent=27 // pred_fallthru
          _
      $region28: #{my_model_forward.13} parent=5 // pred_fallthru
        _
      %p240 = scmp.le.s32.totalorder 1, %s10
      %p241 = scmp.lt.s32.totalorder %s10, 4
      %p242 = pnand %p240, %p241
      %p243 = pneg %p242
      // Predicated region
      $region70: #{my_model_forward.13} parent=5 // pred_check
        _
      $region71: #{my_model_forward.13} parent=5 // pred_check_branch
        %245 = sbr.rel (%p242) target = $region73
      $region72: #{my_model_forward.13} parent=5 // pred_region
        %s246 = ssub.s32 %s10, 1
        %s247 = sand.u32 %s103, 1
        %s248 = sand.u32 %s103, 1
        %s249 = smul.addr %s248, 16
        %s250 = scalar_lea.vmem [#allocation2], %s249
        // Predicated region
        $region74: #{my_model_forward.13} parent=72 // pred_check
          %p251 = pneg %p116
        $region75: #{my_model_forward.13} parent=72 // pred_check_branch
          %253 = sbr.rel (%p251) target = $region77
        $region76: #{my_model_forward.13} parent=72 // pred_region
          _
        $region77: #{my_model_forward.13} parent=72 // pred_fallthru
          _
        %s254 = smul.u32 2, %s19
        %p255 = scmp.lt.s32.totalorder %s254, 1
        %s256 = scalar_select %p255, %s254, 1
        %s257 = smul.addr %s256, 4
        %s258 = scalar_lea.vmem %s0, %s257
        %p259 = pneg %p48
        %p260 = pneg %p45
        %p261 = pneg %p69
        %p262 = pneg %p66
        %p263 = pneg %p90
        %p264 = pneg %p87
        %s265 = sand.u32 %s103, 1
        %s266 = sand.u32 %s103, 1
        %s267 = smul.addr %s266, 16
        %s268 = scalar_lea.vmem [#allocation2], %s267
        %p269 = pneg %p116
        %p270 = pneg %p113
        %p271 = pneg %p144
        %p272 = pneg %p141
        %s273 = sand.u32 %s131, 1
        %s274 = sand.u32 %s131, 1
        %s275 = smul.addr %s274, 8
        %s276 = scalar_lea.vmem [#allocation3], %s275
        %s277 = smul.u32 2, %s19
        %p278 = scmp.lt.s32.totalorder %s277, 1
        %s279 = scalar_select %p278, %s277, 1
        %s280 = smul.addr %s279, 4
        %s281 = scalar_lea.vmem %s0, %s280
        %s282 = smul.u32 2, %s19
        %s283 = smul.u32 2, %s19
        %v285 = vld [vmem:[%s281] sm:$0xf]
        %v286 = vld [vmem:[%s281 + $0x4] sm:$0xf]
        %v287 = vunpack.c.l.bf16 %v285
        %v288 = vunpack.c.l.bf16 %v286
        %vm289 = vcmask 261120
        %v290 = vsel %vm289, %v287, 0.0
        %291 = vadd.xlane.f32.xlu0 %v290
        %v292 = vpop.xlane.xlu0 %291
        %v293 = vsel %vm289, %v288, 0.0
        %294 = vadd.xlane.f32.xlu0 %v293
        %v295 = vpop.xlane.xlu0 %294
        %v296 = vrcp.pop 32.0
        %v297 = vmul.f32 32.0, %v296
        %v298 = vsub.f32 1.0, %v297
        %v299 = vmul.f32 %v296, %v298
        %v300 = vadd.f32 %v296, %v299
        %vm301 = vweird.f32 %v296
        %v302 = vsel %vm301, %v296, %v300
        %v303 = vmul.f32 %v292, %v302
        %v304 = vmul.f32 %v295, %v302
        %v305 = vsub.f32 %v287, %v303
        %v306 = vsub.f32 %v288, %v304
        %v307 = vmul.f32 %v305, %v305
        %v308 = vmul.f32 %v306, %v306
        %v309 = vsel %vm289, %v307, 0.0
        %310 = vadd.xlane.f32.xlu0 %v309
        %v311 = vpop.xlane.xlu0 %310
        %v312 = vsel %vm289, %v308, 0.0
        %313 = vadd.xlane.f32.xlu0 %v312
        %v314 = vpop.xlane.xlu0 %313
        %v315 = vmul.f32 %v311, %v302
        %v316 = vmul.f32 %v314, %v302
        %v317 = vadd.f32 %v315, 1e-05
        %v318 = vadd.f32 %v316, 1e-05
        %v319 = vrsqrt.pop %v317
        %v320 = vmul.f32 %v319, %v317
        %v321 = vmul.f32 %v320, %v319
        %v322 = vmul.f32 0.5, %v321
        %v323 = vsub.f32 1.5, %v322
        %v324 = vmul.f32 %v319, %v323
        %vm325 = vweird.f32 %v317
        %vm326 = vweird.f32 %v319
        %vm327 = vmor %vm325, %vm326
        %v328 = vsel %vm327, %v319, %v324
        %v329 = vrsqrt.pop %v318
        %v330 = vmul.f32 %v329, %v318
        %v331 = vmul.f32 %v330, %v329
        %v332 = vmul.f32 0.5, %v331
        %v333 = vsub.f32 1.5, %v332
        %v334 = vmul.f32 %v329, %v333
        %vm335 = vweird.f32 %v318
        %vm336 = vweird.f32 %v329
        %vm337 = vmor %vm335, %vm336
        %v338 = vsel %vm337, %v329, %v334
        %v339 = vmul.f32 %v305, %v328
        %v340 = vmul.f32 %v306, %v338
        %v341 = vld [vmem:[%s1] sm:$0x1]
        %v343 = vperm.slane %v341, 0
        %v345 = vmul.f32 %v339, %v343
        %v346 = vmul.f32 %v340, %v343
        %v347 = vld [vmem:[%s2] sm:$0x1]
        %v349 = vperm.slane %v347, 0
        %v351 = vadd.f32 %v345, %v349
        %v352 = vadd.f32 %v346, %v349
        %v353 = vpack.c.bf16 %v352, %v351
        %v354 = vld [vmem:[%s250] sm:$0xf]
        %v355 = vld [vmem:[%s250 + $0x4] sm:$0xf]
        %v356 = vld [vmem:[%s250 + $0x8] sm:$0xf]
        %v357 = vld [vmem:[%s250 + $0xc] sm:$0xf]
        %v362 = vunpack.c.l.b16 %v354
        %v363 = vunpack.c.l.b16 %v355
        %v364 = vunpack.c.l.b16 %v356
        %v365 = vunpack.c.l.b16 %v357
        %v366 = vpack.c.b16 %v363, %v362
        %v367 = vpack.c.b16 %v365, %v364
        %v371 = vsel %vm289, %v353, 0
        %373 = vmatpush.bf16.msra.mxu0 0
        %374 = vmatpush.bf16.msra.mxu0 0
        %375 = vmatpush.bf16.msra.mxu0 0
        %376 = vmatpush.bf16.msra.mxu0 0
        %377 = vmatpush.bf16.msra.mxu0 0
        %378 = vmatpush.bf16.msra.mxu0 0
        %379 = vmatpush.bf16.msra.mxu0 %v367
        %380 = vmatpush.bf16.msra.mxu0 %v366
        %381 = vmatmul.bf16.gmra.mxu0 %v371
        %v382 = vpop.f32.mrf.mxu0
        %v383 = vadd.f32 0.0, %v382
        %v384 = vpop.f32.mrf.mxu0
        %v385 = vadd.f32 0.0, %v384
        %386 = vdwg.mxu0
        %v387 = vpack.c.bf16 %v383, %v383
        %v388 = vpack.c.bf16 %v385, %v385
        %389 = vst [vmem:[%s276] sm:$0xf] %v387
        %390 = vst [vmem:[%s276 + $0x4] sm:$0xf] %v388
        %s391 = sand.u32 %s131, 1
        %s392 = sand.u32 %s131, 1
        %s393 = smul.addr %s392, 8
        %s394 = scalar_lea.vmem [#allocation3], %s393
        // Predicated region
        $region78: #{my_model_forward.13} parent=72 // pred_check
          %p395 = pneg %p141
        $region79: #{my_model_forward.13} parent=72 // pred_check_branch
          %397 = sbr.rel (%p395) target = $region81
        $region80: #{my_model_forward.13} parent=72 // pred_region
          %s398 = smul.u32 2, %s19
          %s399 = smul.addr %s398, 3
          %s400 = sadd.s32 %s20, %s399
          %s401 = smul.addr %s400, 4
          %s402 = scalar_lea.vmem %s4, %s401
          // Predicated region
          $region82: #{my_model_forward.13} parent=80 // pred_check
            _
          $region83: #{my_model_forward.13} parent=80 // pred_check_branch
            %404 = sbr.rel (0) target = $region85
          $region84: #{my_model_forward.13} parent=80 // pred_region
            // Predicated region
            $region86: #{my_model_forward.13} parent=84 // pred_check
              _
            $region87: #{my_model_forward.13} parent=84 // pred_check_branch
              %406 = sbr.rel target = $region89
            $region88: #{my_model_forward.13} parent=84 // pred_region
              // Predicated region
              $region101: #{my_model_forward.13} parent=88 // pred_check
                _
              $region102: #{my_model_forward.13} parent=88 // pred_check_branch
                %424 = sbr.rel (0) target = $region104
              $region103: #{my_model_forward.13} parent=88 // pred_region
                loop: start=0, step=1, limit=1
                $region105: #{my_model_forward.13} parent=103 // loop_pre_header
                  _
                $region106: #{my_model_forward.13} parent=103 // loop_header
                  %s426 = sphi 0, %s430
                  %p427 = scmp.ge.s32.totalorder %s426, 1
                  %s431 = sphi %s394, %s394
                  %s432 = sphi %s402, %s402
                $region107: #{my_model_forward.13} parent=103 // loop_header_branch
                  %429 = sbr.rel (%p427) target = $region111
                $region108: #{my_model_forward.13} parent=103 // loop_body
                  _
                $region109: #{my_model_forward.13} parent=103 // loop_footer
                  %s430 = sadd.s32 1, %s426
                $region110: #{my_model_forward.13} parent=103 // loop_footer_branch
                  %425 = sbr.rel target = $region106
                $region111: #{my_model_forward.13} parent=103 // loop_exit
                  _
                %s434 = ssub.s32 16, 1
                loop: start=0, step=1, limit=1
                $region112: #{my_model_forward.13} parent=103 // loop_pre_header
                  _
                $region113: #{my_model_forward.13} parent=103 // loop_header
                  %s436 = sphi 0, %s440
                  %p437 = scmp.ge.s32.totalorder %s436, 1
                  %s441 = sphi %s394, %s394
                  %s442 = sphi %s402, %s402
                $region114: #{my_model_forward.13} parent=103 // loop_header_branch
                  %439 = sbr.rel (%p437) target = $region118
                $region115: #{my_model_forward.13} parent=103 // loop_body
                  %v443 = vld [vmem:[%s441] sm:%s434]
                  %444 = vst [vmem:[%s442] sm:%s434] %v443
                  %v445 = vld [vmem:[%s441 + $0x4] sm:%s434]
                  %446 = vst [vmem:[%s442 + $0xc] sm:%s434] %v445
                $region116: #{my_model_forward.13} parent=103 // loop_footer
                  %s440 = sadd.s32 1, %s436
                $region117: #{my_model_forward.13} parent=103 // loop_footer_branch
                  %435 = sbr.rel target = $region113
                $region118: #{my_model_forward.13} parent=103 // loop_exit
                  _
              $region104: #{my_model_forward.13} parent=88 // pred_fallthru
                _
            $region89: #{my_model_forward.13} parent=84 // pred_fallthru
              _
            // Predicated region
            $region90: #{my_model_forward.13} parent=84 // pred_check
              _
            $region91: #{my_model_forward.13} parent=84 // pred_check_branch
              %408 = sbr.rel (0) target = $region93
            $region92: #{my_model_forward.13} parent=84 // pred_region
              %s410 = ssub.s32 16, 1
              loop: start=0, step=1, limit=1
              $region94: #{my_model_forward.13} parent=92 // loop_pre_header
                _
              $region95: #{my_model_forward.13} parent=92 // loop_header
                %s412 = sphi 0, %s416
                %p413 = scmp.ge.s32.totalorder %s412, 1
                %s417 = sphi %s394, %s394
                %s418 = sphi %s402, %s402
              $region96: #{my_model_forward.13} parent=92 // loop_header_branch
                %415 = sbr.rel (%p413) target = $region100
              $region97: #{my_model_forward.13} parent=92 // loop_body
                %v419 = vld [vmem:[%s417] sm:%s410]
                %420 = vst [vmem:[%s418] sm:%s410] %v419
                %v421 = vld [vmem:[%s417 + $0x4] sm:%s410]
                %422 = vst [vmem:[%s418 + $0xc] sm:%s410] %v421
              $region98: #{my_model_forward.13} parent=92 // loop_footer
                %s416 = sadd.s32 1, %s412
              $region99: #{my_model_forward.13} parent=92 // loop_footer_branch
                %411 = sbr.rel target = $region95
              $region100: #{my_model_forward.13} parent=92 // loop_exit
                _
            $region93: #{my_model_forward.13} parent=84 // pred_fallthru
              _
          $region85: #{my_model_forward.13} parent=80 // pred_fallthru
            _
          %447 = vnop
        $region81: #{my_model_forward.13} parent=72 // pred_fallthru
          _
      $region73: #{my_model_forward.13} parent=5 // pred_fallthru
        _
      %p448 = scmp.le.s32.totalorder 2, %s10
      // Predicated region
      $region119: #{my_model_forward.13} parent=5 // pred_check
        %p449 = pneg %p448
      $region120: #{my_model_forward.13} parent=5 // pred_check_branch
        %451 = sbr.rel (%p449) target = $region122
      $region121: #{my_model_forward.13} parent=5 // pred_region
        %s452 = ssub.s32 %s10, 2
        // Predicated region
        $region123: #{my_model_forward.13} parent=121 // pred_check
          %p453 = pneg %p147
        $region124: #{my_model_forward.13} parent=121 // pred_check_branch
          %455 = sbr.rel (%p453) target = $region126
        $region125: #{my_model_forward.13} parent=121 // pred_region
          %s456 = sand.u32 %s132, 1
          %s457 = sand.u32 %s132, 1
          %s458 = smul.addr %s457, 8
          %s459 = scalar_lea.vmem [#allocation3], %s458
        $region126: #{my_model_forward.13} parent=121 // pred_fallthru
          _
      $region122: #{my_model_forward.13} parent=5 // pred_fallthru
        _
    $region6: #{my_model_forward.13} parent=1 // loop_footer
      %s14 = sadd.s32 1, %s10
    $region7: #{my_model_forward.13} parent=1 // loop_footer_branch
      %9 = sbr.rel target = $region3
    $region8: #{my_model_forward.13} parent=1 // loop_exit
      _

// kernel: my_model_forward.16
$region0: #{my_model_forward.16}
  #allocation0 [shape = 'u32[]', space=smem, size = 0x4, offset = 0x4, fixed_abs, tag = 'smem constant byte address 0x4 - core index']
  #allocation1 [shape = 'u32[72,128]{1,0:T(1,128)}', space=vmem, size = 0x9000, scoped, tag = 'internal scratch']
  #allocation2 [shape = 'bf16[16,32]{1,0:T(8,128)(2,1)}', space=vmem, size = 0x1000, scoped, tag = 'scratch operand']
  #allocation3 [shape = 'f32[16,32]{1,0:T(8,128)}', space=vmem, size = 0x2000, scoped, tag = 'scratch operand']
  %s0 = inlined_call_operand.vmem [shape: bf16[16,32], index: 0, kind: input, shape index: {}]
  %s1 = inlined_call_operand.vmem [shape: f32[1,32], index: 1, kind: input, shape index: {}]
  %s2 = inlined_call_operand.vmem [shape: f32[1,32], index: 2, kind: input, shape index: {}]
  %s3 = inlined_call_operand.vmem [shape: bf16[32,128], index: 3, kind: input, shape index: {}]
  %s4 = inlined_call_operand.vmem [shape: bf16[128,32], index: 4, kind: input, shape index: {}]
  %s5 = inlined_call_operand.vmem [shape: bf16[16,32], index: 5, kind: output, shape index: {}]
  %s6 = sld [smem:[#allocation0]]
  $region38: #{my_model_forward.16} parent=0
    _
  %s8 = ssub.s32 1, %s6
  %s9 = scalar_select 0, %s8, %s6
  // Predicated region
  $region2: #{my_model_forward.16} parent=0 // pred_check
    _
  $region3: #{my_model_forward.16} parent=0 // pred_check_branch
    %11 = sbr.rel (0) target = $region5
  $region4: #{my_model_forward.16} parent=0 // pred_region
    _
  $region5: #{my_model_forward.16} parent=0 // pred_fallthru
    _
  // Predicated region
  $region6: #{my_model_forward.16} parent=0 // pred_check
    _
  $region7: #{my_model_forward.16} parent=0 // pred_check_branch
    %13 = sbr.rel (0) target = $region9
  $region8: #{my_model_forward.16} parent=0 // pred_region
    _
  $region9: #{my_model_forward.16} parent=0 // pred_fallthru
    _
  // Predicated region
  $region10: #{my_model_forward.16} parent=0 // pred_check
    _
  $region11: #{my_model_forward.16} parent=0 // pred_check_branch
    %15 = sbr.rel (0) target = $region13
  $region12: #{my_model_forward.16} parent=0 // pred_region
    _
  $region13: #{my_model_forward.16} parent=0 // pred_fallthru
    _
  // Predicated region
  $region14: #{my_model_forward.16} parent=0 // pred_check
    _
  $region15: #{my_model_forward.16} parent=0 // pred_check_branch
    %17 = sbr.rel (0) target = $region17
  $region16: #{my_model_forward.16} parent=0 // pred_region
    _
  $region17: #{my_model_forward.16} parent=0 // pred_fallthru
    _
  // Predicated region
  $region18: #{my_model_forward.16} parent=0 // pred_check
    _
  $region19: #{my_model_forward.16} parent=0 // pred_check_branch
    %19 = sbr.rel (0) target = $region21
  $region20: #{my_model_forward.16} parent=0 // pred_region
    _
  $region21: #{my_model_forward.16} parent=0 // pred_fallthru
    _
  %p21 = scmp.eq.s32.totalorder 0, 0
  // Predicated region
  $region22: #{my_model_forward.16} parent=0 // pred_check
    %p22 = pneg %p21
  $region23: #{my_model_forward.16} parent=0 // pred_check_branch
    %24 = sbr.rel (%p22) target = $region25
  $region24: #{my_model_forward.16} parent=0 // pred_region
    %v25 = vld [vmem:[%s0] sm:$0xf]
    %v26 = vld [vmem:[%s0 + $0x4] sm:$0xf]
    %v27 = vunpack.c.l.bf16 %v25
    %v28 = vunpack.c.l.bf16 %v26
    %vm29 = vcmask 261120
    %v30 = vsel %vm29, %v27, 0.0
    %31 = vadd.xlane.f32.xlu0 %v30
    %v32 = vpop.xlane.xlu0 %31
    %v33 = vsel %vm29, %v28, 0.0
    %34 = vadd.xlane.f32.xlu0 %v33
    %v35 = vpop.xlane.xlu0 %34
    %v36 = vrcp.pop 32.0
    %v37 = vmul.f32 32.0, %v36
    %v38 = vsub.f32 1.0, %v37
    %v39 = vmul.f32 %v36, %v38
    %v40 = vadd.f32 %v36, %v39
    %vm41 = vweird.f32 %v36
    %v42 = vsel %vm41, %v36, %v40
    %v43 = vmul.f32 %v32, %v42
    %v44 = vmul.f32 %v35, %v42
    %v45 = vsub.f32 %v27, %v43
    %v46 = vsub.f32 %v28, %v44
    %v47 = vmul.f32 %v45, %v45
    %v48 = vmul.f32 %v46, %v46
    %v49 = vsel %vm29, %v47, 0.0
    %50 = vadd.xlane.f32.xlu0 %v49
    %v51 = vpop.xlane.xlu0 %50
    %v52 = vsel %vm29, %v48, 0.0
    %53 = vadd.xlane.f32.xlu0 %v52
    %v54 = vpop.xlane.xlu0 %53
    %v55 = vmul.f32 %v51, %v42
    %v56 = vmul.f32 %v54, %v42
    %v57 = vadd.f32 %v55, 1e-05
    %v58 = vadd.f32 %v56, 1e-05
    %v59 = vrsqrt.pop %v57
    %v60 = vmul.f32 %v59, %v57
    %v61 = vmul.f32 %v60, %v59
    %v62 = vmul.f32 0.5, %v61
    %v63 = vsub.f32 1.5, %v62
    %v64 = vmul.f32 %v59, %v63
    %vm65 = vweird.f32 %v57
    %vm66 = vweird.f32 %v59
    %vm67 = vmor %vm65, %vm66
    %v68 = vsel %vm67, %v59, %v64
    %v69 = vrsqrt.pop %v58
    %v70 = vmul.f32 %v69, %v58
    %v71 = vmul.f32 %v70, %v69
    %v72 = vmul.f32 0.5, %v71
    %v73 = vsub.f32 1.5, %v72
    %v74 = vmul.f32 %v69, %v73
    %vm75 = vweird.f32 %v58
    %vm76 = vweird.f32 %v69
    %vm77 = vmor %vm75, %vm76
    %v78 = vsel %vm77, %v69, %v74
    %v79 = vmul.f32 %v45, %v68
    %v80 = vmul.f32 %v46, %v78
    %v81 = vld [vmem:[%s1] sm:$0x1]
    %v83 = vperm.slane %v81, 0
    %v85 = vmul.f32 %v79, %v83
    %v86 = vmul.f32 %v80, %v83
    %v87 = vld [vmem:[%s2] sm:$0x1]
    %v89 = vperm.slane %v87, 0
    %v91 = vadd.f32 %v85, %v89
    %v92 = vadd.f32 %v86, %v89
    %v93 = vpack.c.bf16 %v91, %v91
    %v94 = vpack.c.bf16 %v92, %v92
    %vm95 = vcmask 257024
    %96 = vst.msk [vmem:[#allocation2] sm:$0xf] %vm95, %v93
    %97 = vst.msk [vmem:[#allocation2 + $0x4] sm:$0xf] %vm95, %v94
    %98 = vst.msk [vmem:[#allocation3] sm:$0xff] %vm29, 0.0
    %99 = vst.msk [vmem:[#allocation3 + $0x8] sm:$0xff] %vm29, 0.0
  $region25: #{my_model_forward.16} parent=0 // pred_fallthru
    _
  %v100 = vld [vmem:[#allocation2] sm:$0xf]
  %v101 = vld [vmem:[#allocation2 + $0x4] sm:$0xf]
  %v102 = vld [vmem:[%s3] sm:$0xf]
  %v103 = vld [vmem:[%s3 + $0x4] sm:$0xf]
  %v104 = vld [vmem:[%s3 + $0x8] sm:$0xf]
  %v105 = vld [vmem:[%s3 + $0xc] sm:$0xf]
  %v108 = vunpack.c.l.b16 %v100
  %v109 = vunpack.c.l.b16 %v101
  %v110 = vpack.c.b16 %v109, %v108
  %v115 = vunpack.c.l.b16 %v102
  %v116 = vunpack.c.l.b16 %v103
  %v117 = vunpack.c.l.b16 %v104
  %v118 = vunpack.c.l.b16 %v105
  %v119 = vpack.c.b16 %v116, %v115
  %v120 = vpack.c.b16 %v118, %v117
  %vm123 = vcmask 261120
  %v125 = vsel %vm123, %v110, 0
  %127 = vmatpush.bf16.msra.mxu0 0
  %128 = vmatpush.bf16.msra.mxu0 0
  %129 = vmatpush.bf16.msra.mxu0 0
  %130 = vmatpush.bf16.msra.mxu0 0
  %131 = vmatpush.bf16.msra.mxu0 0
  %132 = vmatpush.bf16.msra.mxu0 0
  %133 = vmatpush.bf16.msra.mxu0 %v120
  %134 = vmatpush.bf16.msra.mxu0 %v119
  %135 = vmatmul.bf16.gmra.mxu0 %v125
  %v136 = vpop.f32.mrf.mxu0
  %v137 = vadd.f32 0.0, %v136
  %v138 = vpop.f32.mrf.mxu0
  %v139 = vadd.f32 0.0, %v138
  %140 = vdwg.mxu0
  %v141 = vmul.f32 %v137, 0.5
  %v142 = vmul.f32 %v139, 0.5
  %v143 = vmul.f32 %v137, 0.044715
  %v144 = vmul.f32 %v139, 0.044715
  %v145 = vmul.f32 %v143, %v137
  %v146 = vmul.f32 %v144, %v139
  %v147 = vmul.f32 %v145, %v137
  %v148 = vmul.f32 %v146, %v139
  %v149 = vadd.f32 %v137, %v147
  %v150 = vadd.f32 %v139, %v148
  %v151 = vmul.f32 %v149, 0.7978846
  %v152 = vmul.f32 %v150, 0.7978846
  %v153 = vtanh.pop %v151
  %v154 = vtanh.pop %v152
  %v155 = vadd.f32 %v153, 1.0
  %v156 = vadd.f32 %v154, 1.0
  %v157 = vmul.f32 %v141, %v155
  %v158 = vmul.f32 %v142, %v156
  %v159 = vld [vmem:[#allocation3] sm:$0xff]
  %v160 = vld [vmem:[#allocation3 + $0x8] sm:$0xff]
  %v161 = vpack.c.bf16 %v158, %v157
  %v162 = vld [vmem:[%s4] sm:$0xf]
  %v163 = vld [vmem:[%s4 + $0x4] sm:$0xf]
  %v164 = vld [vmem:[%s4 + $0x8] sm:$0xf]
  %v165 = vld [vmem:[%s4 + $0xc] sm:$0xf]
  %v166 = vld [vmem:[%s4 + $0x10] sm:$0xf]
  %v167 = vld [vmem:[%s4 + $0x14] sm:$0xf]
  %v168 = vld [vmem:[%s4 + $0x18] sm:$0xf]
  %v169 = vld [vmem:[%s4 + $0x1c] sm:$0xf]
  %v170 = vld [vmem:[%s4 + $0x20] sm:$0xf]
  %v171 = vld [vmem:[%s4 + $0x24] sm:$0xf]
  %v172 = vld [vmem:[%s4 + $0x28] sm:$0xf]
  %v173 = vld [vmem:[%s4 + $0x2c] sm:$0xf]
  %v174 = vld [vmem:[%s4 + $0x30] sm:$0xf]
  %v175 = vld [vmem:[%s4 + $0x34] sm:$0xf]
  %v176 = vld [vmem:[%s4 + $0x38] sm:$0xf]
  %v177 = vld [vmem:[%s4 + $0x3c] sm:$0xf]
  %v194 = vunpack.c.l.b16 %v162
  %v195 = vunpack.c.l.b16 %v163
  %v196 = vunpack.c.l.b16 %v164
  %v197 = vunpack.c.l.b16 %v165
  %v198 = vunpack.c.l.b16 %v166
  %v199 = vunpack.c.l.b16 %v167
  %v200 = vunpack.c.l.b16 %v168
  %v201 = vunpack.c.l.b16 %v169
  %v202 = vunpack.c.l.b16 %v170
  %v203 = vunpack.c.l.b16 %v171
  %v204 = vunpack.c.l.b16 %v172
  %v205 = vunpack.c.l.b16 %v173
  %v206 = vunpack.c.l.b16 %v174
  %v207 = vunpack.c.l.b16 %v175
  %v208 = vunpack.c.l.b16 %v176
  %v209 = vunpack.c.l.b16 %v177
  %v210 = vpack.c.b16 %v195, %v194
  %v211 = vpack.c.b16 %v197, %v196
  %v212 = vpack.c.b16 %v199, %v198
  %v213 = vpack.c.b16 %v201, %v200
  %v214 = vpack.c.b16 %v203, %v202
  %v215 = vpack.c.b16 %v205, %v204
  %v216 = vpack.c.b16 %v207, %v206
  %v217 = vpack.c.b16 %v209, %v208
  %226 = vmatpush.bf16.msra.mxu0 %v217
  %227 = vmatpush.bf16.msra.mxu0 %v216
  %228 = vmatpush.bf16.msra.mxu0 %v215
  %229 = vmatpush.bf16.msra.mxu0 %v214
  %230 = vmatpush.bf16.msra.mxu0 %v213
  %231 = vmatpush.bf16.msra.mxu0 %v212
  %232 = vmatpush.bf16.msra.mxu0 %v211
  %233 = vmatpush.bf16.msra.mxu0 %v210
  %234 = vmatmul.bf16.gmra.mxu0 %v161
  %v235 = vpop.f32.mrf.mxu0
  %v236 = vadd.f32 0.0, %v235
  %v237 = vpop.f32.mrf.mxu0
  %v238 = vadd.f32 0.0, %v237
  %239 = vdwg.mxu0
  %v240 = vadd.f32 %v159, %v236
  %v241 = vadd.f32 %v160, %v238
  %242 = vst.msk [vmem:[#allocation3] sm:$0xff] %vm123, %v240
  %243 = vst.msk [vmem:[#allocation3 + $0x8] sm:$0xff] %vm123, %v241
  // Predicated region
  $region26: #{my_model_forward.16} parent=0 // pred_check
    %p244 = pneg %p21
  $region27: #{my_model_forward.16} parent=0 // pred_check_branch
    %246 = sbr.rel (%p244) target = $region29
  $region28: #{my_model_forward.16} parent=0 // pred_region
    %v247 = vld [vmem:[#allocation3] sm:$0xff]
    %v248 = vld [vmem:[#allocation3 + $0x8] sm:$0xff]
    %v249 = vpack.c.bf16 %v247, %v247
    %v250 = vpack.c.bf16 %v248, %v248
    %vm251 = vcmask 257024
    %252 = vst.msk [vmem:[%s5] sm:$0xf] %vm251, %v249
    %253 = vst.msk [vmem:[%s5 + $0x4] sm:$0xf] %vm251, %v250
  $region29: #{my_model_forward.16} parent=0 // pred_fallthru
    _
  // Predicated region
  $region30: #{my_model_forward.16} parent=0 // pred_check
    _
  $region31: #{my_model_forward.16} parent=0 // pred_check_branch
    %255 = sbr.rel (0) target = $region33
  $region32: #{my_model_forward.16} parent=0 // pred_region
    _
  $region33: #{my_model_forward.16} parent=0 // pred_fallthru
    _
  // Predicated region
  $region34: #{my_model_forward.16} parent=0 // pred_check
    _
  $region35: #{my_model_forward.16} parent=0 // pred_check_branch
    %257 = sbr.rel (0) target = $region37
  $region36: #{my_model_forward.16} parent=0 // pred_region
    _
  $region37: #{my_model_forward.16} parent=0 // pred_fallthru
    _

// kernel: my_model_forward.14
$region0: #{my_model_forward.14}
  #allocation0 [shape = 'u32[]', space=smem, size = 0x4, offset = 0x4, fixed_abs, tag = 'smem constant byte address 0x4 - core index']
  #allocation1 [shape = 'u32[72,128]{1,0:T(1,128)}', space=vmem, size = 0x9000, scoped, tag = 'internal scratch']
  #allocation2 [shape = 'f32[8,8,1]{2,1,0:T(8,128)}', space=vmem, size = 0x8000, scoped, tag = 'scratch operand']
  #allocation3 [shape = 'f32[8,8,1]{2,1,0:T(8,128)}', space=vmem, size = 0x8000, scoped, tag = 'scratch operand']
  #allocation4 [shape = 'f32[8,8,32]{2,1,0:T(8,128)}', space=vmem, size = 0x8000, scoped, tag = 'scratch operand']
  %s0 = inlined_call_operand.vmem [shape: bf16[8,8,32], index: 0, kind: input, shape index: {}]
  %s1 = inlined_call_operand.vmem [shape: bf16[8,8,32], index: 1, kind: input, shape index: {}]
  %s2 = inlined_call_operand.vmem [shape: bf16[8,8,32], index: 2, kind: input, shape index: {}]
  %s3 = inlined_call_operand.vmem [shape: bf16[8,8,32], index: 3, kind: output, shape index: {}]
  %s4 = sld [smem:[#allocation0]]
  $region30: #{my_model_forward.14} parent=0
    _
  %s6 = ssub.s32 1, %s4
  %s7 = scalar_select 0, %s6, %s4
  // Predicated region
  $region2: #{my_model_forward.14} parent=0 // pred_check
    _
  $region3: #{my_model_forward.14} parent=0 // pred_check_branch
    %9 = sbr.rel (0) target = $region5
  $region4: #{my_model_forward.14} parent=0 // pred_region
    _
  $region5: #{my_model_forward.14} parent=0 // pred_fallthru
    _
  // Predicated region
  $region6: #{my_model_forward.14} parent=0 // pred_check
    _
  $region7: #{my_model_forward.14} parent=0 // pred_check_branch
    %11 = sbr.rel (0) target = $region9
  $region8: #{my_model_forward.14} parent=0 // pred_region
    _
  $region9: #{my_model_forward.14} parent=0 // pred_fallthru
    _
  // Predicated region
  $region10: #{my_model_forward.14} parent=0 // pred_check
    _
  $region11: #{my_model_forward.14} parent=0 // pred_check_branch
    %13 = sbr.rel (0) target = $region13
  $region12: #{my_model_forward.14} parent=0 // pred_region
    _
  $region13: #{my_model_forward.14} parent=0 // pred_fallthru
    _
  %p15 = scmp.eq.s32.totalorder 0, 0
  // Predicated region
  $region14: #{my_model_forward.14} parent=0 // pred_check
    %p16 = pneg %p15
  $region15: #{my_model_forward.14} parent=0 // pred_check_branch
    %18 = sbr.rel (%p16) target = $region17
  $region16: #{my_model_forward.14} parent=0 // pred_region
    %vm19 = vcmask 7168
    %20 = vst.msk [vmem:[#allocation2] sm:$0xff] %vm19, -1e+30
    %21 = vst.msk [vmem:[#allocation2 + $0x8] sm:$0xff] %vm19, -1e+30
    %22 = vst.msk [vmem:[#allocation2 + $0x10] sm:$0xff] %vm19, -1e+30
    %23 = vst.msk [vmem:[#allocation2 + $0x18] sm:$0xff] %vm19, -1e+30
    %24 = vst.msk [vmem:[#allocation2 + $0x20] sm:$0xff] %vm19, -1e+30
    %25 = vst.msk [vmem:[#allocation2 + $0x28] sm:$0xff] %vm19, -1e+30
    %26 = vst.msk [vmem:[#allocation2 + $0x30] sm:$0xff] %vm19, -1e+30
    %27 = vst.msk [vmem:[#allocation2 + $0x38] sm:$0xff] %vm19, -1e+30
    %28 = vst.msk [vmem:[#allocation3] sm:$0xff] %vm19, 0.0
    %29 = vst.msk [vmem:[#allocation3 + $0x8] sm:$0xff] %vm19, 0.0
    %30 = vst.msk [vmem:[#allocation3 + $0x10] sm:$0xff] %vm19, 0.0
    %31 = vst.msk [vmem:[#allocation3 + $0x18] sm:$0xff] %vm19, 0.0
    %32 = vst.msk [vmem:[#allocation3 + $0x20] sm:$0xff] %vm19, 0.0
    %33 = vst.msk [vmem:[#allocation3 + $0x28] sm:$0xff] %vm19, 0.0
    %34 = vst.msk [vmem:[#allocation3 + $0x30] sm:$0xff] %vm19, 0.0
    %35 = vst.msk [vmem:[#allocation3 + $0x38] sm:$0xff] %vm19, 0.0
    %vm36 = vcmask 261120
    %37 = vst.msk [vmem:[#allocation4] sm:$0xff] %vm36, 0.0
    %38 = vst.msk [vmem:[#allocation4 + $0x8] sm:$0xff] %vm36, 0.0
    %39 = vst.msk [vmem:[#allocation4 + $0x10] sm:$0xff] %vm36, 0.0
    %40 = vst.msk [vmem:[#allocation4 + $0x18] sm:$0xff] %vm36, 0.0
    %41 = vst.msk [vmem:[#allocation4 + $0x20] sm:$0xff] %vm36, 0.0
    %42 = vst.msk [vmem:[#allocation4 + $0x28] sm:$0xff] %vm36, 0.0
    %43 = vst.msk [vmem:[#allocation4 + $0x30] sm:$0xff] %vm36, 0.0
    %44 = vst.msk [vmem:[#allocation4 + $0x38] sm:$0xff] %vm36, 0.0
  $region17: #{my_model_forward.14} parent=0 // pred_fallthru
    _
  %v45 = vld [vmem:[%s0] sm:$0xf]
  %v46 = vld [vmem:[%s0 + $0x4] sm:$0xf]
  %v47 = vld [vmem:[%s0 + $0x8] sm:$0xf]
  %v48 = vld [vmem:[%s0 + $0xc] sm:$0xf]
  %v49 = vld [vmem:[%s0 + $0x10] sm:$0xf]
  %v50 = vld [vmem:[%s0 + $0x14] sm:$0xf]
  %v51 = vld [vmem:[%s0 + $0x18] sm:$0xf]
  %v52 = vld [vmem:[%s0 + $0x1c] sm:$0xf]
  %v53 = vld [vmem:[%s1] sm:$0xf]
  %v54 = vld [vmem:[%s1 + $0x4] sm:$0xf]
  %v55 = vld [vmem:[%s1 + $0x8] sm:$0xf]
  %v56 = vld [vmem:[%s1 + $0xc] sm:$0xf]
  %v57 = vld [vmem:[%s1 + $0x10] sm:$0xf]
  %v58 = vld [vmem:[%s1 + $0x14] sm:$0xf]
  %v59 = vld [vmem:[%s1 + $0x18] sm:$0xf]
  %v60 = vld [vmem:[%s1 + $0x1c] sm:$0xf]
  %vm61 = vcmask 261120
  %v63 = vsel %vm61, %v45, 0
  %v66 = vsel %vm61, %v53, 0
  %68 = vmatpush.bf16.xpose.msra.mxu0 0
  %69 = vmatpush.bf16.xpose.msra.mxu0 0
  %70 = vmatpush.bf16.xpose.msra.mxu0 0
  %71 = vmatpush.bf16.xpose.msra.mxu0 0
  %72 = vmatpush.bf16.xpose.msra.mxu0 0
  %73 = vmatpush.bf16.xpose.msra.mxu0 0
  %74 = vmatpush.bf16.xpose.msra.mxu0 0
  %75 = vmatpush.bf16.xpose.msra.mxu0 %v66
  %76 = vmatmul.bf16.gmra.mxu0 %v63
  %v77 = vpop.f32.mrf.mxu0
  %v78 = vadd.f32 0.0, %v77
  %v79 = vpop.f32.mrf.mxu0
  %80 = vdwg.mxu0
  %v82 = vsel %vm61, %v46, 0
  %v85 = vsel %vm61, %v54, 0
  %87 = vmatpush.bf16.xpose.msra.mxu0 0
  %88 = vmatpush.bf16.xpose.msra.mxu0 0
  %89 = vmatpush.bf16.xpose.msra.mxu0 0
  %90 = vmatpush.bf16.xpose.msra.mxu0 0
  %91 = vmatpush.bf16.xpose.msra.mxu0 0
  %92 = vmatpush.bf16.xpose.msra.mxu0 0
  %93 = vmatpush.bf16.xpose.msra.mxu0 0
  %94 = vmatpush.bf16.xpose.msra.mxu0 %v85
  %95 = vmatmul.bf16.gmra.mxu0 %v82
  %v96 = vpop.f32.mrf.mxu0
  %v97 = vadd.f32 0.0, %v96
  %v98 = vpop.f32.mrf.mxu0
  %99 = vdwg.mxu0
  %v101 = vsel %vm61, %v47, 0
  %v104 = vsel %vm61, %v55, 0
  %106 = vmatpush.bf16.xpose.msra.mxu0 0
  %107 = vmatpush.bf16.xpose.msra.mxu0 0
  %108 = vmatpush.bf16.xpose.msra.mxu0 0
  %109 = vmatpush.bf16.xpose.msra.mxu0 0
  %110 = vmatpush.bf16.xpose.msra.mxu0 0
  %111 = vmatpush.bf16.xpose.msra.mxu0 0
  %112 = vmatpush.bf16.xpose.msra.mxu0 0
  %113 = vmatpush.bf16.xpose.msra.mxu0 %v104
  %114 = vmatmul.bf16.gmra.mxu0 %v101
  %v115 = vpop.f32.mrf.mxu0
  %v116 = vadd.f32 0.0, %v115
  %v117 = vpop.f32.mrf.mxu0
  %118 = vdwg.mxu0
  %v120 = vsel %vm61, %v48, 0
  %v123 = vsel %vm61, %v56, 0
  %125 = vmatpush.bf16.xpose.msra.mxu0 0
  %126 = vmatpush.bf16.xpose.msra.mxu0 0
  %127 = vmatpush.bf16.xpose.msra.mxu0 0
  %128 = vmatpush.bf16.xpose.msra.mxu0 0
  %129 = vmatpush.bf16.xpose.msra.mxu0 0
  %130 = vmatpush.bf16.xpose.msra.mxu0 0
  %131 = vmatpush.bf16.xpose.msra.mxu0 0
  %132 = vmatpush.bf16.xpose.msra.mxu0 %v123
  %133 = vmatmul.bf16.gmra.mxu0 %v120
  %v134 = vpop.f32.mrf.mxu0
  %v135 = vadd.f32 0.0, %v134
  %v136 = vpop.f32.mrf.mxu0
  %137 = vdwg.mxu0
  %v139 = vsel %vm61, %v49, 0
  %v142 = vsel %vm61, %v57, 0
  %144 = vmatpush.bf16.xpose.msra.mxu0 0
  %145 = vmatpush.bf16.xpose.msra.mxu0 0
  %146 = vmatpush.bf16.xpose.msra.mxu0 0
  %147 = vmatpush.bf16.xpose.msra.mxu0 0
  %148 = vmatpush.bf16.xpose.msra.mxu0 0
  %149 = vmatpush.bf16.xpose.msra.mxu0 0
  %150 = vmatpush.bf16.xpose.msra.mxu0 0
  %151 = vmatpush.bf16.xpose.msra.mxu0 %v142
  %152 = vmatmul.bf16.gmra.mxu0 %v139
  %v153 = vpop.f32.mrf.mxu0
  %v154 = vadd.f32 0.0, %v153
  %v155 = vpop.f32.mrf.mxu0
  %156 = vdwg.mxu0
  %v158 = vsel %vm61, %v50, 0
  %v161 = vsel %vm61, %v58, 0
  %163 = vmatpush.bf16.xpose.msra.mxu0 0
  %164 = vmatpush.bf16.xpose.msra.mxu0 0
  %165 = vmatpush.bf16.xpose.msra.mxu0 0
  %166 = vmatpush.bf16.xpose.msra.mxu0 0
  %167 = vmatpush.bf16.xpose.msra.mxu0 0
  %168 = vmatpush.bf16.xpose.msra.mxu0 0
  %169 = vmatpush.bf16.xpose.msra.mxu0 0
  %170 = vmatpush.bf16.xpose.msra.mxu0 %v161
  %171 = vmatmul.bf16.gmra.mxu0 %v158
  %v172 = vpop.f32.mrf.mxu0
  %v173 = vadd.f32 0.0, %v172
  %v174 = vpop.f32.mrf.mxu0
  %175 = vdwg.mxu0
  %v177 = vsel %vm61, %v51, 0
  %v180 = vsel %vm61, %v59, 0
  %182 = vmatpush.bf16.xpose.msra.mxu0 0
  %183 = vmatpush.bf16.xpose.msra.mxu0 0
  %184 = vmatpush.bf16.xpose.msra.mxu0 0
  %185 = vmatpush.bf16.xpose.msra.mxu0 0
  %186 = vmatpush.bf16.xpose.msra.mxu0 0
  %187 = vmatpush.bf16.xpose.msra.mxu0 0
  %188 = vmatpush.bf16.xpose.msra.mxu0 0
  %189 = vmatpush.bf16.xpose.msra.mxu0 %v180
  %190 = vmatmul.bf16.gmra.mxu0 %v177
  %v191 = vpop.f32.mrf.mxu0
  %v192 = vadd.f32 0.0, %v191
  %v193 = vpop.f32.mrf.mxu0
  %194 = vdwg.mxu0
  %v196 = vsel %vm61, %v52, 0
  %v199 = vsel %vm61, %v60, 0
  %201 = vmatpush.bf16.xpose.msra.mxu0 0
  %202 = vmatpush.bf16.xpose.msra.mxu0 0
  %203 = vmatpush.bf16.xpose.msra.mxu0 0
  %204 = vmatpush.bf16.xpose.msra.mxu0 0
  %205 = vmatpush.bf16.xpose.msra.mxu0 0
  %206 = vmatpush.bf16.xpose.msra.mxu0 0
  %207 = vmatpush.bf16.xpose.msra.mxu0 0
  %208 = vmatpush.bf16.xpose.msra.mxu0 %v199
  %209 = vmatmul.bf16.gmra.mxu0 %v196
  %v210 = vpop.f32.mrf.mxu0
  %v211 = vadd.f32 0.0, %v210
  %v212 = vpop.f32.mrf.mxu0
  %213 = vdwg.mxu0
  %v214 = vmul.f32 %v78, 0.17677669
  %v215 = vmul.f32 %v97, 0.17677669
  %v216 = vmul.f32 %v116, 0.17677669
  %v217 = vmul.f32 %v135, 0.17677669
  %v218 = vmul.f32 %v154, 0.17677669
  %v219 = vmul.f32 %v173, 0.17677669
  %v220 = vmul.f32 %v192, 0.17677669
  %v221 = vmul.f32 %v211, 0.17677669
  %s222 = smul.u32 0, 8
  %v223 = vlaneseq
  %v224 = vshrl.u32 %v223, 7
  %v225 = vstv %s222
  %v226 = vadd.s32 %v225, %v224
  %s227 = smul.u32 0, 8
  %v228 = vlaneseq
  %v229 = vand.u32 %v228, 127
  %v230 = vstv %s227
  %v231 = vadd.s32 %v230, %v229
  %vm232 = vcmp.ge.s32.totalorder %v226, %v231
  %v233 = vsel %vm232, 0.0, -1e+30
  %v234 = vadd.f32 %v214, %v233
  %v235 = vadd.f32 %v215, %v233
  %v236 = vadd.f32 %v216, %v233
  %v237 = vadd.f32 %v217, %v233
  %v238 = vadd.f32 %v218, %v233
  %v239 = vadd.f32 %v219, %v233
  %v240 = vadd.f32 %v220, %v233
  %v241 = vadd.f32 %v221, %v233
  %v242 = vld [vmem:[#allocation2] sm:$0xff]
  %v243 = vld [vmem:[#allocation2 + $0x8] sm:$0xff]
  %v244 = vld [vmem:[#allocation2 + $0x10] sm:$0xff]
  %v245 = vld [vmem:[#allocation2 + $0x18] sm:$0xff]
  %v246 = vld [vmem:[#allocation2 + $0x20] sm:$0xff]
  %v247 = vld [vmem:[#allocation2 + $0x28] sm:$0xff]
  %v248 = vld [vmem:[#allocation2 + $0x30] sm:$0xff]
  %v249 = vld [vmem:[#allocation2 + $0x38] sm:$0xff]
  %vm250 = vcmask 64512
  %v251 = vsel %vm250, %v234, -inf
  %252 = vmax.xlane.f32.xlu0 %v251
  %v253 = vpop.xlane.xlu0 %252
  %v254 = vsel %vm250, %v235, -inf
  %255 = vmax.xlane.f32.xlu0 %v254
  %v256 = vpop.xlane.xlu0 %255
  %v257 = vsel %vm250, %v236, -inf
  %258 = vmax.xlane.f32.xlu0 %v257
  %v259 = vpop.xlane.xlu0 %258
  %v260 = vsel %vm250, %v237, -inf
  %261 = vmax.xlane.f32.xlu0 %v260
  %v262 = vpop.xlane.xlu0 %261
  %v263 = vsel %vm250, %v238, -inf
  %264 = vmax.xlane.f32.xlu0 %v263
  %v265 = vpop.xlane.xlu0 %264
  %v266 = vsel %vm250, %v239, -inf
  %267 = vmax.xlane.f32.xlu0 %v266
  %v268 = vpop.xlane.xlu0 %267
  %v269 = vsel %vm250, %v240, -inf
  %270 = vmax.xlane.f32.xlu0 %v269
  %v271 = vpop.xlane.xlu0 %270
  %v272 = vsel %vm250, %v241, -inf
  %273 = vmax.xlane.f32.xlu0 %v272
  %v274 = vpop.xlane.xlu0 %273
  %v275 = vmax.f32 %v242, %v253
  %v276 = vmax.f32 %v243, %v256
  %v277 = vmax.f32 %v244, %v259
  %v278 = vmax.f32 %v245, %v262
  %v279 = vmax.f32 %v246, %v265
  %v280 = vmax.f32 %v247, %v268
  %v281 = vmax.f32 %v248, %v271
  %v282 = vmax.f32 %v249, %v274
  %v283 = vsub.f32 %v242, %v275
  %v284 = vsub.f32 %v243, %v276
  %v285 = vsub.f32 %v244, %v277
  %v286 = vsub.f32 %v245, %v278
  %v287 = vsub.f32 %v246, %v279
  %v288 = vsub.f32 %v247, %v280
  %v289 = vsub.f32 %v248, %v281
  %v290 = vsub.f32 %v249, %v282
  %v291 = vmul.f32 %v283, 1.442695
  %v292 = vpow.pop %v291
  %v293 = vmul.f32 %v284, 1.442695
  %v294 = vpow.pop %v293
  %v295 = vmul.f32 %v285, 1.442695
  %v296 = vpow.pop %v295
  %v297 = vmul.f32 %v286, 1.442695
  %v298 = vpow.pop %v297
  %v299 = vmul.f32 %v287, 1.442695
  %v300 = vpow.pop %v299
  %v301 = vmul.f32 %v288, 1.442695
  %v302 = vpow.pop %v301
  %v303 = vmul.f32 %v289, 1.442695
  %v304 = vpow.pop %v303
  %v305 = vmul.f32 %v290, 1.442695
  %v306 = vpow.pop %v305
  %308 = vset.pattern.permute.xlu0 0
  %309 = vperm.xlu0 %308, %v275
  %v310 = vpop.permute.xlu0 %309
  %313 = vset.pattern.permute.xlu0 0
  %314 = vperm.xlu0 %313, %v276
  %v315 = vpop.permute.xlu0 %314
  %318 = vset.pattern.permute.xlu0 0
  %319 = vperm.xlu0 %318, %v277
  %v320 = vpop.permute.xlu0 %319
  %323 = vset.pattern.permute.xlu0 0
  %324 = vperm.xlu0 %323, %v278
  %v325 = vpop.permute.xlu0 %324
  %328 = vset.pattern.permute.xlu0 0
  %329 = vperm.xlu0 %328, %v279
  %v330 = vpop.permute.xlu0 %329
  %333 = vset.pattern.permute.xlu0 0
  %334 = vperm.xlu0 %333, %v280
  %v335 = vpop.permute.xlu0 %334
  %338 = vset.pattern.permute.xlu0 0
  %339 = vperm.xlu0 %338, %v281
  %v340 = vpop.permute.xlu0 %339
  %343 = vset.pattern.permute.xlu0 0
  %344 = vperm.xlu0 %343, %v282
  %v345 = vpop.permute.xlu0 %344
  %v347 = vsub.f32 %v234, %v310
  %v348 = vsub.f32 %v235, %v315
  %v349 = vsub.f32 %v236, %v320
  %v350 = vsub.f32 %v237, %v325
  %v351 = vsub.f32 %v238, %v330
  %v352 = vsub.f32 %v239, %v335
  %v353 = vsub.f32 %v240, %v340
  %v354 = vsub.f32 %v241, %v345
  %v355 = vmul.f32 %v347, 1.442695
  %v356 = vpow.pop %v355
  %v357 = vmul.f32 %v348, 1.442695
  %v358 = vpow.pop %v357
  %v359 = vmul.f32 %v349, 1.442695
  %v360 = vpow.pop %v359
  %v361 = vmul.f32 %v350, 1.442695
  %v362 = vpow.pop %v361
  %v363 = vmul.f32 %v351, 1.442695
  %v364 = vpow.pop %v363
  %v365 = vmul.f32 %v352, 1.442695
  %v366 = vpow.pop %v365
  %v367 = vmul.f32 %v353, 1.442695
  %v368 = vpow.pop %v367
  %v369 = vmul.f32 %v354, 1.442695
  %v370 = vpow.pop %v369
  %v371 = vld [vmem:[#allocation3] sm:$0xff]
  %v372 = vld [vmem:[#allocation3 + $0x8] sm:$0xff]
  %v373 = vld [vmem:[#allocation3 + $0x10] sm:$0xff]
  %v374 = vld [vmem:[#allocation3 + $0x18] sm:$0xff]
  %v375 = vld [vmem:[#allocation3 + $0x20] sm:$0xff]
  %v376 = vld [vmem:[#allocation3 + $0x28] sm:$0xff]
  %v377 = vld [vmem:[#allocation3 + $0x30] sm:$0xff]
  %v378 = vld [vmem:[#allocation3 + $0x38] sm:$0xff]
  %v379 = vmul.f32 %v292, %v371
  %v380 = vmul.f32 %v294, %v372
  %v381 = vmul.f32 %v296, %v373
  %v382 = vmul.f32 %v298, %v374
  %v383 = vmul.f32 %v300, %v375
  %v384 = vmul.f32 %v302, %v376
  %v385 = vmul.f32 %v304, %v377
  %v386 = vmul.f32 %v306, %v378
  %v387 = vsel %vm250, %v356, 0.0
  %388 = vadd.xlane.f32.xlu0 %v387
  %v389 = vpop.xlane.xlu0 %388
  %v390 = vsel %vm250, %v358, 0.0
  %391 = vadd.xlane.f32.xlu0 %v390
  %v392 = vpop.xlane.xlu0 %391
  %v393 = vsel %vm250, %v360, 0.0
  %394 = vadd.xlane.f32.xlu0 %v393
  %v395 = vpop.xlane.xlu0 %394
  %v396 = vsel %vm250, %v362, 0.0
  %397 = vadd.xlane.f32.xlu0 %v396
  %v398 = vpop.xlane.xlu0 %397
  %v399 = vsel %vm250, %v364, 0.0
  %400 = vadd.xlane.f32.xlu0 %v399
  %v401 = vpop.xlane.xlu0 %400
  %v402 = vsel %vm250, %v366, 0.0
  %403 = vadd.xlane.f32.xlu0 %v402
  %v404 = vpop.xlane.xlu0 %403
  %v405 = vsel %vm250, %v368, 0.0
  %406 = vadd.xlane.f32.xlu0 %v405
  %v407 = vpop.xlane.xlu0 %406
  %v408 = vsel %vm250, %v370, 0.0
  %409 = vadd.xlane.f32.xlu0 %v408
  %v410 = vpop.xlane.xlu0 %409
  %v411 = vadd.f32 %v379, %v389
  %v412 = vadd.f32 %v380, %v392
  %v413 = vadd.f32 %v381, %v395
  %v414 = vadd.f32 %v382, %v398
  %v415 = vadd.f32 %v383, %v401
  %v416 = vadd.f32 %v384, %v404
  %v417 = vadd.f32 %v385, %v407
  %v418 = vadd.f32 %v386, %v410
  %vm419 = vcmask 7168
  %420 = vst.msk [vmem:[#allocation3] sm:$0xff] %vm419, %v411
  %421 = vst.msk [vmem:[#allocation3 + $0x8] sm:$0xff] %vm419, %v412
  %422 = vst.msk [vmem:[#allocation3 + $0x10] sm:$0xff] %vm419, %v413
  %423 = vst.msk [vmem:[#allocation3 + $0x18] sm:$0xff] %vm419, %v414
  %424 = vst.msk [vmem:[#allocation3 + $0x20] sm:$0xff] %vm419, %v415
  %425 = vst.msk [vmem:[#allocation3 + $0x28] sm:$0xff] %vm419, %v416
  %426 = vst.msk [vmem:[#allocation3 + $0x30] sm:$0xff] %vm419, %v417
  %427 = vst.msk [vmem:[#allocation3 + $0x38] sm:$0xff] %vm419, %v418
  %v428 = vld [vmem:[#allocation4] sm:$0xff]
  %v429 = vld [vmem:[#allocation4 + $0x8] sm:$0xff]
  %v430 = vld [vmem:[#allocation4 + $0x10] sm:$0xff]
  %v431 = vld [vmem:[#allocation4 + $0x18] sm:$0xff]
  %v432 = vld [vmem:[#allocation4 + $0x20] sm:$0xff]
  %v433 = vld [vmem:[#allocation4 + $0x28] sm:$0xff]
  %v434 = vld [vmem:[#allocation4 + $0x30] sm:$0xff]
  %v435 = vld [vmem:[#allocation4 + $0x38] sm:$0xff]
  %437 = vset.pattern.permute.xlu0 0
  %438 = vperm.xlu0 %437, %v292
  %v439 = vpop.permute.xlu0 %438
  %442 = vset.pattern.permute.xlu0 0
  %443 = vperm.xlu0 %442, %v294
  %v444 = vpop.permute.xlu0 %443
  %447 = vset.pattern.permute.xlu0 0
  %448 = vperm.xlu0 %447, %v296
  %v449 = vpop.permute.xlu0 %448
  %452 = vset.pattern.permute.xlu0 0
  %453 = vperm.xlu0 %452, %v298
  %v454 = vpop.permute.xlu0 %453
  %457 = vset.pattern.permute.xlu0 0
  %458 = vperm.xlu0 %457, %v300
  %v459 = vpop.permute.xlu0 %458
  %462 = vset.pattern.permute.xlu0 0
  %463 = vperm.xlu0 %462, %v302
  %v464 = vpop.permute.xlu0 %463
  %467 = vset.pattern.permute.xlu0 0
  %468 = vperm.xlu0 %467, %v304
  %v469 = vpop.permute.xlu0 %468
  %472 = vset.pattern.permute.xlu0 0
  %473 = vperm.xlu0 %472, %v306
  %v474 = vpop.permute.xlu0 %473
  %v476 = vmul.f32 %v439, %v428
  %v477 = vmul.f32 %v444, %v429
  %v478 = vmul.f32 %v449, %v430
  %v479 = vmul.f32 %v454, %v431
  %v480 = vmul.f32 %v459, %v432
  %v481 = vmul.f32 %v464, %v433
  %v482 = vmul.f32 %v469, %v434
  %v483 = vmul.f32 %v474, %v435
  %v484 = vpack.c.bf16 %v356, %v356
  %v485 = vpack.c.bf16 %v358, %v358
  %v486 = vpack.c.bf16 %v360, %v360
  %v487 = vpack.c.bf16 %v362, %v362
  %v488 = vpack.c.bf16 %v364, %v364
  %v489 = vpack.c.bf16 %v366, %v366
  %v490 = vpack.c.bf16 %v368, %v368
  %v491 = vpack.c.bf16 %v370, %v370
  %v492 = vld [vmem:[%s2] sm:$0xf]
  %v493 = vld [vmem:[%s2 + $0x4] sm:$0xf]
  %v494 = vld [vmem:[%s2 + $0x8] sm:$0xf]
  %v495 = vld [vmem:[%s2 + $0xc] sm:$0xf]
  %v496 = vld [vmem:[%s2 + $0x10] sm:$0xf]
  %v497 = vld [vmem:[%s2 + $0x14] sm:$0xf]
  %v498 = vld [vmem:[%s2 + $0x18] sm:$0xf]
  %v499 = vld [vmem:[%s2 + $0x1c] sm:$0xf]
  %v501 = vsel %vm250, %v484, 0
  %vm503 = vcmask 1043456
  %v505 = vsel %vm503, %v492, 0
  %507 = vmatpush.bf16.msra.mxu0 0
  %508 = vmatpush.bf16.msra.mxu0 0
  %509 = vmatpush.bf16.msra.mxu0 0
  %510 = vmatpush.bf16.msra.mxu0 0
  %511 = vmatpush.bf16.msra.mxu0 0
  %512 = vmatpush.bf16.msra.mxu0 0
  %513 = vmatpush.bf16.msra.mxu0 0
  %514 = vmatpush.bf16.msra.mxu0 %v505
  %515 = vmatmul.bf16.gmra.mxu0 %v501
  %v516 = vpop.f32.mrf.mxu0
  %v517 = vadd.f32 0.0, %v516
  %v518 = vpop.f32.mrf.mxu0
  %519 = vdwg.mxu0
  %v521 = vsel %vm250, %v485, 0
  %v524 = vsel %vm503, %v493, 0
  %526 = vmatpush.bf16.msra.mxu0 0
  %527 = vmatpush.bf16.msra.mxu0 0
  %528 = vmatpush.bf16.msra.mxu0 0
  %529 = vmatpush.bf16.msra.mxu0 0
  %530 = vmatpush.bf16.msra.mxu0 0
  %531 = vmatpush.bf16.msra.mxu0 0
  %532 = vmatpush.bf16.msra.mxu0 0
  %533 = vmatpush.bf16.msra.mxu0 %v524
  %534 = vmatmul.bf16.gmra.mxu0 %v521
  %v535 = vpop.f32.mrf.mxu0
  %v536 = vadd.f32 0.0, %v535
  %v537 = vpop.f32.mrf.mxu0
  %538 = vdwg.mxu0
  %v540 = vsel %vm250, %v486, 0
  %v543 = vsel %vm503, %v494, 0
  %545 = vmatpush.bf16.msra.mxu0 0
  %546 = vmatpush.bf16.msra.mxu0 0
  %547 = vmatpush.bf16.msra.mxu0 0
  %548 = vmatpush.bf16.msra.mxu0 0
  %549 = vmatpush.bf16.msra.mxu0 0
  %550 = vmatpush.bf16.msra.mxu0 0
  %551 = vmatpush.bf16.msra.mxu0 0
  %552 = vmatpush.bf16.msra.mxu0 %v543
  %553 = vmatmul.bf16.gmra.mxu0 %v540
  %v554 = vpop.f32.mrf.mxu0
  %v555 = vadd.f32 0.0, %v554
  %v556 = vpop.f32.mrf.mxu0
  %557 = vdwg.mxu0
  %v559 = vsel %vm250, %v487, 0
  %v562 = vsel %vm503, %v495, 0
  %564 = vmatpush.bf16.msra.mxu0 0
  %565 = vmatpush.bf16.msra.mxu0 0
  %566 = vmatpush.bf16.msra.mxu0 0
  %567 = vmatpush.bf16.msra.mxu0 0
  %568 = vmatpush.bf16.msra.mxu0 0
  %569 = vmatpush.bf16.msra.mxu0 0
  %570 = vmatpush.bf16.msra.mxu0 0
  %571 = vmatpush.bf16.msra.mxu0 %v562
  %572 = vmatmul.bf16.gmra.mxu0 %v559
  %v573 = vpop.f32.mrf.mxu0
  %v574 = vadd.f32 0.0, %v573
  %v575 = vpop.f32.mrf.mxu0
  %576 = vdwg.mxu0
  %v578 = vsel %vm250, %v488, 0
  %v581 = vsel %vm503, %v496, 0
  %583 = vmatpush.bf16.msra.mxu0 0
  %584 = vmatpush.bf16.msra.mxu0 0
  %585 = vmatpush.bf16.msra.mxu0 0
  %586 = vmatpush.bf16.msra.mxu0 0
  %587 = vmatpush.bf16.msra.mxu0 0
  %588 = vmatpush.bf16.msra.mxu0 0
  %589 = vmatpush.bf16.msra.mxu0 0
  %590 = vmatpush.bf16.msra.mxu0 %v581
  %591 = vmatmul.bf16.gmra.mxu0 %v578
  %v592 = vpop.f32.mrf.mxu0
  %v593 = vadd.f32 0.0, %v592
  %v594 = vpop.f32.mrf.mxu0
  %595 = vdwg.mxu0
  %v597 = vsel %vm250, %v489, 0
  %v600 = vsel %vm503, %v497, 0
  %602 = vmatpush.bf16.msra.mxu0 0
  %603 = vmatpush.bf16.msra.mxu0 0
  %604 = vmatpush.bf16.msra.mxu0 0
  %605 = vmatpush.bf16.msra.mxu0 0
  %606 = vmatpush.bf16.msra.mxu0 0
  %607 = vmatpush.bf16.msra.mxu0 0
  %608 = vmatpush.bf16.msra.mxu0 0
  %609 = vmatpush.bf16.msra.mxu0 %v600
  %610 = vmatmul.bf16.gmra.mxu0 %v597
  %v611 = vpop.f32.mrf.mxu0
  %v612 = vadd.f32 0.0, %v611
  %v613 = vpop.f32.mrf.mxu0
  %614 = vdwg.mxu0
  %v616 = vsel %vm250, %v490, 0
  %v619 = vsel %vm503, %v498, 0
  %621 = vmatpush.bf16.msra.mxu0 0
  %622 = vmatpush.bf16.msra.mxu0 0
  %623 = vmatpush.bf16.msra.mxu0 0
  %624 = vmatpush.bf16.msra.mxu0 0
  %625 = vmatpush.bf16.msra.mxu0 0
  %626 = vmatpush.bf16.msra.mxu0 0
  %627 = vmatpush.bf16.msra.mxu0 0
  %628 = vmatpush.bf16.msra.mxu0 %v619
  %629 = vmatmul.bf16.gmra.mxu0 %v616
  %v630 = vpop.f32.mrf.mxu0
  %v631 = vadd.f32 0.0, %v630
  %v632 = vpop.f32.mrf.mxu0
  %633 = vdwg.mxu0
  %v635 = vsel %vm250, %v491, 0
  %v638 = vsel %vm503, %v499, 0
  %640 = vmatpush.bf16.msra.mxu0 0
  %641 = vmatpush.bf16.msra.mxu0 0
  %642 = vmatpush.bf16.msra.mxu0 0
  %643 = vmatpush.bf16.msra.mxu0 0
  %644 = vmatpush.bf16.msra.mxu0 0
  %645 = vmatpush.bf16.msra.mxu0 0
  %646 = vmatpush.bf16.msra.mxu0 0
  %647 = vmatpush.bf16.msra.mxu0 %v638
  %648 = vmatmul.bf16.gmra.mxu0 %v635
  %v649 = vpop.f32.mrf.mxu0
  %v650 = vadd.f32 0.0, %v649
  %v651 = vpop.f32.mrf.mxu0
  %652 = vdwg.mxu0
  %v653 = vadd.f32 %v476, %v517
  %v654 = vadd.f32 %v477, %v536
  %v655 = vadd.f32 %v478, %v555
  %v656 = vadd.f32 %v479, %v574
  %v657 = vadd.f32 %v480, %v593
  %v658 = vadd.f32 %v481, %v612
  %v659 = vadd.f32 %v482, %v631
  %v660 = vadd.f32 %v483, %v650
  %661 = vst.msk [vmem:[#allocation4] sm:$0xff] %vm61, %v653
  %662 = vst.msk [vmem:[#allocation4 + $0x8] sm:$0xff] %vm61, %v654
  %663 = vst.msk [vmem:[#allocation4 + $0x10] sm:$0xff] %vm61, %v655
  %664 = vst.msk [vmem:[#allocation4 + $0x18] sm:$0xff] %vm61, %v656
  %665 = vst.msk [vmem:[#allocation4 + $0x20] sm:$0xff] %vm61, %v657
  %666 = vst.msk [vmem:[#allocation4 + $0x28] sm:$0xff] %vm61, %v658
  %667 = vst.msk [vmem:[#allocation4 + $0x30] sm:$0xff] %vm61, %v659
  %668 = vst.msk [vmem:[#allocation4 + $0x38] sm:$0xff] %vm61, %v660
  %669 = vst.msk [vmem:[#allocation2] sm:$0xff] %vm419, %v275
  %670 = vst.msk [vmem:[#allocation2 + $0x8] sm:$0xff] %vm419, %v276
  %671 = vst.msk [vmem:[#allocation2 + $0x10] sm:$0xff] %vm419, %v277
  %672 = vst.msk [vmem:[#allocation2 + $0x18] sm:$0xff] %vm419, %v278
  %673 = vst.msk [vmem:[#allocation2 + $0x20] sm:$0xff] %vm419, %v279
  %674 = vst.msk [vmem:[#allocation2 + $0x28] sm:$0xff] %vm419, %v280
  %675 = vst.msk [vmem:[#allocation2 + $0x30] sm:$0xff] %vm419, %v281
  %676 = vst.msk [vmem:[#allocation2 + $0x38] sm:$0xff] %vm419, %v282
  // Predicated region
  $region18: #{my_model_forward.14} parent=0 // pred_check
    %p677 = pneg %p15
  $region19: #{my_model_forward.14} parent=0 // pred_check_branch
    %679 = sbr.rel (%p677) target = $region21
  $region20: #{my_model_forward.14} parent=0 // pred_region
    %v680 = vld [vmem:[#allocation4] sm:$0xff]
    %v681 = vld [vmem:[#allocation4 + $0x8] sm:$0xff]
    %v682 = vld [vmem:[#allocation4 + $0x10] sm:$0xff]
    %v683 = vld [vmem:[#allocation4 + $0x18] sm:$0xff]
    %v684 = vld [vmem:[#allocation4 + $0x20] sm:$0xff]
    %v685 = vld [vmem:[#allocation4 + $0x28] sm:$0xff]
    %v686 = vld [vmem:[#allocation4 + $0x30] sm:$0xff]
    %v687 = vld [vmem:[#allocation4 + $0x38] sm:$0xff]
    %v688 = vld [vmem:[#allocation3] sm:$0xff]
    %v689 = vld [vmem:[#allocation3 + $0x8] sm:$0xff]
    %v690 = vld [vmem:[#allocation3 + $0x10] sm:$0xff]
    %v691 = vld [vmem:[#allocation3 + $0x18] sm:$0xff]
    %v692 = vld [vmem:[#allocation3 + $0x20] sm:$0xff]
    %v693 = vld [vmem:[#allocation3 + $0x28] sm:$0xff]
    %v694 = vld [vmem:[#allocation3 + $0x30] sm:$0xff]
    %v695 = vld [vmem:[#allocation3 + $0x38] sm:$0xff]
    %v696 = vrcp.pop %v688
    %v697 = vrcp.pop %v689
    %v698 = vrcp.pop %v690
    %v699 = vrcp.pop %v691
    %v700 = vrcp.pop %v692
    %v701 = vrcp.pop %v693
    %v702 = vrcp.pop %v694
    %v703 = vrcp.pop %v695
    %705 = vset.pattern.permute.xlu0 0
    %706 = vperm.xlu0 %705, %v696
    %v707 = vpop.permute.xlu0 %706
    %710 = vset.pattern.permute.xlu0 0
    %711 = vperm.xlu0 %710, %v697
    %v712 = vpop.permute.xlu0 %711
    %715 = vset.pattern.permute.xlu0 0
    %716 = vperm.xlu0 %715, %v698
    %v717 = vpop.permute.xlu0 %716
    %720 = vset.pattern.permute.xlu0 0
    %721 = vperm.xlu0 %720, %v699
    %v722 = vpop.permute.xlu0 %721
    %725 = vset.pattern.permute.xlu0 0
    %726 = vperm.xlu0 %725, %v700
    %v727 = vpop.permute.xlu0 %726
    %730 = vset.pattern.permute.xlu0 0
    %731 = vperm.xlu0 %730, %v701
    %v732 = vpop.permute.xlu0 %731
    %735 = vset.pattern.permute.xlu0 0
    %736 = vperm.xlu0 %735, %v702
    %v737 = vpop.permute.xlu0 %736
    %740 = vset.pattern.permute.xlu0 0
    %741 = vperm.xlu0 %740, %v703
    %v742 = vpop.permute.xlu0 %741
    %v744 = vmul.f32 %v680, %v707
    %v745 = vmul.f32 %v681, %v712
    %v746 = vmul.f32 %v682, %v717
    %v747 = vmul.f32 %v683, %v722
    %v748 = vmul.f32 %v684, %v727
    %v749 = vmul.f32 %v685, %v732
    %v750 = vmul.f32 %v686, %v737
    %v751 = vmul.f32 %v687, %v742
    %v752 = vpack.c.bf16 %v744, %v744
    %v753 = vpack.c.bf16 %v745, %v745
    %v754 = vpack.c.bf16 %v746, %v746
    %v755 = vpack.c.bf16 %v747, %v747
    %v756 = vpack.c.bf16 %v748, %v748
    %v757 = vpack.c.bf16 %v749, %v749
    %v758 = vpack.c.bf16 %v750, %v750
    %v759 = vpack.c.bf16 %v751, %v751
    %vm760 = vcmask 257024
    %761 = vst.msk [vmem:[%s3] sm:$0xf] %vm760, %v752
    %762 = vst.msk [vmem:[%s3 + $0x4] sm:$0xf] %vm760, %v753
    %763 = vst.msk [vmem:[%s3 + $0x8] sm:$0xf] %vm760, %v754
    %764 = vst.msk [vmem:[%s3 + $0xc] sm:$0xf] %vm760, %v755
    %765 = vst.msk [vmem:[%s3 + $0x10] sm:$0xf] %vm760, %v756
    %766 = vst.msk [vmem:[%s3 + $0x14] sm:$0xf] %vm760, %v757
    %767 = vst.msk [vmem:[%s3 + $0x18] sm:$0xf] %vm760, %v758
    %768 = vst.msk [vmem:[%s3 + $0x1c] sm:$0xf] %vm760, %v759
  $region21: #{my_model_forward.14} parent=0 // pred_fallthru
    _
  // Predicated region
  $region22: #{my_model_forward.14} parent=0 // pred_check
    _
  $region23: #{my_model_forward.14} parent=0 // pred_check_branch
    %770 = sbr.rel (0) target = $region25
  $region24: #{my_model_forward.14} parent=0 // pred_region
    _
  $region25: #{my_model_forward.14} parent=0 // pred_fallthru
    _
  // Predicated region
  $region26: #{my_model_forward.14} parent=0 // pred_check
    _
  $region27: #{my_model_forward.14} parent=0 // pred_check_branch
    %772 = sbr.rel (0) target = $region29
  $region28: #{my_model_forward.14} parent=0 // pred_region
    _
  $region29: #{my_model_forward.14} parent=0 // pred_fallthru
    _

// kernel: my_model_forward.25
$region0: #{my_model_forward.25}
  #allocation0 [shape = 'u32[]', space=smem, size = 0x4, offset = 0x4, fixed_abs, tag = 'smem constant byte address 0x4 - core index']
  #allocation1 [shape = 'u32[72,128]{1,0:T(1,128)}', space=vmem, size = 0x9000, scoped, tag = 'internal scratch']
  #allocation2 [shape = 'bf16[16,32]{1,0:T(8,128)(2,1)}', space=vmem, size = 0x1000, scoped, tag = 'scratch operand']
  #allocation3 [shape = 'f32[16,1]{1,0:T(8,128)}', space=vmem, size = 0x2000, scoped, tag = 'scratch operand']
  #allocation4 [shape = 'f32[16,1]{1,0:T(8,128)}', space=vmem, size = 0x2000, scoped, tag = 'scratch operand']
  #allocation5 [shape = 'f32[16,1]{1,0:T(8,128)}', space=vmem, size = 0x2000, scoped, tag = 'scratch operand']
  #allocation6 [shape = 'f32[16,1]{1,0:T(8,128)}', space=vmem, size = 0x2000, scoped, tag = 'scratch operand']
  #allocation7 [shape = 's32[16,1]{1,0:T(8,128)}', space=vmem, size = 0x2000, scoped, tag = 'scratch operand']
  %s0 = inlined_call_operand.vmem [shape: bf16[16,32], index: 0, kind: input, shape index: {}]
  %s1 = inlined_call_operand.vmem [shape: f32[1,32], index: 1, kind: input, shape index: {}]
  %s2 = inlined_call_operand.vmem [shape: f32[1,32], index: 2, kind: input, shape index: {}]
  %s3 = inlined_call_operand.vmem [shape: bf16[32,64], index: 3, kind: input, shape index: {}]
  %s4 = inlined_call_operand.vmem [shape: s32[16,1], index: 4, kind: input, shape index: {}]
  %s5 = inlined_call_operand.vmem [shape: f32[16,1], index: 5, kind: output, shape index: {0}]
  %s6 = inlined_call_operand.vmem [shape: s32[16,1], index: 6, kind: output, shape index: {1}]
  %7 = xla_tuple %s5, %s6
  %s8 = sld [smem:[#allocation0]]
  $region46: #{my_model_forward.25} parent=0
    _
  %s10 = ssub.s32 1, %s8
  %s11 = scalar_select 0, %s10, %s8
  // Predicated region
  $region2: #{my_model_forward.25} parent=0 // pred_check
    _
  $region3: #{my_model_forward.25} parent=0 // pred_check_branch
    %13 = sbr.rel (0) target = $region5
  $region4: #{my_model_forward.25} parent=0 // pred_region
    _
  $region5: #{my_model_forward.25} parent=0 // pred_fallthru
    _
  // Predicated region
  $region6: #{my_model_forward.25} parent=0 // pred_check
    _
  $region7: #{my_model_forward.25} parent=0 // pred_check_branch
    %15 = sbr.rel (0) target = $region9
  $region8: #{my_model_forward.25} parent=0 // pred_region
    _
  $region9: #{my_model_forward.25} parent=0 // pred_fallthru
    _
  // Predicated region
  $region10: #{my_model_forward.25} parent=0 // pred_check
    _
  $region11: #{my_model_forward.25} parent=0 // pred_check_branch
    %17 = sbr.rel (0) target = $region13
  $region12: #{my_model_forward.25} parent=0 // pred_region
    _
  $region13: #{my_model_forward.25} parent=0 // pred_fallthru
    _
  // Predicated region
  $region14: #{my_model_forward.25} parent=0 // pred_check
    _
  $region15: #{my_model_forward.25} parent=0 // pred_check_branch
    %19 = sbr.rel (0) target = $region17
  $region16: #{my_model_forward.25} parent=0 // pred_region
    _
  $region17: #{my_model_forward.25} parent=0 // pred_fallthru
    _
  // Predicated region
  $region18: #{my_model_forward.25} parent=0 // pred_check
    _
  $region19: #{my_model_forward.25} parent=0 // pred_check_branch
    %21 = sbr.rel (0) target = $region21
  $region20: #{my_model_forward.25} parent=0 // pred_region
    _
  $region21: #{my_model_forward.25} parent=0 // pred_fallthru
    _
  %p23 = scmp.eq.s32.totalorder 0, 0
  // Predicated region
  $region22: #{my_model_forward.25} parent=0 // pred_check
    %p24 = pneg %p23
  $region23: #{my_model_forward.25} parent=0 // pred_check_branch
    %26 = sbr.rel (%p24) target = $region25
  $region24: #{my_model_forward.25} parent=0 // pred_region
    %v27 = vld [vmem:[%s0] sm:$0xf]
    %v28 = vld [vmem:[%s0 + $0x4] sm:$0xf]
    %v29 = vunpack.c.l.bf16 %v27
    %v30 = vunpack.c.l.bf16 %v28
    %vm31 = vcmask 261120
    %v32 = vsel %vm31, %v29, 0.0
    %33 = vadd.xlane.f32.xlu0 %v32
    %v34 = vpop.xlane.xlu0 %33
    %v35 = vsel %vm31, %v30, 0.0
    %36 = vadd.xlane.f32.xlu0 %v35
    %v37 = vpop.xlane.xlu0 %36
    %v38 = vrcp.pop 32.0
    %v39 = vmul.f32 32.0, %v38
    %v40 = vsub.f32 1.0, %v39
    %v41 = vmul.f32 %v38, %v40
    %v42 = vadd.f32 %v38, %v41
    %vm43 = vweird.f32 %v38
    %v44 = vsel %vm43, %v38, %v42
    %v45 = vmul.f32 %v34, %v44
    %v46 = vmul.f32 %v37, %v44
    %v47 = vsub.f32 %v29, %v45
    %v48 = vsub.f32 %v30, %v46
    %v49 = vmul.f32 %v47, %v47
    %v50 = vmul.f32 %v48, %v48
    %v51 = vsel %vm31, %v49, 0.0
    %52 = vadd.xlane.f32.xlu0 %v51
    %v53 = vpop.xlane.xlu0 %52
    %v54 = vsel %vm31, %v50, 0.0
    %55 = vadd.xlane.f32.xlu0 %v54
    %v56 = vpop.xlane.xlu0 %55
    %v57 = vmul.f32 %v53, %v44
    %v58 = vmul.f32 %v56, %v44
    %v59 = vadd.f32 %v57, 1e-05
    %v60 = vadd.f32 %v58, 1e-05
    %v61 = vrsqrt.pop %v59
    %v62 = vmul.f32 %v61, %v59
    %v63 = vmul.f32 %v62, %v61
    %v64 = vmul.f32 0.5, %v63
    %v65 = vsub.f32 1.5, %v64
    %v66 = vmul.f32 %v61, %v65
    %vm67 = vweird.f32 %v59
    %vm68 = vweird.f32 %v61
    %vm69 = vmor %vm67, %vm68
    %v70 = vsel %vm69, %v61, %v66
    %v71 = vrsqrt.pop %v60
    %v72 = vmul.f32 %v71, %v60
    %v73 = vmul.f32 %v72, %v71
    %v74 = vmul.f32 0.5, %v73
    %v75 = vsub.f32 1.5, %v74
    %v76 = vmul.f32 %v71, %v75
    %vm77 = vweird.f32 %v60
    %vm78 = vweird.f32 %v71
    %vm79 = vmor %vm77, %vm78
    %v80 = vsel %vm79, %v71, %v76
    %v81 = vmul.f32 %v47, %v70
    %v82 = vmul.f32 %v48, %v80
    %v83 = vld [vmem:[%s1] sm:$0x1]
    %v85 = vperm.slane %v83, 0
    %v87 = vmul.f32 %v81, %v85
    %v88 = vmul.f32 %v82, %v85
    %v89 = vld [vmem:[%s2] sm:$0x1]
    %v91 = vperm.slane %v89, 0
    %v93 = vadd.f32 %v87, %v91
    %v94 = vadd.f32 %v88, %v91
    %v95 = vpack.c.bf16 %v93, %v93
    %v96 = vpack.c.bf16 %v94, %v94
    %vm97 = vcmask 257024
    %98 = vst.msk [vmem:[#allocation2] sm:$0xf] %vm97, %v95
    %99 = vst.msk [vmem:[#allocation2 + $0x4] sm:$0xf] %vm97, %v96
    %vm100 = vcmask 7168
    %101 = vst.msk [vmem:[#allocation3] sm:$0xff] %vm100, -1e+30
    %102 = vst.msk [vmem:[#allocation3 + $0x8] sm:$0xff] %vm100, -1e+30
    %103 = vst.msk [vmem:[#allocation4] sm:$0xff] %vm100, 0.0
    %104 = vst.msk [vmem:[#allocation4 + $0x8] sm:$0xff] %vm100, 0.0
    %105 = vst.msk [vmem:[#allocation5] sm:$0xff] %vm100, 0.0
    %106 = vst.msk [vmem:[#allocation5 + $0x8] sm:$0xff] %vm100, 0.0
    %107 = vst.msk [vmem:[#allocation6] sm:$0xff] %vm100, -1e+30
    %108 = vst.msk [vmem:[#allocation6 + $0x8] sm:$0xff] %vm100, -1e+30
    %109 = vst.msk [vmem:[#allocation7] sm:$0xff] %vm100, 0
    %110 = vst.msk [vmem:[#allocation7 + $0x8] sm:$0xff] %vm100, 0
  $region25: #{my_model_forward.25} parent=0 // pred_fallthru
    _
  %v111 = vld [vmem:[#allocation2] sm:$0xf]
  %v112 = vld [vmem:[#allocation2 + $0x4] sm:$0xf]
  %v113 = vld [vmem:[%s3] sm:$0xf]
  %v114 = vld [vmem:[%s3 + $0x4] sm:$0xf]
  %v115 = vld [vmem:[%s3 + $0x8] sm:$0xf]
  %v116 = vld [vmem:[%s3 + $0xc] sm:$0xf]
  %v119 = vunpack.c.l.b16 %v111
  %v120 = vunpack.c.l.b16 %v112
  %v121 = vpack.c.b16 %v120, %v119
  %v126 = vunpack.c.l.b16 %v113
  %v127 = vunpack.c.l.b16 %v114
  %v128 = vunpack.c.l.b16 %v115
  %v129 = vunpack.c.l.b16 %v116
  %v130 = vpack.c.b16 %v127, %v126
  %v131 = vpack.c.b16 %v129, %v128
  %vm134 = vcmask 261120
  %v136 = vsel %vm134, %v121, 0
  %138 = vmatpush.bf16.msra.mxu0 0
  %139 = vmatpush.bf16.msra.mxu0 0
  %140 = vmatpush.bf16.msra.mxu0 0
  %141 = vmatpush.bf16.msra.mxu0 0
  %142 = vmatpush.bf16.msra.mxu0 0
  %143 = vmatpush.bf16.msra.mxu0 0
  %144 = vmatpush.bf16.msra.mxu0 %v131
  %145 = vmatpush.bf16.msra.mxu0 %v130
  %146 = vmatmul.bf16.gmra.mxu0 %v136
  %v147 = vpop.f32.mrf.mxu0
  %v148 = vadd.f32 0.0, %v147
  %v149 = vpop.f32.mrf.mxu0
  %v150 = vadd.f32 0.0, %v149
  %151 = vdwg.mxu0
  %s152 = smul.u32 0, 64
  %v153 = vlaneseq
  %v154 = vand.u32 %v153, 127
  %v155 = vstv %s152
  %v156 = vadd.s32 %v155, %v154
  %v157 = vld [vmem:[#allocation3] sm:$0xff]
  %v158 = vld [vmem:[#allocation3 + $0x8] sm:$0xff]
  %vm159 = vcmask 523264
  %v160 = vsel %vm159, %v148, -inf
  %161 = vmax.xlane.f32.xlu0 %v160
  %v162 = vpop.xlane.xlu0 %161
  %v163 = vsel %vm159, %v150, -inf
  %164 = vmax.xlane.f32.xlu0 %v163
  %v165 = vpop.xlane.xlu0 %164
  %v166 = vmax.f32 %v157, %v162
  %v167 = vmax.f32 %v158, %v165
  %v168 = vld [vmem:[#allocation4] sm:$0xff]
  %v169 = vld [vmem:[#allocation4 + $0x8] sm:$0xff]
  %v170 = vsub.f32 %v157, %v166
  %v171 = vsub.f32 %v158, %v167
  %v172 = vmul.f32 %v170, 1.442695
  %v173 = vpow.pop %v172
  %v174 = vmul.f32 %v171, 1.442695
  %v175 = vpow.pop %v174
  %v176 = vmul.f32 %v168, %v173
  %v177 = vmul.f32 %v169, %v175
  %179 = vset.pattern.permute.xlu0 0
  %180 = vperm.xlu0 %179, %v166
  %v181 = vpop.permute.xlu0 %180
  %184 = vset.pattern.permute.xlu0 0
  %185 = vperm.xlu0 %184, %v167
  %v186 = vpop.permute.xlu0 %185
  %v188 = vsub.f32 %v148, %v181
  %v189 = vsub.f32 %v150, %v186
  %v190 = vmul.f32 %v188, 1.442695
  %v191 = vpow.pop %v190
  %v192 = vmul.f32 %v189, 1.442695
  %v193 = vpow.pop %v192
  %v194 = vsel %vm159, %v191, 0.0
  %195 = vadd.xlane.f32.xlu0 %v194
  %v196 = vpop.xlane.xlu0 %195
  %v197 = vsel %vm159, %v193, 0.0
  %198 = vadd.xlane.f32.xlu0 %v197
  %v199 = vpop.xlane.xlu0 %198
  %v200 = vadd.f32 %v176, %v196
  %v201 = vadd.f32 %v177, %v199
  %vm202 = vcmask 7168
  %203 = vst.msk [vmem:[#allocation4] sm:$0xff] %vm202, %v200
  %204 = vst.msk [vmem:[#allocation4 + $0x8] sm:$0xff] %vm202, %v201
  %205 = vst.msk [vmem:[#allocation3] sm:$0xff] %vm202, %v166
  %206 = vst.msk [vmem:[#allocation3 + $0x8] sm:$0xff] %vm202, %v167
  %v207 = vld [vmem:[#allocation5] sm:$0xff]
  %v208 = vld [vmem:[#allocation5 + $0x8] sm:$0xff]
  %v209 = vld [vmem:[%s4] sm:$0xff]
  %v210 = vld [vmem:[%s4 + $0x8] sm:$0xff]
  %211 = vset.pattern.permute.xlu0 0
  %212 = vperm.xlu0 %211, %v209
  %v213 = vpop.permute.xlu0 %212
  %214 = vset.pattern.permute.xlu0 0
  %215 = vperm.xlu0 %214, %v210
  %v216 = vpop.permute.xlu0 %215
  %vm217 = vcmp.eq.s32.totalorder %v156, %v213
  %vm218 = vcmp.eq.s32.totalorder %v156, %v216
  %v219 = vsel %vm217, %v148, 0.0
  %v220 = vsel %vm218, %v150, 0.0
  %v221 = vsel %vm159, %v219, 0.0
  %222 = vadd.xlane.f32.xlu0 %v221
  %v223 = vpop.xlane.xlu0 %222
  %v224 = vsel %vm159, %v220, 0.0
  %225 = vadd.xlane.f32.xlu0 %v224
  %v226 = vpop.xlane.xlu0 %225
  %v227 = vadd.f32 %v207, %v223
  %v228 = vadd.f32 %v208, %v226
  %229 = vst.msk [vmem:[#allocation5] sm:$0xff] %vm202, %v227
  %230 = vst.msk [vmem:[#allocation5 + $0x8] sm:$0xff] %vm202, %v228
  %vm231 = vcmp.eq.f32.partialorder %v148, %v162
  %vm232 = vcmp.eq.f32.partialorder %v150, %v165
  %v233 = vsel %vm231, %v156, 1073741824
  %v234 = vsel %vm232, %v156, 1073741824
  %v235 = vsel %vm159, %v233, 2147483647
  %v236 = vand.u32 %v235, 65535
  %v237 = vshra.s32 %v235, 16
  %v238 = vcvt.s32.f32 %v236
  %v239 = vcvt.s32.f32 %v237
  %240 = vmin.xlane.f32.xlu0 %v239
  %v241 = vpop.xlane.xlu0 %240
  %vm242 = vcmp.eq.f32.partialorder %v239, %v241
  %v243 = vsel %vm242, %v238, inf
  %244 = vmin.xlane.f32.xlu0 %v243
  %v245 = vpop.xlane.xlu0 %244
  %v246 = vcvt.f32.s32 %v245
  %v247 = vcvt.f32.s32 %v241
  %v248 = vshll.u32 %v247, 16
  %v249 = vadd.s32 %v248, %v246
  %v250 = vsel %vm159, %v234, 2147483647
  %v251 = vand.u32 %v250, 65535
  %v252 = vshra.s32 %v250, 16
  %v253 = vcvt.s32.f32 %v251
  %v254 = vcvt.s32.f32 %v252
  %255 = vmin.xlane.f32.xlu0 %v254
  %v256 = vpop.xlane.xlu0 %255
  %vm257 = vcmp.eq.f32.partialorder %v254, %v256
  %v258 = vsel %vm257, %v253, inf
  %259 = vmin.xlane.f32.xlu0 %v258
  %v260 = vpop.xlane.xlu0 %259
  %v261 = vcvt.f32.s32 %v260
  %v262 = vcvt.f32.s32 %v256
  %v263 = vshll.u32 %v262, 16
  %v264 = vadd.s32 %v263, %v261
  %v265 = vld [vmem:[#allocation6] sm:$0xff]
  %v266 = vld [vmem:[#allocation6 + $0x8] sm:$0xff]
  %vm267 = vcmp.gt.f32.partialorder %v162, %v265
  %vm268 = vcmp.gt.f32.partialorder %v165, %v266
  %v269 = vsel %vm267, %v162, %v265
  %v270 = vsel %vm268, %v165, %v266
  %271 = vst.msk [vmem:[#allocation6] sm:$0xff] %vm202, %v269
  %272 = vst.msk [vmem:[#allocation6 + $0x8] sm:$0xff] %vm202, %v270
  %v273 = vld [vmem:[#allocation7] sm:$0xff]
  %v274 = vld [vmem:[#allocation7 + $0x8] sm:$0xff]
  %v275 = vsel %vm267, %v249, %v273
  %v276 = vsel %vm268, %v264, %v274
  %277 = vst.msk [vmem:[#allocation7] sm:$0xff] %vm202, %v275
  %278 = vst.msk [vmem:[#allocation7 + $0x8] sm:$0xff] %vm202, %v276
  // Predicated region
  $region26: #{my_model_forward.25} parent=0 // pred_check
    %p279 = pneg %p23
  $region27: #{my_model_forward.25} parent=0 // pred_check_branch
    %281 = sbr.rel (%p279) target = $region29
  $region28: #{my_model_forward.25} parent=0 // pred_region
    %v282 = vld [vmem:[#allocation3] sm:$0xff]
    %v283 = vld [vmem:[#allocation3 + $0x8] sm:$0xff]
    %v284 = vld [vmem:[#allocation4] sm:$0xff]
    %v285 = vld [vmem:[#allocation4 + $0x8] sm:$0xff]
    %v286 = vlog2.pop %v284
    %v287 = vmul.f32 %v286, 0.6931472
    %v288 = vlog2.pop %v285
    %v289 = vmul.f32 %v288, 0.6931472
    %v290 = vadd.f32 %v282, %v287
    %v291 = vadd.f32 %v283, %v289
    %v292 = vld [vmem:[#allocation5] sm:$0xff]
    %v293 = vld [vmem:[#allocation5 + $0x8] sm:$0xff]
    %v294 = vsub.f32 %v290, %v292
    %v295 = vsub.f32 %v291, %v293
    %296 = vst.msk [vmem:[%s5] sm:$0xff] %vm202, %v294
    %297 = vst.msk [vmem:[%s5 + $0x8] sm:$0xff] %vm202, %v295
    %v298 = vld [vmem:[#allocation7] sm:$0xff]
    %v299 = vld [vmem:[#allocation7 + $0x8] sm:$0xff]
    %300 = vst.msk [vmem:[%s6] sm:$0xff] %vm202, %v298
    %301 = vst.msk [vmem:[%s6 + $0x8] sm:$0xff] %vm202, %v299
  $region29: #{my_model_forward.25} parent=0 // pred_fallthru
    _
  // Predicated region
  $region30: #{my_model_forward.25} parent=0 // pred_check
    _
  $region31: #{my_model_forward.25} parent=0 // pred_check_branch
    %303 = sbr.rel (0) target = $region33
  $region32: #{my_model_forward.25} parent=0 // pred_region
    _
  $region33: #{my_model_forward.25} parent=0 // pred_fallthru
    _
  // Predicated region
  $region34: #{my_model_forward.25} parent=0 // pred_check
    _
  $region35: #{my_model_forward.25} parent=0 // pred_check_branch
    %305 = sbr.rel (0) target = $region37
  $region36: #{my_model_forward.25} parent=0 // pred_region
    _
  $region37: #{my_model_forward.25} parent=0 // pred_fallthru
    _
  // Predicated region
  $region38: #{my_model_forward.25} parent=0 // pred_check
    _
  $region39: #{my_model_forward.25} parent=0 // pred_check_branch
    %307 = sbr.rel (0) target = $region41
  $region40: #{my_model_forward.25} parent=0 // pred_region
    _
  $region41: #{my_model_forward.25} parent=0 // pred_fallthru
    _
  // Predicated region
  $region42: #{my_model_forward.25} parent=0 // pred_check
    _
  $region43: #{my_model_forward.25} parent=0 // pred_check_branch
    %309 = sbr.rel (0) target = $region45
  $region44: #{my_model_forward.25} parent=0 // pred_region
    _
  $region45: #{my_model_forward.25} parent=0 // pred_fallthru
    _

</llo_original>
